<compile_context>
chip_gen: v5e
topology: v5e:2x2
jax: 0.10.0
libtpu: 0.0.40
codegen_flags: <defaults>
</compile_context>

<pallas_src>
import functools
import math

import jax
import jax.numpy as jnp
from jax import lax
from jax.experimental import pallas as pl
from jax.experimental.pallas import tpu as pltpu

_LANE = 128      # lane width: pad hidden / gate / output / input dims to this
_SUBLANE = 8     # sublane width: pad batch to this

# bf16 MXU operands + f32 accumulation. Use jnp.float32 for exact f32 parity.
MATMUL_DTYPE = jnp.bfloat16


def _round_up(x, m):
    return ((x + m - 1) // m) * m


# --------------------------- fused GRU-stack kernel ---------------------------
def _build_kernel(num_layers, seq_len, bp, hp):
    """Fused kernel: all GRU layers + final FC, whole sequence resident in VMEM.

    Ref order: x, (w_ih, b_ih) x L, (w_hh, b_hh) x L, w_fc, b_fc, out,
               gi_scratch, [y_scratch if L > 1].
    """
    three_hp = 3 * hp

    def kernel(*refs):
        pos = 0
        x_ref = refs[pos]; pos += 1                         # (S*Bp, In_p)
        w_ih_refs, b_ih_refs = [], []
        for _ in range(num_layers):
            w_ih_refs.append(refs[pos]); pos += 1           # (In_p|Hp, 3Hp)
            b_ih_refs.append(refs[pos]); pos += 1           # (1, 3Hp) f32
        w_hh_refs, b_hh_refs = [], []
        for _ in range(num_layers):
            w_hh_refs.append(refs[pos]); pos += 1           # (Hp, 3Hp)
            b_hh_refs.append(refs[pos]); pos += 1           # (1, 3Hp) f32
        w_fc_ref = refs[pos]; pos += 1                      # (Hp, Op)
        b_fc_ref = refs[pos]; pos += 1                      # (1, Op) f32
        out_ref = refs[pos]; pos += 1                       # (Bp, Op) f32
        gi_ref = refs[pos]; pos += 1                        # (S*Bp, 3Hp) f32
        y_ref = refs[pos] if num_layers > 1 else None       # (S*Bp, Hp) f32

        h_last = None
        for layer in range(num_layers):
            # Input projection for this layer: ONE big matmul over the whole
            # sequence, b_ih folded in once.  Layer 0 reads the raw input.
            w_ih_ref = w_ih_refs[layer]
            src = x_ref[...] if layer == 0 else y_ref[...]
            gi_ref[...] = (
                jnp.dot(src.astype(w_ih_ref.dtype), w_ih_ref[...],
                        preferred_element_type=jnp.float32)
                + b_ih_refs[layer][...])

            w_hh_ref = w_hh_refs[layer]
            # Hoist bias broadcast out of the time loop (JAX doesn't CSE it).
            b_hh = jnp.broadcast_to(b_hh_refs[layer][...], (bp, three_hp))
            write_y = layer < num_layers - 1

            def step(t, h_prev):
                row = pl.multiple_of(t * bp, bp)
                gi_t = gi_ref[pl.ds(row, bp), :]            # (Bp, 3Hp) f32
                # Read w_hh from VMEM inside the loop (no giant live vreg
                # value across the fori_loop); MXU streams it from VMEM.
                gh = jnp.dot(h_prev.astype(w_hh_ref.dtype), w_hh_ref[...],
                             preferred_element_type=jnp.float32) + b_hh
                # Gate order r, z, n (PyTorch); slices are 128-lane aligned.
                r = jax.nn.sigmoid(gi_t[:, :hp] + gh[:, :hp])
                z = jax.nn.sigmoid(gi_t[:, hp:2 * hp] + gh[:, hp:2 * hp])
                n = jnp.tanh(gi_t[:, 2 * hp:] + r * gh[:, 2 * hp:])
                h_new = (1.0 - z) * n + z * h_prev
                if write_y:
                    # f32 (8,128) full-tile, unmasked store.
                    y_ref[pl.ds(row, bp), :] = h_new
                return h_new

            # h_0 = zeros per layer (matches torch.zeros h_0).
            unroll = True if seq_len <= 32 else 8
            h_last = lax.fori_loop(0, seq_len, step,
                                   jnp.zeros((bp, hp), jnp.float32),
                                   unroll=unroll)

        # Fused FC on the last timestep of the last layer (= out[:, -1, :]).
        out_ref[...] = (
            jnp.dot(h_last.astype(w_fc_ref.dtype), w_fc_ref[...],
                    preferred_element_type=jnp.float32)
            + b_fc_ref[...]).astype(out_ref.dtype)

    return kernel


# -------------------------------- forward ------------------------------------
@functools.partial(jax.jit, static_argnames=("output_size",))
def gru_model_forward(params, x, *, output_size):
    """x: (batch, seq, input_size) f32 -> (batch, output_size) f32."""
    B, S, In = x.shape
    num_layers = len(params["w_hh"])
    Hp = params["w_hh"][0].shape[0]
    Op = params["fc_w"].shape[1]
    In_p = params["w_ih"][0].shape[0]
    Bp = _round_up(max(B, 1), _SUBLANE)
    three_hp = 3 * Hp

    # Pad + time-major flatten the input; row index = t*Bp + b.
    x_tm = jnp.transpose(x, (1, 0, 2))                         # (S, B, In)
    x_tm = jnp.pad(x_tm, ((0, 0), (0, Bp - B), (0, In_p - In)))
    x_flat = x_tm.reshape(S * Bp, In_p).astype(params["w_ih"][0].dtype)

    # Assemble kernel args (order must match _build_kernel parsing).
    args = [x_flat]
    for l in range(num_layers):
        args += [params["w_ih"][l], params["b_ih"][l]]
    for l in range(num_layers):
        args += [params["w_hh"][l], params["b_hh"][l]]
    args += [params["fc_w"], params["fc_b"]]

    # Whole arrays resident in VMEM, single-buffered (no grid -> no pipeline).
    vmem_spec = pl.BlockSpec(memory_space=pltpu.MemorySpace.VMEM)
    in_specs = [vmem_spec] * len(args)

    scratch_shapes = [pltpu.VMEM((S * Bp, three_hp), jnp.float32)]  # gi
    scratch_bytes = S * Bp * three_hp * 4
    if num_layers > 1:
        scratch_shapes.append(pltpu.VMEM((S * Bp, Hp), jnp.float32))  # y
        scratch_bytes += S * Bp * Hp * 4

    # Explicit VMEM budget: resident footprint x2 headroom, floor 16 MiB,
    # capped at v7x's 64 MiB physical.
    resident = sum(int(a.size) * a.dtype.itemsize for a in args)
    resident += Bp * Op * 4 + scratch_bytes
    vmem_limit = int(min(64 << 20, max(2 * resident + (2 << 20), 16 << 20)))

    out_padded = pl.pallas_call(
        _build_kernel(num_layers, S, Bp, Hp),
        out_shape=jax.ShapeDtypeStruct((Bp, Op), jnp.float32),
        in_specs=in_specs,
        out_specs=pl.BlockSpec(memory_space=pltpu.MemorySpace.VMEM),
        scratch_shapes=scratch_shapes,
        compiler_params=pltpu.CompilerParams(vmem_limit_bytes=vmem_limit),
    )(*args)

    return out_padded[:B, :output_size]


# ------------------------------ params ---------------------------------------
def init_params(key, input_size, hidden_size, num_layers, output_size):
    """Raw params in PyTorch layout, U(-1/sqrt(H), 1/sqrt(H)) init."""
    k = 1.0 / math.sqrt(hidden_size)
    raw = {"gru": [], "fc": None}
    for layer in range(num_layers):
        in_dim = input_size if layer == 0 else hidden_size
        key, k1, k2, k3, k4 = jax.random.split(key, 5)
        raw["gru"].append(dict(
            w_ih=jax.random.uniform(k1, (3 * hidden_size, in_dim), jnp.float32, -k, k),
            w_hh=jax.random.uniform(k2, (3 * hidden_size, hidden_size), jnp.float32, -k, k),
            b_ih=jax.random.uniform(k3, (3 * hidden_size,), jnp.float32, -k, k),
            b_hh=jax.random.uniform(k4, (3 * hidden_size,), jnp.float32, -k, k)))
    key, k1, k2 = jax.random.split(key, 3)
    raw["fc"] = dict(
        w=jax.random.uniform(k1, (output_size, hidden_size), jnp.float32, -k, k),
        b=jax.random.uniform(k2, (output_size,), jnp.float32, -k, k))
    return raw


def pack_params(raw, matmul_dtype=MATMUL_DTYPE):
    """Transpose + zero-pad PyTorch-layout GRU params to lane-aligned layout.

    Gates are placed at offsets {0, Hp, 2*Hp} of the 3*Hp axis so gate slices
    are 128-lane aligned. Zero padding keeps padded hidden units exactly 0.
    """
    hidden = raw["gru"][0]["w_hh"].shape[1]
    in_size = raw["gru"][0]["w_ih"].shape[1]
    out_dim = raw["fc"]["w"].shape[0]
    num_layers = len(raw["gru"])
    hp = _round_up(hidden, _LANE)
    op = _round_up(out_dim, _LANE)
    in_p = _round_up(in_size, _LANE)

    def pack_w(w, in_pad, dtype):
        # w: (3H, in) -> (in_pad, 3*hp) with lane-aligned gate blocks.
        in_dim = w.shape[1]
        wt = w.T.reshape(in_dim, 3, hidden)
        wt = jnp.pad(wt, ((0, in_pad - in_dim), (0, 0), (0, hp - hidden)))
        return wt.reshape(in_pad, 3 * hp).astype(dtype)

    def pack_b(b):
        bb = b.reshape(3, hidden)
        bb = jnp.pad(bb, ((0, 0), (0, hp - hidden)))
        return bb.reshape(1, 3 * hp).astype(jnp.float32)

    return {
        "w_ih": [pack_w(raw["gru"][l]["w_ih"], in_p if l == 0 else hp, matmul_dtype)
                 for l in range(num_layers)],
        "b_ih": [pack_b(raw["gru"][l]["b_ih"]) for l in range(num_layers)],
        "w_hh": [pack_w(raw["gru"][l]["w_hh"], hp, matmul_dtype)
                 for l in range(num_layers)],
        "b_hh": [pack_b(raw["gru"][l]["b_hh"]) for l in range(num_layers)],
        "fc_w": jnp.pad(raw["fc"]["w"].T,
                        ((0, hp - hidden), (0, op - out_dim))).astype(matmul_dtype),
        "fc_b": jnp.pad(raw["fc"]["b"], (0, op - out_dim)).reshape(1, op)
                   .astype(jnp.float32),
    }


# --------------------------- pure-JAX reference -------------------------------
def _gru_reference(raw, x):
    """f32 reference matching PyTorch GRU + Linear on last timestep."""
    B, S, _ = x.shape
    hidden = raw["gru"][0]["w_hh"].shape[1]
    y = x
    for p in raw["gru"]:
        h = jnp.zeros((B, hidden), jnp.float32)
        outs = []
        for t in range(S):
            gi = y[:, t, :] @ p["w_ih"].T + p["b_ih"]
            gh = h @ p["w_hh"].T + p["b_hh"]
            r = jax.nn.sigmoid(gi[:, :hidden] + gh[:, :hidden])
            z = jax.nn.sigmoid(gi[:, hidden:2 * hidden] + gh[:, hidden:2 * hidden])
            n = jnp.tanh(gi[:, 2 * hidden:] + r * gh[:, 2 * hidden:])
            h = (1.0 - z) * n + z * h
            outs.append(h)
        y = jnp.stack(outs, axis=1)
    return y[:, -1, :] @ raw["fc"]["w"].T + raw["fc"]["b"]


# -------------------------------- main ----------------------------------------
if __name__ == "__main__":
    batch, seq = 2, 8
    input_size, hidden_size, num_layers, output_size = 4, 32, 2, 8
    dropout_rate = 0.1  # identity at inference

    key = jax.random.PRNGKey(0)
    key, xk = jax.random.split(key)
    x = jax.random.normal(xk, (batch, seq, input_size), jnp.float32)

    raw_params = init_params(key, input_size, hidden_size, num_layers, output_size)
    params = pack_params(raw_params)

    out = gru_model_forward(params, x, output_size=output_size)
    jax.block_until_ready(out)
    assert out.shape == (batch, output_size)

    ref = _gru_reference(raw_params, x)
    # bf16 MXU operands -> loose tolerance; f32 path (MATMUL_DTYPE=float32)
    # matches much tighter.
    assert bool(jnp.max(jnp.abs(out - ref)) < 5e-2), "mismatch vs reference"

    print("KERNEL_OK")
</pallas_src>

<mosaic_0001>
module attributes {stable_mosaic.version = 11 : i64} {
  func.func @kernel(%arg0: memref<64x128xbf16, #tpu.memory_space<vmem>>, %arg1: memref<128x384xbf16, #tpu.memory_space<vmem>>, %arg2: memref<1x384xf32, #tpu.memory_space<vmem>>, %arg3: memref<128x384xbf16, #tpu.memory_space<vmem>>, %arg4: memref<1x384xf32, #tpu.memory_space<vmem>>, %arg5: memref<128x384xbf16, #tpu.memory_space<vmem>>, %arg6: memref<1x384xf32, #tpu.memory_space<vmem>>, %arg7: memref<128x384xbf16, #tpu.memory_space<vmem>>, %arg8: memref<1x384xf32, #tpu.memory_space<vmem>>, %arg9: memref<128x128xbf16, #tpu.memory_space<vmem>>, %arg10: memref<1x128xf32, #tpu.memory_space<vmem>>, %arg11: memref<8x128xf32, #tpu.memory_space<vmem>>, %arg12: memref<64x384xf32, #tpu.memory_space<vmem>>, %arg13: memref<64x128xf32, #tpu.memory_space<vmem>>) attributes {dimension_semantics = [], scalar_prefetch = 0 : i64, scratch_operands = 2 : i64, tpu.core_type = #tpu.core_type<tc>} {
    %c0 = arith.constant 0 : index
    %c0_0 = arith.constant 0 : index
    %0 = vector.load %arg0[%c0, %c0_0] : memref<64x128xbf16, #tpu.memory_space<vmem>>, vector<64x128xbf16>
    %c0_1 = arith.constant 0 : index
    %c0_2 = arith.constant 0 : index
    %1 = vector.load %arg1[%c0_1, %c0_2] : memref<128x384xbf16, #tpu.memory_space<vmem>>, vector<128x384xbf16>
    %cst = arith.constant dense<0.000000e+00> : vector<64x384xf32>
    %2 = tpu.matmul %0, %1, %cst {dimension_numbers = #tpu.dot_dimension_numbers<[1], [0], [0], [1], [0, 0, 1, 1], [], []>} : vector<64x128xbf16>, vector<128x384xbf16>, vector<64x384xf32> -> vector<64x384xf32>
    %c0_3 = arith.constant 0 : index
    %c0_4 = arith.constant 0 : index
    %3 = vector.load %arg2[%c0_3, %c0_4] : memref<1x384xf32, #tpu.memory_space<vmem>>, vector<1x384xf32>
    %4 = vector.broadcast %3 : vector<1x384xf32> to vector<64x384xf32>
    %5 = arith.addf %2, %4 : vector<64x384xf32>
    %c0_5 = arith.constant 0 : index
    %c0_6 = arith.constant 0 : index
    %6 = vector.load %arg12[%c0_5, %c0_6] : memref<64x384xf32, #tpu.memory_space<vmem>>, vector<64x384xf32>
    tpu.vector_store %arg12[%c0_5, %c0_6], %5 {strides = array<i32>} : memref<64x384xf32, #tpu.memory_space<vmem>>, vector<64x384xf32>,
    %c0_7 = arith.constant 0 : index
    %c0_8 = arith.constant 0 : index
    %7 = vector.load %arg6[%c0_7, %c0_8] : memref<1x384xf32, #tpu.memory_space<vmem>>, vector<1x384xf32>
    %8 = vector.shape_cast %7 : vector<1x384xf32> to vector<1x384xf32>
    %9 = vector.broadcast %8 : vector<1x384xf32> to vector<8x384xf32>
    %cst_9 = arith.constant 0.000000e+00 : f32
    %10 = vector.broadcast %cst_9 : f32 to vector<8x128xf32>
    %c0_i32 = arith.constant 0 : i32
    %c8_i32 = arith.constant 8 : i32
    %11 = arith.muli %c0_i32, %c8_i32 : i32
    %12 = tpu.assume_multiple %11, 8 : i32
    %13 = arith.index_cast %12 : i32 to index
    %c0_10 = arith.constant 0 : index
    %14 = vector.load %arg12[%13, %c0_10] : memref<64x384xf32, #tpu.memory_space<vmem>>, vector<8x384xf32>
    %15 = arith.truncf %10 : vector<8x128xf32> to vector<8x128xbf16>
    %c0_11 = arith.constant 0 : index
    %c0_12 = arith.constant 0 : index
    %16 = vector.load %arg5[%c0_11, %c0_12] : memref<128x384xbf16, #tpu.memory_space<vmem>>, vector<128x384xbf16>
    %cst_13 = arith.constant dense<0.000000e+00> : vector<8x384xf32>
    %17 = tpu.matmul %15, %16, %cst_13 {dimension_numbers = #tpu.dot_dimension_numbers<[1], [0], [0], [1], [0, 0, 1, 1], [], []>} : vector<8x128xbf16>, vector<128x384xbf16>, vector<8x384xf32> -> vector<8x384xf32>
    %18 = arith.addf %17, %9 : vector<8x384xf32>
    %19 = vector.extract_strided_slice %14 {offsets = [0, 0], sizes = [8, 128], strides = [1, 1]} : vector<8x384xf32> to vector<8x128xf32>
    %20 = vector.extract_strided_slice %18 {offsets = [0, 0], sizes = [8, 128], strides = [1, 1]} : vector<8x384xf32> to vector<8x128xf32>
    %21 = arith.addf %19, %20 : vector<8x128xf32>
    %22 = arith.negf %21 : vector<8x128xf32>
    %23 = math.exp %22 : vector<8x128xf32>
    %cst_14 = arith.constant 1.000000e+00 : f32
    %24 = vector.broadcast %cst_14 : f32 to vector<8x128xf32>
    %25 = arith.addf %24, %23 : vector<8x128xf32>
    %26 = arith.divf %24, %25 : vector<8x128xf32>
    %27 = vector.extract_strided_slice %14 {offsets = [0, 128], sizes = [8, 128], strides = [1, 1]} : vector<8x384xf32> to vector<8x128xf32>
    %28 = vector.extract_strided_slice %18 {offsets = [0, 128], sizes = [8, 128], strides = [1, 1]} : vector<8x384xf32> to vector<8x128xf32>
    %29 = arith.addf %27, %28 : vector<8x128xf32>
    %30 = arith.negf %29 : vector<8x128xf32>
    %31 = math.exp %30 : vector<8x128xf32>
    %cst_15 = arith.constant 1.000000e+00 : f32
    %32 = vector.broadcast %cst_15 : f32 to vector<8x128xf32>
    %33 = arith.addf %32, %31 : vector<8x128xf32>
    %34 = arith.divf %32, %33 : vector<8x128xf32>
    %35 = vector.extract_strided_slice %14 {offsets = [0, 256], sizes = [8, 128], strides = [1, 1]} : vector<8x384xf32> to vector<8x128xf32>
    %36 = vector.extract_strided_slice %18 {offsets = [0, 256], sizes = [8, 128], strides = [1, 1]} : vector<8x384xf32> to vector<8x128xf32>
    %37 = arith.mulf %26, %36 : vector<8x128xf32>
    %38 = arith.addf %35, %37 : vector<8x128xf32>
    %39 = math.tanh %38 : vector<8x128xf32>
    %cst_16 = arith.constant 1.000000e+00 : f32
    %40 = vector.broadcast %cst_16 : f32 to vector<8x128xf32>
    %41 = arith.subf %40, %34 : vector<8x128xf32>
    %42 = arith.mulf %41, %39 : vector<8x128xf32>
    %43 = arith.mulf %34, %10 : vector<8x128xf32>
    %44 = arith.addf %42, %43 : vector<8x128xf32>
    %45 = arith.index_cast %12 : i32 to index
    %c0_17 = arith.constant 0 : index
    %46 = vector.load %arg13[%45, %c0_17] : memref<64x128xf32, #tpu.memory_space<vmem>>, vector<8x128xf32>
    tpu.vector_store %arg13[%45, %c0_17], %44 {strides = array<i32>} : memref<64x128xf32, #tpu.memory_space<vmem>>, vector<8x128xf32>,
    %c1_i32 = arith.constant 1 : i32
    %c8_i32_18 = arith.constant 8 : i32
    %47 = arith.muli %c1_i32, %c8_i32_18 : i32
    %48 = tpu.assume_multiple %47, 8 : i32
    %49 = arith.index_cast %48 : i32 to index
    %c0_19 = arith.constant 0 : index
    %50 = vector.load %arg12[%49, %c0_19] : memref<64x384xf32, #tpu.memory_space<vmem>>, vector<8x384xf32>
    %51 = arith.truncf %44 : vector<8x128xf32> to vector<8x128xbf16>
    %c0_20 = arith.constant 0 : index
    %c0_21 = arith.constant 0 : index
    %52 = vector.load %arg5[%c0_20, %c0_21] : memref<128x384xbf16, #tpu.memory_space<vmem>>, vector<128x384xbf16>
    %cst_22 = arith.constant dense<0.000000e+00> : vector<8x384xf32>
    %53 = tpu.matmul %51, %52, %cst_22 {dimension_numbers = #tpu.dot_dimension_numbers<[1], [0], [0], [1], [0, 0, 1, 1], [], []>} : vector<8x128xbf16>, vector<128x384xbf16>, vector<8x384xf32> -> vector<8x384xf32>
    %54 = arith.addf %53, %9 : vector<8x384xf32>
    %55 = vector.extract_strided_slice %50 {offsets = [0, 0], sizes = [8, 128], strides = [1, 1]} : vector<8x384xf32> to vector<8x128xf32>
    %56 = vector.extract_strided_slice %54 {offsets = [0, 0], sizes = [8, 128], strides = [1, 1]} : vector<8x384xf32> to vector<8x128xf32>
    %57 = arith.addf %55, %56 : vector<8x128xf32>
    %58 = arith.negf %57 : vector<8x128xf32>
    %59 = math.exp %58 : vector<8x128xf32>
    %cst_23 = arith.constant 1.000000e+00 : f32
    %60 = vector.broadcast %cst_23 : f32 to vector<8x128xf32>
    %61 = arith.addf %60, %59 : vector<8x128xf32>
    %62 = arith.divf %60, %61 : vector<8x128xf32>
    %63 = vector.extract_strided_slice %50 {offsets = [0, 128], sizes = [8, 128], strides = [1, 1]} : vector<8x384xf32> to vector<8x128xf32>
    %64 = vector.extract_strided_slice %54 {offsets = [0, 128], sizes = [8, 128], strides = [1, 1]} : vector<8x384xf32> to vector<8x128xf32>
    %65 = arith.addf %63, %64 : vector<8x128xf32>
    %66 = arith.negf %65 : vector<8x128xf32>
    %67 = math.exp %66 : vector<8x128xf32>
    %cst_24 = arith.constant 1.000000e+00 : f32
    %68 = vector.broadcast %cst_24 : f32 to vector<8x128xf32>
    %69 = arith.addf %68, %67 : vector<8x128xf32>
    %70 = arith.divf %68, %69 : vector<8x128xf32>
    %71 = vector.extract_strided_slice %50 {offsets = [0, 256], sizes = [8, 128], strides = [1, 1]} : vector<8x384xf32> to vector<8x128xf32>
    %72 = vector.extract_strided_slice %54 {offsets = [0, 256], sizes = [8, 128], strides = [1, 1]} : vector<8x384xf32> to vector<8x128xf32>
    %73 = arith.mulf %62, %72 : vector<8x128xf32>
    %74 = arith.addf %71, %73 : vector<8x128xf32>
    %75 = math.tanh %74 : vector<8x128xf32>
    %cst_25 = arith.constant 1.000000e+00 : f32
    %76 = vector.broadcast %cst_25 : f32 to vector<8x128xf32>
    %77 = arith.subf %76, %70 : vector<8x128xf32>
    %78 = arith.mulf %77, %75 : vector<8x128xf32>
    %79 = arith.mulf %70, %44 : vector<8x128xf32>
    %80 = arith.addf %78, %79 : vector<8x128xf32>
    %81 = arith.index_cast %48 : i32 to index
    %c0_26 = arith.constant 0 : index
    %82 = vector.load %arg13[%81, %c0_26] : memref<64x128xf32, #tpu.memory_space<vmem>>, vector<8x128xf32>
    tpu.vector_store %arg13[%81, %c0_26], %80 {strides = array<i32>} : memref<64x128xf32, #tpu.memory_space<vmem>>, vector<8x128xf32>,
    %c2_i32 = arith.constant 2 : i32
    %c8_i32_27 = arith.constant 8 : i32
    %83 = arith.muli %c2_i32, %c8_i32_27 : i32
    %84 = tpu.assume_multiple %83, 8 : i32
    %85 = arith.index_cast %84 : i32 to index
    %c0_28 = arith.constant 0 : index
    %86 = vector.load %arg12[%85, %c0_28] : memref<64x384xf32, #tpu.memory_space<vmem>>, vector<8x384xf32>
    %87 = arith.truncf %80 : vector<8x128xf32> to vector<8x128xbf16>
    %c0_29 = arith.constant 0 : index
    %c0_30 = arith.constant 0 : index
    %88 = vector.load %arg5[%c0_29, %c0_30] : memref<128x384xbf16, #tpu.memory_space<vmem>>, vector<128x384xbf16>
    %cst_31 = arith.constant dense<0.000000e+00> : vector<8x384xf32>
    %89 = tpu.matmul %87, %88, %cst_31 {dimension_numbers = #tpu.dot_dimension_numbers<[1], [0], [0], [1], [0, 0, 1, 1], [], []>} : vector<8x128xbf16>, vector<128x384xbf16>, vector<8x384xf32> -> vector<8x384xf32>
    %90 = arith.addf %89, %9 : vector<8x384xf32>
    %91 = vector.extract_strided_slice %86 {offsets = [0, 0], sizes = [8, 128], strides = [1, 1]} : vector<8x384xf32> to vector<8x128xf32>
    %92 = vector.extract_strided_slice %90 {offsets = [0, 0], sizes = [8, 128], strides = [1, 1]} : vector<8x384xf32> to vector<8x128xf32>
    %93 = arith.addf %91, %92 : vector<8x128xf32>
    %94 = arith.negf %93 : vector<8x128xf32>
    %95 = math.exp %94 : vector<8x128xf32>
    %cst_32 = arith.constant 1.000000e+00 : f32
    %96 = vector.broadcast %cst_32 : f32 to vector<8x128xf32>
    %97 = arith.addf %96, %95 : vector<8x128xf32>
    %98 = arith.divf %96, %97 : vector<8x128xf32>
    %99 = vector.extract_strided_slice %86 {offsets = [0, 128], sizes = [8, 128], strides = [1, 1]} : vector<8x384xf32> to vector<8x128xf32>
    %100 = vector.extract_strided_slice %90 {offsets = [0, 128], sizes = [8, 128], strides = [1, 1]} : vector<8x384xf32> to vector<8x128xf32>
    %101 = arith.addf %99, %100 : vector<8x128xf32>
    %102 = arith.negf %101 : vector<8x128xf32>
    %103 = math.exp %102 : vector<8x128xf32>
    %cst_33 = arith.constant 1.000000e+00 : f32
    %104 = vector.broadcast %cst_33 : f32 to vector<8x128xf32>
    %105 = arith.addf %104, %103 : vector<8x128xf32>
    %106 = arith.divf %104, %105 : vector<8x128xf32>
    %107 = vector.extract_strided_slice %86 {offsets = [0, 256], sizes = [8, 128], strides = [1, 1]} : vector<8x384xf32> to vector<8x128xf32>
    %108 = vector.extract_strided_slice %90 {offsets = [0, 256], sizes = [8, 128], strides = [1, 1]} : vector<8x384xf32> to vector<8x128xf32>
    %109 = arith.mulf %98, %108 : vector<8x128xf32>
    %110 = arith.addf %107, %109 : vector<8x128xf32>
    %111 = math.tanh %110 : vector<8x128xf32>
    %cst_34 = arith.constant 1.000000e+00 : f32
    %112 = vector.broadcast %cst_34 : f32 to vector<8x128xf32>
    %113 = arith.subf %112, %106 : vector<8x128xf32>
    %114 = arith.mulf %113, %111 : vector<8x128xf32>
    %115 = arith.mulf %106, %80 : vector<8x128xf32>
    %116 = arith.addf %114, %115 : vector<8x128xf32>
    %117 = arith.index_cast %84 : i32 to index
    %c0_35 = arith.constant 0 : index
    %118 = vector.load %arg13[%117, %c0_35] : memref<64x128xf32, #tpu.memory_space<vmem>>, vector<8x128xf32>
    tpu.vector_store %arg13[%117, %c0_35], %116 {strides = array<i32>} : memref<64x128xf32, #tpu.memory_space<vmem>>, vector<8x128xf32>,
    %c3_i32 = arith.constant 3 : i32
    %c8_i32_36 = arith.constant 8 : i32
    %119 = arith.muli %c3_i32, %c8_i32_36 : i32
    %120 = tpu.assume_multiple %119, 8 : i32
    %121 = arith.index_cast %120 : i32 to index
    %c0_37 = arith.constant 0 : index
    %122 = vector.load %arg12[%121, %c0_37] : memref<64x384xf32, #tpu.memory_space<vmem>>, vector<8x384xf32>
    %123 = arith.truncf %116 : vector<8x128xf32> to vector<8x128xbf16>
    %c0_38 = arith.constant 0 : index
    %c0_39 = arith.constant 0 : index
    %124 = vector.load %arg5[%c0_38, %c0_39] : memref<128x384xbf16, #tpu.memory_space<vmem>>, vector<128x384xbf16>
    %cst_40 = arith.constant dense<0.000000e+00> : vector<8x384xf32>
    %125 = tpu.matmul %123, %124, %cst_40 {dimension_numbers = #tpu.dot_dimension_numbers<[1], [0], [0], [1], [0, 0, 1, 1], [], []>} : vector<8x128xbf16>, vector<128x384xbf16>, vector<8x384xf32> -> vector<8x384xf32>
    %126 = arith.addf %125, %9 : vector<8x384xf32>
    %127 = vector.extract_strided_slice %122 {offsets = [0, 0], sizes = [8, 128], strides = [1, 1]} : vector<8x384xf32> to vector<8x128xf32>
    %128 = vector.extract_strided_slice %126 {offsets = [0, 0], sizes = [8, 128], strides = [1, 1]} : vector<8x384xf32> to vector<8x128xf32>
    %129 = arith.addf %127, %128 : vector<8x128xf32>
    %130 = arith.negf %129 : vector<8x128xf32>
    %131 = math.exp %130 : vector<8x128xf32>
    %cst_41 = arith.constant 1.000000e+00 : f32
    %132 = vector.broadcast %cst_41 : f32 to vector<8x128xf32>
    %133 = arith.addf %132, %131 : vector<8x128xf32>
    %134 = arith.divf %132, %133 : vector<8x128xf32>
    %135 = vector.extract_strided_slice %122 {offsets = [0, 128], sizes = [8, 128], strides = [1, 1]} : vector<8x384xf32> to vector<8x128xf32>
    %136 = vector.extract_strided_slice %126 {offsets = [0, 128], sizes = [8, 128], strides = [1, 1]} : vector<8x384xf32> to vector<8x128xf32>
    %137 = arith.addf %135, %136 : vector<8x128xf32>
    %138 = arith.negf %137 : vector<8x128xf32>
    %139 = math.exp %138 : vector<8x128xf32>
    %cst_42 = arith.constant 1.000000e+00 : f32
    %140 = vector.broadcast %cst_42 : f32 to vector<8x128xf32>
    %141 = arith.addf %140, %139 : vector<8x128xf32>
    %142 = arith.divf %140, %141 : vector<8x128xf32>
    %143 = vector.extract_strided_slice %122 {offsets = [0, 256], sizes = [8, 128], strides = [1, 1]} : vector<8x384xf32> to vector<8x128xf32>
    %144 = vector.extract_strided_slice %126 {offsets = [0, 256], sizes = [8, 128], strides = [1, 1]} : vector<8x384xf32> to vector<8x128xf32>
    %145 = arith.mulf %134, %144 : vector<8x128xf32>
    %146 = arith.addf %143, %145 : vector<8x128xf32>
    %147 = math.tanh %146 : vector<8x128xf32>
    %cst_43 = arith.constant 1.000000e+00 : f32
    %148 = vector.broadcast %cst_43 : f32 to vector<8x128xf32>
    %149 = arith.subf %148, %142 : vector<8x128xf32>
    %150 = arith.mulf %149, %147 : vector<8x128xf32>
    %151 = arith.mulf %142, %116 : vector<8x128xf32>
    %152 = arith.addf %150, %151 : vector<8x128xf32>
    %153 = arith.index_cast %120 : i32 to index
    %c0_44 = arith.constant 0 : index
    %154 = vector.load %arg13[%153, %c0_44] : memref<64x128xf32, #tpu.memory_space<vmem>>, vector<8x128xf32>
    tpu.vector_store %arg13[%153, %c0_44], %152 {strides = array<i32>} : memref<64x128xf32, #tpu.memory_space<vmem>>, vector<8x128xf32>,
    %c4_i32 = arith.constant 4 : i32
    %c8_i32_45 = arith.constant 8 : i32
    %155 = arith.muli %c4_i32, %c8_i32_45 : i32
    %156 = tpu.assume_multiple %155, 8 : i32
    %157 = arith.index_cast %156 : i32 to index
    %c0_46 = arith.constant 0 : index
    %158 = vector.load %arg12[%157, %c0_46] : memref<64x384xf32, #tpu.memory_space<vmem>>, vector<8x384xf32>
    %159 = arith.truncf %152 : vector<8x128xf32> to vector<8x128xbf16>
    %c0_47 = arith.constant 0 : index
    %c0_48 = arith.constant 0 : index
    %160 = vector.load %arg5[%c0_47, %c0_48] : memref<128x384xbf16, #tpu.memory_space<vmem>>, vector<128x384xbf16>
    %cst_49 = arith.constant dense<0.000000e+00> : vector<8x384xf32>
    %161 = tpu.matmul %159, %160, %cst_49 {dimension_numbers = #tpu.dot_dimension_numbers<[1], [0], [0], [1], [0, 0, 1, 1], [], []>} : vector<8x128xbf16>, vector<128x384xbf16>, vector<8x384xf32> -> vector<8x384xf32>
    %162 = arith.addf %161, %9 : vector<8x384xf32>
    %163 = vector.extract_strided_slice %158 {offsets = [0, 0], sizes = [8, 128], strides = [1, 1]} : vector<8x384xf32> to vector<8x128xf32>
    %164 = vector.extract_strided_slice %162 {offsets = [0, 0], sizes = [8, 128], strides = [1, 1]} : vector<8x384xf32> to vector<8x128xf32>
    %165 = arith.addf %163, %164 : vector<8x128xf32>
    %166 = arith.negf %165 : vector<8x128xf32>
    %167 = math.exp %166 : vector<8x128xf32>
    %cst_50 = arith.constant 1.000000e+00 : f32
    %168 = vector.broadcast %cst_50 : f32 to vector<8x128xf32>
    %169 = arith.addf %168, %167 : vector<8x128xf32>
    %170 = arith.divf %168, %169 : vector<8x128xf32>
    %171 = vector.extract_strided_slice %158 {offsets = [0, 128], sizes = [8, 128], strides = [1, 1]} : vector<8x384xf32> to vector<8x128xf32>
    %172 = vector.extract_strided_slice %162 {offsets = [0, 128], sizes = [8, 128], strides = [1, 1]} : vector<8x384xf32> to vector<8x128xf32>
    %173 = arith.addf %171, %172 : vector<8x128xf32>
    %174 = arith.negf %173 : vector<8x128xf32>
    %175 = math.exp %174 : vector<8x128xf32>
    %cst_51 = arith.constant 1.000000e+00 : f32
    %176 = vector.broadcast %cst_51 : f32 to vector<8x128xf32>
    %177 = arith.addf %176, %175 : vector<8x128xf32>
    %178 = arith.divf %176, %177 : vector<8x128xf32>
    %179 = vector.extract_strided_slice %158 {offsets = [0, 256], sizes = [8, 128], strides = [1, 1]} : vector<8x384xf32> to vector<8x128xf32>
    %180 = vector.extract_strided_slice %162 {offsets = [0, 256], sizes = [8, 128], strides = [1, 1]} : vector<8x384xf32> to vector<8x128xf32>
    %181 = arith.mulf %170, %180 : vector<8x128xf32>
    %182 = arith.addf %179, %181 : vector<8x128xf32>
    %183 = math.tanh %182 : vector<8x128xf32>
    %cst_52 = arith.constant 1.000000e+00 : f32
    %184 = vector.broadcast %cst_52 : f32 to vector<8x128xf32>
    %185 = arith.subf %184, %178 : vector<8x128xf32>
    %186 = arith.mulf %185, %183 : vector<8x128xf32>
    %187 = arith.mulf %178, %152 : vector<8x128xf32>
    %188 = arith.addf %186, %187 : vector<8x128xf32>
    %189 = arith.index_cast %156 : i32 to index
    %c0_53 = arith.constant 0 : index
    %190 = vector.load %arg13[%189, %c0_53] : memref<64x128xf32, #tpu.memory_space<vmem>>, vector<8x128xf32>
    tpu.vector_store %arg13[%189, %c0_53], %188 {strides = array<i32>} : memref<64x128xf32, #tpu.memory_space<vmem>>, vector<8x128xf32>,
    %c5_i32 = arith.constant 5 : i32
    %c8_i32_54 = arith.constant 8 : i32
    %191 = arith.muli %c5_i32, %c8_i32_54 : i32
    %192 = tpu.assume_multiple %191, 8 : i32
    %193 = arith.index_cast %192 : i32 to index
    %c0_55 = arith.constant 0 : index
    %194 = vector.load %arg12[%193, %c0_55] : memref<64x384xf32, #tpu.memory_space<vmem>>, vector<8x384xf32>
    %195 = arith.truncf %188 : vector<8x128xf32> to vector<8x128xbf16>
    %c0_56 = arith.constant 0 : index
    %c0_57 = arith.constant 0 : index
    %196 = vector.load %arg5[%c0_56, %c0_57] : memref<128x384xbf16, #tpu.memory_space<vmem>>, vector<128x384xbf16>
    %cst_58 = arith.constant dense<0.000000e+00> : vector<8x384xf32>
    %197 = tpu.matmul %195, %196, %cst_58 {dimension_numbers = #tpu.dot_dimension_numbers<[1], [0], [0], [1], [0, 0, 1, 1], [], []>} : vector<8x128xbf16>, vector<128x384xbf16>, vector<8x384xf32> -> vector<8x384xf32>
    %198 = arith.addf %197, %9 : vector<8x384xf32>
    %199 = vector.extract_strided_slice %194 {offsets = [0, 0], sizes = [8, 128], strides = [1, 1]} : vector<8x384xf32> to vector<8x128xf32>
    %200 = vector.extract_strided_slice %198 {offsets = [0, 0], sizes = [8, 128], strides = [1, 1]} : vector<8x384xf32> to vector<8x128xf32>
    %201 = arith.addf %199, %200 : vector<8x128xf32>
    %202 = arith.negf %201 : vector<8x128xf32>
    %203 = math.exp %202 : vector<8x128xf32>
    %cst_59 = arith.constant 1.000000e+00 : f32
    %204 = vector.broadcast %cst_59 : f32 to vector<8x128xf32>
    %205 = arith.addf %204, %203 : vector<8x128xf32>
    %206 = arith.divf %204, %205 : vector<8x128xf32>
    %207 = vector.extract_strided_slice %194 {offsets = [0, 128], sizes = [8, 128], strides = [1, 1]} : vector<8x384xf32> to vector<8x128xf32>
    %208 = vector.extract_strided_slice %198 {offsets = [0, 128], sizes = [8, 128], strides = [1, 1]} : vector<8x384xf32> to vector<8x128xf32>
    %209 = arith.addf %207, %208 : vector<8x128xf32>
    %210 = arith.negf %209 : vector<8x128xf32>
    %211 = math.exp %210 : vector<8x128xf32>
    %cst_60 = arith.constant 1.000000e+00 : f32
    %212 = vector.broadcast %cst_60 : f32 to vector<8x128xf32>
    %213 = arith.addf %212, %211 : vector<8x128xf32>
    %214 = arith.divf %212, %213 : vector<8x128xf32>
    %215 = vector.extract_strided_slice %194 {offsets = [0, 256], sizes = [8, 128], strides = [1, 1]} : vector<8x384xf32> to vector<8x128xf32>
    %216 = vector.extract_strided_slice %198 {offsets = [0, 256], sizes = [8, 128], strides = [1, 1]} : vector<8x384xf32> to vector<8x128xf32>
    %217 = arith.mulf %206, %216 : vector<8x128xf32>
    %218 = arith.addf %215, %217 : vector<8x128xf32>
    %219 = math.tanh %218 : vector<8x128xf32>
    %cst_61 = arith.constant 1.000000e+00 : f32
    %220 = vector.broadcast %cst_61 : f32 to vector<8x128xf32>
    %221 = arith.subf %220, %214 : vector<8x128xf32>
    %222 = arith.mulf %221, %219 : vector<8x128xf32>
    %223 = arith.mulf %214, %188 : vector<8x128xf32>
    %224 = arith.addf %222, %223 : vector<8x128xf32>
    %225 = arith.index_cast %192 : i32 to index
    %c0_62 = arith.constant 0 : index
    %226 = vector.load %arg13[%225, %c0_62] : memref<64x128xf32, #tpu.memory_space<vmem>>, vector<8x128xf32>
    tpu.vector_store %arg13[%225, %c0_62], %224 {strides = array<i32>} : memref<64x128xf32, #tpu.memory_space<vmem>>, vector<8x128xf32>,
    %c6_i32 = arith.constant 6 : i32
    %c8_i32_63 = arith.constant 8 : i32
    %227 = arith.muli %c6_i32, %c8_i32_63 : i32
    %228 = tpu.assume_multiple %227, 8 : i32
    %229 = arith.index_cast %228 : i32 to index
    %c0_64 = arith.constant 0 : index
    %230 = vector.load %arg12[%229, %c0_64] : memref<64x384xf32, #tpu.memory_space<vmem>>, vector<8x384xf32>
    %231 = arith.truncf %224 : vector<8x128xf32> to vector<8x128xbf16>
    %c0_65 = arith.constant 0 : index
    %c0_66 = arith.constant 0 : index
    %232 = vector.load %arg5[%c0_65, %c0_66] : memref<128x384xbf16, #tpu.memory_space<vmem>>, vector<128x384xbf16>
    %cst_67 = arith.constant dense<0.000000e+00> : vector<8x384xf32>
    %233 = tpu.matmul %231, %232, %cst_67 {dimension_numbers = #tpu.dot_dimension_numbers<[1], [0], [0], [1], [0, 0, 1, 1], [], []>} : vector<8x128xbf16>, vector<128x384xbf16>, vector<8x384xf32> -> vector<8x384xf32>
    %234 = arith.addf %233, %9 : vector<8x384xf32>
    %235 = vector.extract_strided_slice %230 {offsets = [0, 0], sizes = [8, 128], strides = [1, 1]} : vector<8x384xf32> to vector<8x128xf32>
    %236 = vector.extract_strided_slice %234 {offsets = [0, 0], sizes = [8, 128], strides = [1, 1]} : vector<8x384xf32> to vector<8x128xf32>
    %237 = arith.addf %235, %236 : vector<8x128xf32>
    %238 = arith.negf %237 : vector<8x128xf32>
    %239 = math.exp %238 : vector<8x128xf32>
    %cst_68 = arith.constant 1.000000e+00 : f32
    %240 = vector.broadcast %cst_68 : f32 to vector<8x128xf32>
    %241 = arith.addf %240, %239 : vector<8x128xf32>
    %242 = arith.divf %240, %241 : vector<8x128xf32>
    %243 = vector.extract_strided_slice %230 {offsets = [0, 128], sizes = [8, 128], strides = [1, 1]} : vector<8x384xf32> to vector<8x128xf32>
    %244 = vector.extract_strided_slice %234 {offsets = [0, 128], sizes = [8, 128], strides = [1, 1]} : vector<8x384xf32> to vector<8x128xf32>
    %245 = arith.addf %243, %244 : vector<8x128xf32>
    %246 = arith.negf %245 : vector<8x128xf32>
    %247 = math.exp %246 : vector<8x128xf32>
    %cst_69 = arith.constant 1.000000e+00 : f32
    %248 = vector.broadcast %cst_69 : f32 to vector<8x128xf32>
    %249 = arith.addf %248, %247 : vector<8x128xf32>
    %250 = arith.divf %248, %249 : vector<8x128xf32>
    %251 = vector.extract_strided_slice %230 {offsets = [0, 256], sizes = [8, 128], strides = [1, 1]} : vector<8x384xf32> to vector<8x128xf32>
    %252 = vector.extract_strided_slice %234 {offsets = [0, 256], sizes = [8, 128], strides = [1, 1]} : vector<8x384xf32> to vector<8x128xf32>
    %253 = arith.mulf %242, %252 : vector<8x128xf32>
    %254 = arith.addf %251, %253 : vector<8x128xf32>
    %255 = math.tanh %254 : vector<8x128xf32>
    %cst_70 = arith.constant 1.000000e+00 : f32
    %256 = vector.broadcast %cst_70 : f32 to vector<8x128xf32>
    %257 = arith.subf %256, %250 : vector<8x128xf32>
    %258 = arith.mulf %257, %255 : vector<8x128xf32>
    %259 = arith.mulf %250, %224 : vector<8x128xf32>
    %260 = arith.addf %258, %259 : vector<8x128xf32>
    %261 = arith.index_cast %228 : i32 to index
    %c0_71 = arith.constant 0 : index
    %262 = vector.load %arg13[%261, %c0_71] : memref<64x128xf32, #tpu.memory_space<vmem>>, vector<8x128xf32>
    tpu.vector_store %arg13[%261, %c0_71], %260 {strides = array<i32>} : memref<64x128xf32, #tpu.memory_space<vmem>>, vector<8x128xf32>,
    %c7_i32 = arith.constant 7 : i32
    %c8_i32_72 = arith.constant 8 : i32
    %263 = arith.muli %c7_i32, %c8_i32_72 : i32
    %264 = tpu.assume_multiple %263, 8 : i32
    %265 = arith.index_cast %264 : i32 to index
    %c0_73 = arith.constant 0 : index
    %266 = vector.load %arg12[%265, %c0_73] : memref<64x384xf32, #tpu.memory_space<vmem>>, vector<8x384xf32>
    %267 = arith.truncf %260 : vector<8x128xf32> to vector<8x128xbf16>
    %c0_74 = arith.constant 0 : index
    %c0_75 = arith.constant 0 : index
    %268 = vector.load %arg5[%c0_74, %c0_75] : memref<128x384xbf16, #tpu.memory_space<vmem>>, vector<128x384xbf16>
    %cst_76 = arith.constant dense<0.000000e+00> : vector<8x384xf32>
    %269 = tpu.matmul %267, %268, %cst_76 {dimension_numbers = #tpu.dot_dimension_numbers<[1], [0], [0], [1], [0, 0, 1, 1], [], []>} : vector<8x128xbf16>, vector<128x384xbf16>, vector<8x384xf32> -> vector<8x384xf32>
    %270 = arith.addf %269, %9 : vector<8x384xf32>
    %271 = vector.extract_strided_slice %266 {offsets = [0, 0], sizes = [8, 128], strides = [1, 1]} : vector<8x384xf32> to vector<8x128xf32>
    %272 = vector.extract_strided_slice %270 {offsets = [0, 0], sizes = [8, 128], strides = [1, 1]} : vector<8x384xf32> to vector<8x128xf32>
    %273 = arith.addf %271, %272 : vector<8x128xf32>
    %274 = arith.negf %273 : vector<8x128xf32>
    %275 = math.exp %274 : vector<8x128xf32>
    %cst_77 = arith.constant 1.000000e+00 : f32
    %276 = vector.broadcast %cst_77 : f32 to vector<8x128xf32>
    %277 = arith.addf %276, %275 : vector<8x128xf32>
    %278 = arith.divf %276, %277 : vector<8x128xf32>
    %279 = vector.extract_strided_slice %266 {offsets = [0, 128], sizes = [8, 128], strides = [1, 1]} : vector<8x384xf32> to vector<8x128xf32>
    %280 = vector.extract_strided_slice %270 {offsets = [0, 128], sizes = [8, 128], strides = [1, 1]} : vector<8x384xf32> to vector<8x128xf32>
    %281 = arith.addf %279, %280 : vector<8x128xf32>
    %282 = arith.negf %281 : vector<8x128xf32>
    %283 = math.exp %282 : vector<8x128xf32>
    %cst_78 = arith.constant 1.000000e+00 : f32
    %284 = vector.broadcast %cst_78 : f32 to vector<8x128xf32>
    %285 = arith.addf %284, %283 : vector<8x128xf32>
    %286 = arith.divf %284, %285 : vector<8x128xf32>
    %287 = vector.extract_strided_slice %266 {offsets = [0, 256], sizes = [8, 128], strides = [1, 1]} : vector<8x384xf32> to vector<8x128xf32>
    %288 = vector.extract_strided_slice %270 {offsets = [0, 256], sizes = [8, 128], strides = [1, 1]} : vector<8x384xf32> to vector<8x128xf32>
    %289 = arith.mulf %278, %288 : vector<8x128xf32>
    %290 = arith.addf %287, %289 : vector<8x128xf32>
    %291 = math.tanh %290 : vector<8x128xf32>
    %cst_79 = arith.constant 1.000000e+00 : f32
    %292 = vector.broadcast %cst_79 : f32 to vector<8x128xf32>
    %293 = arith.subf %292, %286 : vector<8x128xf32>
    %294 = arith.mulf %293, %291 : vector<8x128xf32>
    %295 = arith.mulf %286, %260 : vector<8x128xf32>
    %296 = arith.addf %294, %295 : vector<8x128xf32>
    %297 = arith.index_cast %264 : i32 to index
    %c0_80 = arith.constant 0 : index
    %298 = vector.load %arg13[%297, %c0_80] : memref<64x128xf32, #tpu.memory_space<vmem>>, vector<8x128xf32>
    tpu.vector_store %arg13[%297, %c0_80], %296 {strides = array<i32>} : memref<64x128xf32, #tpu.memory_space<vmem>>, vector<8x128xf32>,
    %c8_i32_81 = arith.constant 8 : i32
    %c0_82 = arith.constant 0 : index
    %c0_83 = arith.constant 0 : index
    %299 = vector.load %arg13[%c0_82, %c0_83] : memref<64x128xf32, #tpu.memory_space<vmem>>, vector<64x128xf32>
    %300 = arith.truncf %299 : vector<64x128xf32> to vector<64x128xbf16>
    %c0_84 = arith.constant 0 : index
    %c0_85 = arith.constant 0 : index
    %301 = vector.load %arg3[%c0_84, %c0_85] : memref<128x384xbf16, #tpu.memory_space<vmem>>, vector<128x384xbf16>
    %cst_86 = arith.constant dense<0.000000e+00> : vector<64x384xf32>
    %302 = tpu.matmul %300, %301, %cst_86 {dimension_numbers = #tpu.dot_dimension_numbers<[1], [0], [0], [1], [0, 0, 1, 1], [], []>} : vector<64x128xbf16>, vector<128x384xbf16>, vector<64x384xf32> -> vector<64x384xf32>
    %c0_87 = arith.constant 0 : index
    %c0_88 = arith.constant 0 : index
    %303 = vector.load %arg4[%c0_87, %c0_88] : memref<1x384xf32, #tpu.memory_space<vmem>>, vector<1x384xf32>
    %304 = vector.broadcast %303 : vector<1x384xf32> to vector<64x384xf32>
    %305 = arith.addf %302, %304 : vector<64x384xf32>
    %c0_89 = arith.constant 0 : index
    %c0_90 = arith.constant 0 : index
    %306 = vector.load %arg12[%c0_89, %c0_90] : memref<64x384xf32, #tpu.memory_space<vmem>>, vector<64x384xf32>
    tpu.vector_store %arg12[%c0_89, %c0_90], %305 {strides = array<i32>} : memref<64x384xf32, #tpu.memory_space<vmem>>, vector<64x384xf32>,
    %c0_91 = arith.constant 0 : index
    %c0_92 = arith.constant 0 : index
    %307 = vector.load %arg8[%c0_91, %c0_92] : memref<1x384xf32, #tpu.memory_space<vmem>>, vector<1x384xf32>
    %308 = vector.shape_cast %307 : vector<1x384xf32> to vector<1x384xf32>
    %309 = vector.broadcast %308 : vector<1x384xf32> to vector<8x384xf32>
    %cst_93 = arith.constant 0.000000e+00 : f32
    %310 = vector.broadcast %cst_93 : f32 to vector<8x128xf32>
    %c0_i32_94 = arith.constant 0 : i32
    %c8_i32_95 = arith.constant 8 : i32
    %311 = arith.muli %c0_i32_94, %c8_i32_95 : i32
    %312 = tpu.assume_multiple %311, 8 : i32
    %313 = arith.index_cast %312 : i32 to index
    %c0_96 = arith.constant 0 : index
    %314 = vector.load %arg12[%313, %c0_96] : memref<64x384xf32, #tpu.memory_space<vmem>>, vector<8x384xf32>
    %315 = arith.truncf %310 : vector<8x128xf32> to vector<8x128xbf16>
    %c0_97 = arith.constant 0 : index
    %c0_98 = arith.constant 0 : index
    %316 = vector.load %arg7[%c0_97, %c0_98] : memref<128x384xbf16, #tpu.memory_space<vmem>>, vector<128x384xbf16>
    %cst_99 = arith.constant dense<0.000000e+00> : vector<8x384xf32>
    %317 = tpu.matmul %315, %316, %cst_99 {dimension_numbers = #tpu.dot_dimension_numbers<[1], [0], [0], [1], [0, 0, 1, 1], [], []>} : vector<8x128xbf16>, vector<128x384xbf16>, vector<8x384xf32> -> vector<8x384xf32>
    %318 = arith.addf %317, %309 : vector<8x384xf32>
    %319 = vector.extract_strided_slice %314 {offsets = [0, 0], sizes = [8, 128], strides = [1, 1]} : vector<8x384xf32> to vector<8x128xf32>
    %320 = vector.extract_strided_slice %318 {offsets = [0, 0], sizes = [8, 128], strides = [1, 1]} : vector<8x384xf32> to vector<8x128xf32>
    %321 = arith.addf %319, %320 : vector<8x128xf32>
    %322 = arith.negf %321 : vector<8x128xf32>
    %323 = math.exp %322 : vector<8x128xf32>
    %cst_100 = arith.constant 1.000000e+00 : f32
    %324 = vector.broadcast %cst_100 : f32 to vector<8x128xf32>
    %325 = arith.addf %324, %323 : vector<8x128xf32>
    %326 = arith.divf %324, %325 : vector<8x128xf32>
    %327 = vector.extract_strided_slice %314 {offsets = [0, 128], sizes = [8, 128], strides = [1, 1]} : vector<8x384xf32> to vector<8x128xf32>
    %328 = vector.extract_strided_slice %318 {offsets = [0, 128], sizes = [8, 128], strides = [1, 1]} : vector<8x384xf32> to vector<8x128xf32>
    %329 = arith.addf %327, %328 : vector<8x128xf32>
    %330 = arith.negf %329 : vector<8x128xf32>
    %331 = math.exp %330 : vector<8x128xf32>
    %cst_101 = arith.constant 1.000000e+00 : f32
    %332 = vector.broadcast %cst_101 : f32 to vector<8x128xf32>
    %333 = arith.addf %332, %331 : vector<8x128xf32>
    %334 = arith.divf %332, %333 : vector<8x128xf32>
    %335 = vector.extract_strided_slice %314 {offsets = [0, 256], sizes = [8, 128], strides = [1, 1]} : vector<8x384xf32> to vector<8x128xf32>
    %336 = vector.extract_strided_slice %318 {offsets = [0, 256], sizes = [8, 128], strides = [1, 1]} : vector<8x384xf32> to vector<8x128xf32>
    %337 = arith.mulf %326, %336 : vector<8x128xf32>
    %338 = arith.addf %335, %337 : vector<8x128xf32>
    %339 = math.tanh %338 : vector<8x128xf32>
    %cst_102 = arith.constant 1.000000e+00 : f32
    %340 = vector.broadcast %cst_102 : f32 to vector<8x128xf32>
    %341 = arith.subf %340, %334 : vector<8x128xf32>
    %342 = arith.mulf %341, %339 : vector<8x128xf32>
    %343 = arith.mulf %334, %310 : vector<8x128xf32>
    %344 = arith.addf %342, %343 : vector<8x128xf32>
    %c1_i32_103 = arith.constant 1 : i32
    %c8_i32_104 = arith.constant 8 : i32
    %345 = arith.muli %c1_i32_103, %c8_i32_104 : i32
    %346 = tpu.assume_multiple %345, 8 : i32
    %347 = arith.index_cast %346 : i32 to index
    %c0_105 = arith.constant 0 : index
    %348 = vector.load %arg12[%347, %c0_105] : memref<64x384xf32, #tpu.memory_space<vmem>>, vector<8x384xf32>
    %349 = arith.truncf %344 : vector<8x128xf32> to vector<8x128xbf16>
    %c0_106 = arith.constant 0 : index
    %c0_107 = arith.constant 0 : index
    %350 = vector.load %arg7[%c0_106, %c0_107] : memref<128x384xbf16, #tpu.memory_space<vmem>>, vector<128x384xbf16>
    %cst_108 = arith.constant dense<0.000000e+00> : vector<8x384xf32>
    %351 = tpu.matmul %349, %350, %cst_108 {dimension_numbers = #tpu.dot_dimension_numbers<[1], [0], [0], [1], [0, 0, 1, 1], [], []>} : vector<8x128xbf16>, vector<128x384xbf16>, vector<8x384xf32> -> vector<8x384xf32>
    %352 = arith.addf %351, %309 : vector<8x384xf32>
    %353 = vector.extract_strided_slice %348 {offsets = [0, 0], sizes = [8, 128], strides = [1, 1]} : vector<8x384xf32> to vector<8x128xf32>
    %354 = vector.extract_strided_slice %352 {offsets = [0, 0], sizes = [8, 128], strides = [1, 1]} : vector<8x384xf32> to vector<8x128xf32>
    %355 = arith.addf %353, %354 : vector<8x128xf32>
    %356 = arith.negf %355 : vector<8x128xf32>
    %357 = math.exp %356 : vector<8x128xf32>
    %cst_109 = arith.constant 1.000000e+00 : f32
    %358 = vector.broadcast %cst_109 : f32 to vector<8x128xf32>
    %359 = arith.addf %358, %357 : vector<8x128xf32>
    %360 = arith.divf %358, %359 : vector<8x128xf32>
    %361 = vector.extract_strided_slice %348 {offsets = [0, 128], sizes = [8, 128], strides = [1, 1]} : vector<8x384xf32> to vector<8x128xf32>
    %362 = vector.extract_strided_slice %352 {offsets = [0, 128], sizes = [8, 128], strides = [1, 1]} : vector<8x384xf32> to vector<8x128xf32>
    %363 = arith.addf %361, %362 : vector<8x128xf32>
    %364 = arith.negf %363 : vector<8x128xf32>
    %365 = math.exp %364 : vector<8x128xf32>
    %cst_110 = arith.constant 1.000000e+00 : f32
    %366 = vector.broadcast %cst_110 : f32 to vector<8x128xf32>
    %367 = arith.addf %366, %365 : vector<8x128xf32>
    %368 = arith.divf %366, %367 : vector<8x128xf32>
    %369 = vector.extract_strided_slice %348 {offsets = [0, 256], sizes = [8, 128], strides = [1, 1]} : vector<8x384xf32> to vector<8x128xf32>
    %370 = vector.extract_strided_slice %352 {offsets = [0, 256], sizes = [8, 128], strides = [1, 1]} : vector<8x384xf32> to vector<8x128xf32>
    %371 = arith.mulf %360, %370 : vector<8x128xf32>
    %372 = arith.addf %369, %371 : vector<8x128xf32>
    %373 = math.tanh %372 : vector<8x128xf32>
    %cst_111 = arith.constant 1.000000e+00 : f32
    %374 = vector.broadcast %cst_111 : f32 to vector<8x128xf32>
    %375 = arith.subf %374, %368 : vector<8x128xf32>
    %376 = arith.mulf %375, %373 : vector<8x128xf32>
    %377 = arith.mulf %368, %344 : vector<8x128xf32>
    %378 = arith.addf %376, %377 : vector<8x128xf32>
    %c2_i32_112 = arith.constant 2 : i32
    %c8_i32_113 = arith.constant 8 : i32
    %379 = arith.muli %c2_i32_112, %c8_i32_113 : i32
    %380 = tpu.assume_multiple %379, 8 : i32
    %381 = arith.index_cast %380 : i32 to index
    %c0_114 = arith.constant 0 : index
    %382 = vector.load %arg12[%381, %c0_114] : memref<64x384xf32, #tpu.memory_space<vmem>>, vector<8x384xf32>
    %383 = arith.truncf %378 : vector<8x128xf32> to vector<8x128xbf16>
    %c0_115 = arith.constant 0 : index
    %c0_116 = arith.constant 0 : index
    %384 = vector.load %arg7[%c0_115, %c0_116] : memref<128x384xbf16, #tpu.memory_space<vmem>>, vector<128x384xbf16>
    %cst_117 = arith.constant dense<0.000000e+00> : vector<8x384xf32>
    %385 = tpu.matmul %383, %384, %cst_117 {dimension_numbers = #tpu.dot_dimension_numbers<[1], [0], [0], [1], [0, 0, 1, 1], [], []>} : vector<8x128xbf16>, vector<128x384xbf16>, vector<8x384xf32> -> vector<8x384xf32>
    %386 = arith.addf %385, %309 : vector<8x384xf32>
    %387 = vector.extract_strided_slice %382 {offsets = [0, 0], sizes = [8, 128], strides = [1, 1]} : vector<8x384xf32> to vector<8x128xf32>
    %388 = vector.extract_strided_slice %386 {offsets = [0, 0], sizes = [8, 128], strides = [1, 1]} : vector<8x384xf32> to vector<8x128xf32>
    %389 = arith.addf %387, %388 : vector<8x128xf32>
    %390 = arith.negf %389 : vector<8x128xf32>
    %391 = math.exp %390 : vector<8x128xf32>
    %cst_118 = arith.constant 1.000000e+00 : f32
    %392 = vector.broadcast %cst_118 : f32 to vector<8x128xf32>
    %393 = arith.addf %392, %391 : vector<8x128xf32>
    %394 = arith.divf %392, %393 : vector<8x128xf32>
    %395 = vector.extract_strided_slice %382 {offsets = [0, 128], sizes = [8, 128], strides = [1, 1]} : vector<8x384xf32> to vector<8x128xf32>
    %396 = vector.extract_strided_slice %386 {offsets = [0, 128], sizes = [8, 128], strides = [1, 1]} : vector<8x384xf32> to vector<8x128xf32>
    %397 = arith.addf %395, %396 : vector<8x128xf32>
    %398 = arith.negf %397 : vector<8x128xf32>
    %399 = math.exp %398 : vector<8x128xf32>
    %cst_119 = arith.constant 1.000000e+00 : f32
    %400 = vector.broadcast %cst_119 : f32 to vector<8x128xf32>
    %401 = arith.addf %400, %399 : vector<8x128xf32>
    %402 = arith.divf %400, %401 : vector<8x128xf32>
    %403 = vector.extract_strided_slice %382 {offsets = [0, 256], sizes = [8, 128], strides = [1, 1]} : vector<8x384xf32> to vector<8x128xf32>
    %404 = vector.extract_strided_slice %386 {offsets = [0, 256], sizes = [8, 128], strides = [1, 1]} : vector<8x384xf32> to vector<8x128xf32>
    %405 = arith.mulf %394, %404 : vector<8x128xf32>
    %406 = arith.addf %403, %405 : vector<8x128xf32>
    %407 = math.tanh %406 : vector<8x128xf32>
    %cst_120 = arith.constant 1.000000e+00 : f32
    %408 = vector.broadcast %cst_120 : f32 to vector<8x128xf32>
    %409 = arith.subf %408, %402 : vector<8x128xf32>
    %410 = arith.mulf %409, %407 : vector<8x128xf32>
    %411 = arith.mulf %402, %378 : vector<8x128xf32>
    %412 = arith.addf %410, %411 : vector<8x128xf32>
    %c3_i32_121 = arith.constant 3 : i32
    %c8_i32_122 = arith.constant 8 : i32
    %413 = arith.muli %c3_i32_121, %c8_i32_122 : i32
    %414 = tpu.assume_multiple %413, 8 : i32
    %415 = arith.index_cast %414 : i32 to index
    %c0_123 = arith.constant 0 : index
    %416 = vector.load %arg12[%415, %c0_123] : memref<64x384xf32, #tpu.memory_space<vmem>>, vector<8x384xf32>
    %417 = arith.truncf %412 : vector<8x128xf32> to vector<8x128xbf16>
    %c0_124 = arith.constant 0 : index
    %c0_125 = arith.constant 0 : index
    %418 = vector.load %arg7[%c0_124, %c0_125] : memref<128x384xbf16, #tpu.memory_space<vmem>>, vector<128x384xbf16>
    %cst_126 = arith.constant dense<0.000000e+00> : vector<8x384xf32>
    %419 = tpu.matmul %417, %418, %cst_126 {dimension_numbers = #tpu.dot_dimension_numbers<[1], [0], [0], [1], [0, 0, 1, 1], [], []>} : vector<8x128xbf16>, vector<128x384xbf16>, vector<8x384xf32> -> vector<8x384xf32>
    %420 = arith.addf %419, %309 : vector<8x384xf32>
    %421 = vector.extract_strided_slice %416 {offsets = [0, 0], sizes = [8, 128], strides = [1, 1]} : vector<8x384xf32> to vector<8x128xf32>
    %422 = vector.extract_strided_slice %420 {offsets = [0, 0], sizes = [8, 128], strides = [1, 1]} : vector<8x384xf32> to vector<8x128xf32>
    %423 = arith.addf %421, %422 : vector<8x128xf32>
    %424 = arith.negf %423 : vector<8x128xf32>
    %425 = math.exp %424 : vector<8x128xf32>
    %cst_127 = arith.constant 1.000000e+00 : f32
    %426 = vector.broadcast %cst_127 : f32 to vector<8x128xf32>
    %427 = arith.addf %426, %425 : vector<8x128xf32>
    %428 = arith.divf %426, %427 : vector<8x128xf32>
    %429 = vector.extract_strided_slice %416 {offsets = [0, 128], sizes = [8, 128], strides = [1, 1]} : vector<8x384xf32> to vector<8x128xf32>
    %430 = vector.extract_strided_slice %420 {offsets = [0, 128], sizes = [8, 128], strides = [1, 1]} : vector<8x384xf32> to vector<8x128xf32>
    %431 = arith.addf %429, %430 : vector<8x128xf32>
    %432 = arith.negf %431 : vector<8x128xf32>
    %433 = math.exp %432 : vector<8x128xf32>
    %cst_128 = arith.constant 1.000000e+00 : f32
    %434 = vector.broadcast %cst_128 : f32 to vector<8x128xf32>
    %435 = arith.addf %434, %433 : vector<8x128xf32>
    %436 = arith.divf %434, %435 : vector<8x128xf32>
    %437 = vector.extract_strided_slice %416 {offsets = [0, 256], sizes = [8, 128], strides = [1, 1]} : vector<8x384xf32> to vector<8x128xf32>
    %438 = vector.extract_strided_slice %420 {offsets = [0, 256], sizes = [8, 128], strides = [1, 1]} : vector<8x384xf32> to vector<8x128xf32>
    %439 = arith.mulf %428, %438 : vector<8x128xf32>
    %440 = arith.addf %437, %439 : vector<8x128xf32>
    %441 = math.tanh %440 : vector<8x128xf32>
    %cst_129 = arith.constant 1.000000e+00 : f32
    %442 = vector.broadcast %cst_129 : f32 to vector<8x128xf32>
    %443 = arith.subf %442, %436 : vector<8x128xf32>
    %444 = arith.mulf %443, %441 : vector<8x128xf32>
    %445 = arith.mulf %436, %412 : vector<8x128xf32>
    %446 = arith.addf %444, %445 : vector<8x128xf32>
    %c4_i32_130 = arith.constant 4 : i32
    %c8_i32_131 = arith.constant 8 : i32
    %447 = arith.muli %c4_i32_130, %c8_i32_131 : i32
    %448 = tpu.assume_multiple %447, 8 : i32
    %449 = arith.index_cast %448 : i32 to index
    %c0_132 = arith.constant 0 : index
    %450 = vector.load %arg12[%449, %c0_132] : memref<64x384xf32, #tpu.memory_space<vmem>>, vector<8x384xf32>
    %451 = arith.truncf %446 : vector<8x128xf32> to vector<8x128xbf16>
    %c0_133 = arith.constant 0 : index
    %c0_134 = arith.constant 0 : index
    %452 = vector.load %arg7[%c0_133, %c0_134] : memref<128x384xbf16, #tpu.memory_space<vmem>>, vector<128x384xbf16>
    %cst_135 = arith.constant dense<0.000000e+00> : vector<8x384xf32>
    %453 = tpu.matmul %451, %452, %cst_135 {dimension_numbers = #tpu.dot_dimension_numbers<[1], [0], [0], [1], [0, 0, 1, 1], [], []>} : vector<8x128xbf16>, vector<128x384xbf16>, vector<8x384xf32> -> vector<8x384xf32>
    %454 = arith.addf %453, %309 : vector<8x384xf32>
    %455 = vector.extract_strided_slice %450 {offsets = [0, 0], sizes = [8, 128], strides = [1, 1]} : vector<8x384xf32> to vector<8x128xf32>
    %456 = vector.extract_strided_slice %454 {offsets = [0, 0], sizes = [8, 128], strides = [1, 1]} : vector<8x384xf32> to vector<8x128xf32>
    %457 = arith.addf %455, %456 : vector<8x128xf32>
    %458 = arith.negf %457 : vector<8x128xf32>
    %459 = math.exp %458 : vector<8x128xf32>
    %cst_136 = arith.constant 1.000000e+00 : f32
    %460 = vector.broadcast %cst_136 : f32 to vector<8x128xf32>
    %461 = arith.addf %460, %459 : vector<8x128xf32>
    %462 = arith.divf %460, %461 : vector<8x128xf32>
    %463 = vector.extract_strided_slice %450 {offsets = [0, 128], sizes = [8, 128], strides = [1, 1]} : vector<8x384xf32> to vector<8x128xf32>
    %464 = vector.extract_strided_slice %454 {offsets = [0, 128], sizes = [8, 128], strides = [1, 1]} : vector<8x384xf32> to vector<8x128xf32>
    %465 = arith.addf %463, %464 : vector<8x128xf32>
    %466 = arith.negf %465 : vector<8x128xf32>
    %467 = math.exp %466 : vector<8x128xf32>
    %cst_137 = arith.constant 1.000000e+00 : f32
    %468 = vector.broadcast %cst_137 : f32 to vector<8x128xf32>
    %469 = arith.addf %468, %467 : vector<8x128xf32>
    %470 = arith.divf %468, %469 : vector<8x128xf32>
    %471 = vector.extract_strided_slice %450 {offsets = [0, 256], sizes = [8, 128], strides = [1, 1]} : vector<8x384xf32> to vector<8x128xf32>
    %472 = vector.extract_strided_slice %454 {offsets = [0, 256], sizes = [8, 128], strides = [1, 1]} : vector<8x384xf32> to vector<8x128xf32>
    %473 = arith.mulf %462, %472 : vector<8x128xf32>
    %474 = arith.addf %471, %473 : vector<8x128xf32>
    %475 = math.tanh %474 : vector<8x128xf32>
    %cst_138 = arith.constant 1.000000e+00 : f32
    %476 = vector.broadcast %cst_138 : f32 to vector<8x128xf32>
    %477 = arith.subf %476, %470 : vector<8x128xf32>
    %478 = arith.mulf %477, %475 : vector<8x128xf32>
    %479 = arith.mulf %470, %446 : vector<8x128xf32>
    %480 = arith.addf %478, %479 : vector<8x128xf32>
    %c5_i32_139 = arith.constant 5 : i32
    %c8_i32_140 = arith.constant 8 : i32
    %481 = arith.muli %c5_i32_139, %c8_i32_140 : i32
    %482 = tpu.assume_multiple %481, 8 : i32
    %483 = arith.index_cast %482 : i32 to index
    %c0_141 = arith.constant 0 : index
    %484 = vector.load %arg12[%483, %c0_141] : memref<64x384xf32, #tpu.memory_space<vmem>>, vector<8x384xf32>
    %485 = arith.truncf %480 : vector<8x128xf32> to vector<8x128xbf16>
    %c0_142 = arith.constant 0 : index
    %c0_143 = arith.constant 0 : index
    %486 = vector.load %arg7[%c0_142, %c0_143] : memref<128x384xbf16, #tpu.memory_space<vmem>>, vector<128x384xbf16>
    %cst_144 = arith.constant dense<0.000000e+00> : vector<8x384xf32>
    %487 = tpu.matmul %485, %486, %cst_144 {dimension_numbers = #tpu.dot_dimension_numbers<[1], [0], [0], [1], [0, 0, 1, 1], [], []>} : vector<8x128xbf16>, vector<128x384xbf16>, vector<8x384xf32> -> vector<8x384xf32>
    %488 = arith.addf %487, %309 : vector<8x384xf32>
    %489 = vector.extract_strided_slice %484 {offsets = [0, 0], sizes = [8, 128], strides = [1, 1]} : vector<8x384xf32> to vector<8x128xf32>
    %490 = vector.extract_strided_slice %488 {offsets = [0, 0], sizes = [8, 128], strides = [1, 1]} : vector<8x384xf32> to vector<8x128xf32>
    %491 = arith.addf %489, %490 : vector<8x128xf32>
    %492 = arith.negf %491 : vector<8x128xf32>
    %493 = math.exp %492 : vector<8x128xf32>
    %cst_145 = arith.constant 1.000000e+00 : f32
    %494 = vector.broadcast %cst_145 : f32 to vector<8x128xf32>
    %495 = arith.addf %494, %493 : vector<8x128xf32>
    %496 = arith.divf %494, %495 : vector<8x128xf32>
    %497 = vector.extract_strided_slice %484 {offsets = [0, 128], sizes = [8, 128], strides = [1, 1]} : vector<8x384xf32> to vector<8x128xf32>
    %498 = vector.extract_strided_slice %488 {offsets = [0, 128], sizes = [8, 128], strides = [1, 1]} : vector<8x384xf32> to vector<8x128xf32>
    %499 = arith.addf %497, %498 : vector<8x128xf32>
    %500 = arith.negf %499 : vector<8x128xf32>
    %501 = math.exp %500 : vector<8x128xf32>
    %cst_146 = arith.constant 1.000000e+00 : f32
    %502 = vector.broadcast %cst_146 : f32 to vector<8x128xf32>
    %503 = arith.addf %502, %501 : vector<8x128xf32>
    %504 = arith.divf %502, %503 : vector<8x128xf32>
    %505 = vector.extract_strided_slice %484 {offsets = [0, 256], sizes = [8, 128], strides = [1, 1]} : vector<8x384xf32> to vector<8x128xf32>
    %506 = vector.extract_strided_slice %488 {offsets = [0, 256], sizes = [8, 128], strides = [1, 1]} : vector<8x384xf32> to vector<8x128xf32>
    %507 = arith.mulf %496, %506 : vector<8x128xf32>
    %508 = arith.addf %505, %507 : vector<8x128xf32>
    %509 = math.tanh %508 : vector<8x128xf32>
    %cst_147 = arith.constant 1.000000e+00 : f32
    %510 = vector.broadcast %cst_147 : f32 to vector<8x128xf32>
    %511 = arith.subf %510, %504 : vector<8x128xf32>
    %512 = arith.mulf %511, %509 : vector<8x128xf32>
    %513 = arith.mulf %504, %480 : vector<8x128xf32>
    %514 = arith.addf %512, %513 : vector<8x128xf32>
    %c6_i32_148 = arith.constant 6 : i32
    %c8_i32_149 = arith.constant 8 : i32
    %515 = arith.muli %c6_i32_148, %c8_i32_149 : i32
    %516 = tpu.assume_multiple %515, 8 : i32
    %517 = arith.index_cast %516 : i32 to index
    %c0_150 = arith.constant 0 : index
    %518 = vector.load %arg12[%517, %c0_150] : memref<64x384xf32, #tpu.memory_space<vmem>>, vector<8x384xf32>
    %519 = arith.truncf %514 : vector<8x128xf32> to vector<8x128xbf16>
    %c0_151 = arith.constant 0 : index
    %c0_152 = arith.constant 0 : index
    %520 = vector.load %arg7[%c0_151, %c0_152] : memref<128x384xbf16, #tpu.memory_space<vmem>>, vector<128x384xbf16>
    %cst_153 = arith.constant dense<0.000000e+00> : vector<8x384xf32>
    %521 = tpu.matmul %519, %520, %cst_153 {dimension_numbers = #tpu.dot_dimension_numbers<[1], [0], [0], [1], [0, 0, 1, 1], [], []>} : vector<8x128xbf16>, vector<128x384xbf16>, vector<8x384xf32> -> vector<8x384xf32>
    %522 = arith.addf %521, %309 : vector<8x384xf32>
    %523 = vector.extract_strided_slice %518 {offsets = [0, 0], sizes = [8, 128], strides = [1, 1]} : vector<8x384xf32> to vector<8x128xf32>
    %524 = vector.extract_strided_slice %522 {offsets = [0, 0], sizes = [8, 128], strides = [1, 1]} : vector<8x384xf32> to vector<8x128xf32>
    %525 = arith.addf %523, %524 : vector<8x128xf32>
    %526 = arith.negf %525 : vector<8x128xf32>
    %527 = math.exp %526 : vector<8x128xf32>
    %cst_154 = arith.constant 1.000000e+00 : f32
    %528 = vector.broadcast %cst_154 : f32 to vector<8x128xf32>
    %529 = arith.addf %528, %527 : vector<8x128xf32>
    %530 = arith.divf %528, %529 : vector<8x128xf32>
    %531 = vector.extract_strided_slice %518 {offsets = [0, 128], sizes = [8, 128], strides = [1, 1]} : vector<8x384xf32> to vector<8x128xf32>
    %532 = vector.extract_strided_slice %522 {offsets = [0, 128], sizes = [8, 128], strides = [1, 1]} : vector<8x384xf32> to vector<8x128xf32>
    %533 = arith.addf %531, %532 : vector<8x128xf32>
    %534 = arith.negf %533 : vector<8x128xf32>
    %535 = math.exp %534 : vector<8x128xf32>
    %cst_155 = arith.constant 1.000000e+00 : f32
    %536 = vector.broadcast %cst_155 : f32 to vector<8x128xf32>
    %537 = arith.addf %536, %535 : vector<8x128xf32>
    %538 = arith.divf %536, %537 : vector<8x128xf32>
    %539 = vector.extract_strided_slice %518 {offsets = [0, 256], sizes = [8, 128], strides = [1, 1]} : vector<8x384xf32> to vector<8x128xf32>
    %540 = vector.extract_strided_slice %522 {offsets = [0, 256], sizes = [8, 128], strides = [1, 1]} : vector<8x384xf32> to vector<8x128xf32>
    %541 = arith.mulf %530, %540 : vector<8x128xf32>
    %542 = arith.addf %539, %541 : vector<8x128xf32>
    %543 = math.tanh %542 : vector<8x128xf32>
    %cst_156 = arith.constant 1.000000e+00 : f32
    %544 = vector.broadcast %cst_156 : f32 to vector<8x128xf32>
    %545 = arith.subf %544, %538 : vector<8x128xf32>
    %546 = arith.mulf %545, %543 : vector<8x128xf32>
    %547 = arith.mulf %538, %514 : vector<8x128xf32>
    %548 = arith.addf %546, %547 : vector<8x128xf32>
    %c7_i32_157 = arith.constant 7 : i32
    %c8_i32_158 = arith.constant 8 : i32
    %549 = arith.muli %c7_i32_157, %c8_i32_158 : i32
    %550 = tpu.assume_multiple %549, 8 : i32
    %551 = arith.index_cast %550 : i32 to index
    %c0_159 = arith.constant 0 : index
    %552 = vector.load %arg12[%551, %c0_159] : memref<64x384xf32, #tpu.memory_space<vmem>>, vector<8x384xf32>
    %553 = arith.truncf %548 : vector<8x128xf32> to vector<8x128xbf16>
    %c0_160 = arith.constant 0 : index
    %c0_161 = arith.constant 0 : index
    %554 = vector.load %arg7[%c0_160, %c0_161] : memref<128x384xbf16, #tpu.memory_space<vmem>>, vector<128x384xbf16>
    %cst_162 = arith.constant dense<0.000000e+00> : vector<8x384xf32>
    %555 = tpu.matmul %553, %554, %cst_162 {dimension_numbers = #tpu.dot_dimension_numbers<[1], [0], [0], [1], [0, 0, 1, 1], [], []>} : vector<8x128xbf16>, vector<128x384xbf16>, vector<8x384xf32> -> vector<8x384xf32>
    %556 = arith.addf %555, %309 : vector<8x384xf32>
    %557 = vector.extract_strided_slice %552 {offsets = [0, 0], sizes = [8, 128], strides = [1, 1]} : vector<8x384xf32> to vector<8x128xf32>
    %558 = vector.extract_strided_slice %556 {offsets = [0, 0], sizes = [8, 128], strides = [1, 1]} : vector<8x384xf32> to vector<8x128xf32>
    %559 = arith.addf %557, %558 : vector<8x128xf32>
    %560 = arith.negf %559 : vector<8x128xf32>
    %561 = math.exp %560 : vector<8x128xf32>
    %cst_163 = arith.constant 1.000000e+00 : f32
    %562 = vector.broadcast %cst_163 : f32 to vector<8x128xf32>
    %563 = arith.addf %562, %561 : vector<8x128xf32>
    %564 = arith.divf %562, %563 : vector<8x128xf32>
    %565 = vector.extract_strided_slice %552 {offsets = [0, 128], sizes = [8, 128], strides = [1, 1]} : vector<8x384xf32> to vector<8x128xf32>
    %566 = vector.extract_strided_slice %556 {offsets = [0, 128], sizes = [8, 128], strides = [1, 1]} : vector<8x384xf32> to vector<8x128xf32>
    %567 = arith.addf %565, %566 : vector<8x128xf32>
    %568 = arith.negf %567 : vector<8x128xf32>
    %569 = math.exp %568 : vector<8x128xf32>
    %cst_164 = arith.constant 1.000000e+00 : f32
    %570 = vector.broadcast %cst_164 : f32 to vector<8x128xf32>
    %571 = arith.addf %570, %569 : vector<8x128xf32>
    %572 = arith.divf %570, %571 : vector<8x128xf32>
    %573 = vector.extract_strided_slice %552 {offsets = [0, 256], sizes = [8, 128], strides = [1, 1]} : vector<8x384xf32> to vector<8x128xf32>
    %574 = vector.extract_strided_slice %556 {offsets = [0, 256], sizes = [8, 128], strides = [1, 1]} : vector<8x384xf32> to vector<8x128xf32>
    %575 = arith.mulf %564, %574 : vector<8x128xf32>
    %576 = arith.addf %573, %575 : vector<8x128xf32>
    %577 = math.tanh %576 : vector<8x128xf32>
    %cst_165 = arith.constant 1.000000e+00 : f32
    %578 = vector.broadcast %cst_165 : f32 to vector<8x128xf32>
    %579 = arith.subf %578, %572 : vector<8x128xf32>
    %580 = arith.mulf %579, %577 : vector<8x128xf32>
    %581 = arith.mulf %572, %548 : vector<8x128xf32>
    %582 = arith.addf %580, %581 : vector<8x128xf32>
    %c8_i32_166 = arith.constant 8 : i32
    %583 = arith.truncf %582 : vector<8x128xf32> to vector<8x128xbf16>
    %c0_167 = arith.constant 0 : index
    %c0_168 = arith.constant 0 : index
    %584 = vector.load %arg9[%c0_167, %c0_168] : memref<128x128xbf16, #tpu.memory_space<vmem>>, vector<128x128xbf16>
    %cst_169 = arith.constant dense<0.000000e+00> : vector<8x128xf32>
    %585 = tpu.matmul %583, %584, %cst_169 {dimension_numbers = #tpu.dot_dimension_numbers<[1], [0], [0], [1], [0, 0, 1, 1], [], []>} : vector<8x128xbf16>, vector<128x128xbf16>, vector<8x128xf32> -> vector<8x128xf32>
    %c0_170 = arith.constant 0 : index
    %c0_171 = arith.constant 0 : index
    %586 = vector.load %arg10[%c0_170, %c0_171] : memref<1x128xf32, #tpu.memory_space<vmem>>, vector<1x128xf32>
    %587 = vector.broadcast %586 : vector<1x128xf32> to vector<8x128xf32>
    %588 = arith.addf %585, %587 : vector<8x128xf32>
    %c0_172 = arith.constant 0 : index
    %c0_173 = arith.constant 0 : index
    %589 = vector.load %arg11[%c0_172, %c0_173] : memref<8x128xf32, #tpu.memory_space<vmem>>, vector<8x128xf32>
    tpu.vector_store %arg11[%c0_172, %c0_173], %588 {strides = array<i32>} : memref<8x128xf32, #tpu.memory_space<vmem>>, vector<8x128xf32>,
    return
  }
}

</mosaic_0001>

<llo_original>
// kernel: gru_model_forward.1
$region0: #{gru_model_forward.1}
  #allocation0 [shape = 'u32[]', space=smem, size = 0x4, offset = 0x4, fixed_abs, tag = 'smem constant byte address 0x4 - core index']
  #allocation1 [shape = 'u32[72,128]{1,0:T(1,128)}', space=vmem, size = 0x9000, scoped, tag = 'internal scratch']
  #allocation2 [shape = 'f32[64,384]{1,0:T(8,128)}', space=vmem, size = 0x18000, scoped, tag = 'scratch operand']
  #allocation3 [shape = 'f32[64,128]{1,0:T(8,128)}', space=vmem, size = 0x8000, scoped, tag = 'scratch operand']
  %s0 = inlined_call_operand.vmem [shape: bf16[64,128], index: 0, kind: input, shape index: {}]
  %s1 = inlined_call_operand.hbm [shape: bf16[128,384], index: 1, kind: input, shape index: {}]
  %s2 = inlined_call_operand.hbm [shape: f32[1,384], index: 2, kind: input, shape index: {}]
  %s3 = inlined_call_operand.hbm [shape: bf16[128,384], index: 3, kind: input, shape index: {}]
  %s4 = inlined_call_operand.hbm [shape: f32[1,384], index: 4, kind: input, shape index: {}]
  %s5 = inlined_call_operand.hbm [shape: bf16[128,384], index: 5, kind: input, shape index: {}]
  %s6 = inlined_call_operand.hbm [shape: f32[1,384], index: 6, kind: input, shape index: {}]
  %s7 = inlined_call_operand.hbm [shape: bf16[128,384], index: 7, kind: input, shape index: {}]
  %s8 = inlined_call_operand.hbm [shape: f32[1,384], index: 8, kind: input, shape index: {}]
  %s9 = inlined_call_operand.vmem [shape: bf16[128,128], index: 9, kind: input, shape index: {}]
  %s10 = inlined_call_operand.vmem [shape: f32[1,128], index: 10, kind: input, shape index: {}]
  %s11 = inlined_call_operand.vmem [shape: f32[8,128], index: 11, kind: output, shape index: {}]
  %s12 = sld [smem:[#allocation0]]
  $region86: #{gru_model_forward.1} parent=0
    _
  %s14 = ssub.s32 1, %s12
  %s15 = scalar_select 0, %s14, %s12
  $region1: #{gru_model_forward.1} parent=0
    #allocation4 [shape = 'u8[98304]{0}', space=vmem, size = 0x18000, scoped, tag = 'input window, operand 1, single buffered']
    #allocation5 [shape = 's32[1]{0}', space=sflag, size = 0x4, scoped, tag = 'scoped memory for gru_model_forward.1']
    #allocation6 [shape = 'u8[1536]{0}', space=vmem, size = 0x800, scoped, tag = 'input window, operand 2, single buffered']
    #allocation7 [shape = 's32[1]{0}', space=sflag, size = 0x4, scoped, tag = 'scoped memory for gru_model_forward.1']
    #allocation8 [shape = 'u8[98304]{0}', space=vmem, size = 0x18000, scoped, tag = 'input window, operand 3, single buffered']
    #allocation9 [shape = 'u8[1536]{0}', space=vmem, size = 0x800, scoped, tag = 'input window, operand 4, single buffered']
    #allocation10 [shape = 's32[1]{0}', space=sflag, size = 0x4, scoped, tag = 'scoped memory for gru_model_forward.1']
    #allocation11 [shape = 'u8[98304]{0}', space=vmem, size = 0x18000, scoped, tag = 'input window, operand 5, single buffered']
    #allocation12 [shape = 'u8[1536]{0}', space=vmem, size = 0x800, scoped, tag = 'input window, operand 6, single buffered']
    #allocation13 [shape = 's32[1]{0}', space=sflag, size = 0x4, scoped, tag = 'scoped memory for gru_model_forward.1']
    #allocation14 [shape = 'u8[98304]{0}', space=vmem, size = 0x18000, scoped, tag = 'input window, operand 7, single buffered']
    #allocation15 [shape = 'u8[1536]{0}', space=vmem, size = 0x800, scoped, tag = 'input window, operand 8, single buffered']
    #allocation16 [shape = 's32[1]{0}', space=sflag, size = 0x4, scoped, tag = 'scoped memory for gru_model_forward.1']
    %16 = vsyncpa [#allocation5], 0
    %17 = vsyncpa [#allocation7], 0
    %18 = vsyncpa [#allocation10], 0
    %19 = vsyncpa [#allocation13], 0
    %20 = vsyncpa [#allocation16], 0
    // Predicated region
    $region2: #{gru_model_forward.1} parent=1 // pred_check
      _
    $region3: #{gru_model_forward.1} parent=1 // pred_check_branch
      %22 = sbr.rel (0) target = $region5
    $region4: #{gru_model_forward.1} parent=1 // pred_region
      _
    $region5: #{gru_model_forward.1} parent=1 // pred_fallthru
      _
    // Predicated region
    $region6: #{gru_model_forward.1} parent=1 // pred_check
      _
    $region7: #{gru_model_forward.1} parent=1 // pred_check_branch
      %24 = sbr.rel (0) target = $region9
    $region8: #{gru_model_forward.1} parent=1 // pred_region
      %26 = vsyncadd [#allocation5], 0
      %s27 = sshll.u32 %s1, 4
      %s28 = int_to_ptr.hbm [resolvable:$true] %s27
      %s29 = sshll.u32 [#allocation4], 4
      %s30 = int_to_ptr.vmem [resolvable:$true] %s29
      %35 = dma.hbm_to_vmem [thread:$0]  %s28, 3072, %s30, [#allocation5], 192, 192, 12
    $region9: #{gru_model_forward.1} parent=1 // pred_fallthru
      _
    // Predicated region
    $region10: #{gru_model_forward.1} parent=1 // pred_check
      _
    $region11: #{gru_model_forward.1} parent=1 // pred_check_branch
      %37 = sbr.rel (0) target = $region13
    $region12: #{gru_model_forward.1} parent=1 // pred_region
      %39 = vsyncadd [#allocation7], 0
      %s41 = sshll.u32 %s2, 4
      %s42 = int_to_ptr.hbm [resolvable:$true] %s41
      %s43 = sshll.u32 [#allocation6], 4
      %s44 = int_to_ptr.vmem [resolvable:$true] %s43
      %46 = dma.hbm_to_vmem [thread:$0]  %s42, 48, %s44, [#allocation7]
    $region13: #{gru_model_forward.1} parent=1 // pred_fallthru
      _
    // Predicated region
    $region14: #{gru_model_forward.1} parent=1 // pred_check
      _
    $region15: #{gru_model_forward.1} parent=1 // pred_check_branch
      %48 = sbr.rel (0) target = $region17
    $region16: #{gru_model_forward.1} parent=1 // pred_region
      %50 = vsyncadd [#allocation7], 0
      %s51 = sshll.u32 %s3, 4
      %s52 = int_to_ptr.hbm [resolvable:$true] %s51
      %s53 = sshll.u32 [#allocation8], 4
      %s54 = int_to_ptr.vmem [resolvable:$true] %s53
      %59 = dma.hbm_to_vmem [thread:$0]  %s52, 3072, %s54, [#allocation7], 192, 192, 12
    $region17: #{gru_model_forward.1} parent=1 // pred_fallthru
      _
    // Predicated region
    $region18: #{gru_model_forward.1} parent=1 // pred_check
      _
    $region19: #{gru_model_forward.1} parent=1 // pred_check_branch
      %61 = sbr.rel (0) target = $region21
    $region20: #{gru_model_forward.1} parent=1 // pred_region
      %63 = vsyncadd [#allocation10], 0
      %s65 = sshll.u32 %s4, 4
      %s66 = int_to_ptr.hbm [resolvable:$true] %s65
      %s67 = sshll.u32 [#allocation9], 4
      %s68 = int_to_ptr.vmem [resolvable:$true] %s67
      %70 = dma.hbm_to_vmem [thread:$0]  %s66, 48, %s68, [#allocation10]
    $region21: #{gru_model_forward.1} parent=1 // pred_fallthru
      _
    // Predicated region
    $region22: #{gru_model_forward.1} parent=1 // pred_check
      _
    $region23: #{gru_model_forward.1} parent=1 // pred_check_branch
      %72 = sbr.rel (0) target = $region25
    $region24: #{gru_model_forward.1} parent=1 // pred_region
      %74 = vsyncadd [#allocation10], 0
      %s75 = sshll.u32 %s5, 4
      %s76 = int_to_ptr.hbm [resolvable:$true] %s75
      %s77 = sshll.u32 [#allocation11], 4
      %s78 = int_to_ptr.vmem [resolvable:$true] %s77
      %83 = dma.hbm_to_vmem [thread:$0]  %s76, 3072, %s78, [#allocation10], 192, 192, 12
    $region25: #{gru_model_forward.1} parent=1 // pred_fallthru
      _
    // Predicated region
    $region26: #{gru_model_forward.1} parent=1 // pred_check
      _
    $region27: #{gru_model_forward.1} parent=1 // pred_check_branch
      %85 = sbr.rel (0) target = $region29
    $region28: #{gru_model_forward.1} parent=1 // pred_region
      %87 = vsyncadd [#allocation13], 0
      %s89 = sshll.u32 %s6, 4
      %s90 = int_to_ptr.hbm [resolvable:$true] %s89
      %s91 = sshll.u32 [#allocation12], 4
      %s92 = int_to_ptr.vmem [resolvable:$true] %s91
      %94 = dma.hbm_to_vmem [thread:$0]  %s90, 48, %s92, [#allocation13]
    $region29: #{gru_model_forward.1} parent=1 // pred_fallthru
      _
    // Predicated region
    $region30: #{gru_model_forward.1} parent=1 // pred_check
      _
    $region31: #{gru_model_forward.1} parent=1 // pred_check_branch
      %96 = sbr.rel (0) target = $region33
    $region32: #{gru_model_forward.1} parent=1 // pred_region
      %98 = vsyncadd [#allocation13], 0
      %s99 = sshll.u32 %s7, 4
      %s100 = int_to_ptr.hbm [resolvable:$true] %s99
      %s101 = sshll.u32 [#allocation14], 4
      %s102 = int_to_ptr.vmem [resolvable:$true] %s101
      %107 = dma.hbm_to_vmem [thread:$0]  %s100, 3072, %s102, [#allocation13], 192, 192, 12
    $region33: #{gru_model_forward.1} parent=1 // pred_fallthru
      _
    // Predicated region
    $region34: #{gru_model_forward.1} parent=1 // pred_check
      _
    $region35: #{gru_model_forward.1} parent=1 // pred_check_branch
      %109 = sbr.rel (0) target = $region37
    $region36: #{gru_model_forward.1} parent=1 // pred_region
      %111 = vsyncadd [#allocation16], 0
      %s113 = sshll.u32 %s8, 4
      %s114 = int_to_ptr.hbm [resolvable:$true] %s113
      %s115 = sshll.u32 [#allocation15], 4
      %s116 = int_to_ptr.vmem [resolvable:$true] %s115
      %118 = dma.hbm_to_vmem [thread:$0]  %s114, 48, %s116, [#allocation16]
    $region37: #{gru_model_forward.1} parent=1 // pred_fallthru
      _
    // Predicated region
    $region38: #{gru_model_forward.1} parent=1 // pred_check
      _
    $region39: #{gru_model_forward.1} parent=1 // pred_check_branch
      %120 = sbr.rel (0) target = $region41
    $region40: #{gru_model_forward.1} parent=1 // pred_region
      _
    $region41: #{gru_model_forward.1} parent=1 // pred_fallthru
      _
    // Predicated region
    $region42: #{gru_model_forward.1} parent=1 // pred_check
      _
    $region43: #{gru_model_forward.1} parent=1 // pred_check_branch
      %122 = sbr.rel (0) target = $region45
    $region44: #{gru_model_forward.1} parent=1 // pred_region
      _
    $region45: #{gru_model_forward.1} parent=1 // pred_fallthru
      _
    // Predicated region
    $region46: #{gru_model_forward.1} parent=1 // pred_check
      _
    $region47: #{gru_model_forward.1} parent=1 // pred_check_branch
      %124 = sbr.rel (0) target = $region49
    $region48: #{gru_model_forward.1} parent=1 // pred_region
      %126 = dma.done [#allocation5], 3072
    $region49: #{gru_model_forward.1} parent=1 // pred_fallthru
      _
    // Predicated region
    $region50: #{gru_model_forward.1} parent=1 // pred_check
      _
    $region51: #{gru_model_forward.1} parent=1 // pred_check_branch
      %128 = sbr.rel (0) target = $region53
    $region52: #{gru_model_forward.1} parent=1 // pred_region
      %130 = dma.done [#allocation7], 48
    $region53: #{gru_model_forward.1} parent=1 // pred_fallthru
      _
    // Predicated region
    $region54: #{gru_model_forward.1} parent=1 // pred_check
      _
    $region55: #{gru_model_forward.1} parent=1 // pred_check_branch
      %132 = sbr.rel (0) target = $region57
    $region56: #{gru_model_forward.1} parent=1 // pred_region
      %134 = dma.done [#allocation7], 3072
    $region57: #{gru_model_forward.1} parent=1 // pred_fallthru
      _
    // Predicated region
    $region58: #{gru_model_forward.1} parent=1 // pred_check
      _
    $region59: #{gru_model_forward.1} parent=1 // pred_check_branch
      %136 = sbr.rel (0) target = $region61
    $region60: #{gru_model_forward.1} parent=1 // pred_region
      %138 = dma.done [#allocation10], 48
    $region61: #{gru_model_forward.1} parent=1 // pred_fallthru
      _
    // Predicated region
    $region62: #{gru_model_forward.1} parent=1 // pred_check
      _
    $region63: #{gru_model_forward.1} parent=1 // pred_check_branch
      %140 = sbr.rel (0) target = $region65
    $region64: #{gru_model_forward.1} parent=1 // pred_region
      %142 = dma.done [#allocation10], 3072
    $region65: #{gru_model_forward.1} parent=1 // pred_fallthru
      _
    // Predicated region
    $region66: #{gru_model_forward.1} parent=1 // pred_check
      _
    $region67: #{gru_model_forward.1} parent=1 // pred_check_branch
      %144 = sbr.rel (0) target = $region69
    $region68: #{gru_model_forward.1} parent=1 // pred_region
      %146 = dma.done [#allocation13], 48
    $region69: #{gru_model_forward.1} parent=1 // pred_fallthru
      _
    // Predicated region
    $region70: #{gru_model_forward.1} parent=1 // pred_check
      _
    $region71: #{gru_model_forward.1} parent=1 // pred_check_branch
      %148 = sbr.rel (0) target = $region73
    $region72: #{gru_model_forward.1} parent=1 // pred_region
      %150 = dma.done [#allocation13], 3072
    $region73: #{gru_model_forward.1} parent=1 // pred_fallthru
      _
    // Predicated region
    $region74: #{gru_model_forward.1} parent=1 // pred_check
      _
    $region75: #{gru_model_forward.1} parent=1 // pred_check_branch
      %152 = sbr.rel (0) target = $region77
    $region76: #{gru_model_forward.1} parent=1 // pred_region
      %154 = dma.done [#allocation16], 48
    $region77: #{gru_model_forward.1} parent=1 // pred_fallthru
      _
    %v156 = vld [vmem:[%s0] sm:$0xf]
    %v157 = vld [vmem:[%s0 + $0x4] sm:$0xf]
    %v158 = vld [vmem:[%s0 + $0x8] sm:$0xf]
    %v159 = vld [vmem:[%s0 + $0xc] sm:$0xf]
    %v160 = vld [vmem:[%s0 + $0x10] sm:$0xf]
    %v161 = vld [vmem:[%s0 + $0x14] sm:$0xf]
    %v162 = vld [vmem:[%s0 + $0x18] sm:$0xf]
    %v163 = vld [vmem:[%s0 + $0x1c] sm:$0xf]
    %v164 = vld [vmem:[#allocation4] sm:$0xff]
    %v165 = vld [vmem:[#allocation4 + $0x8] sm:$0xf]
    %v166 = vld [vmem:[#allocation4 + $0xc] sm:$0xff]
    %v167 = vld [vmem:[#allocation4 + $0x14] sm:$0xf]
    %v168 = vld [vmem:[#allocation4 + $0x18] sm:$0xff]
    %v169 = vld [vmem:[#allocation4 + $0x20] sm:$0xf]
    %v170 = vld [vmem:[#allocation4 + $0x24] sm:$0xff]
    %v171 = vld [vmem:[#allocation4 + $0x2c] sm:$0xf]
    %v172 = vld [vmem:[#allocation4 + $0x30] sm:$0xff]
    %v173 = vld [vmem:[#allocation4 + $0x38] sm:$0xf]
    %v174 = vld [vmem:[#allocation4 + $0x3c] sm:$0xff]
    %v175 = vld [vmem:[#allocation4 + $0x44] sm:$0xf]
    %v176 = vld [vmem:[#allocation4 + $0x48] sm:$0xff]
    %v177 = vld [vmem:[#allocation4 + $0x50] sm:$0xf]
    %v178 = vld [vmem:[#allocation4 + $0x54] sm:$0xff]
    %v179 = vld [vmem:[#allocation4 + $0x5c] sm:$0xf]
    %v180 = vld [vmem:[#allocation4 + $0x60] sm:$0xff]
    %v181 = vld [vmem:[#allocation4 + $0x68] sm:$0xf]
    %v182 = vld [vmem:[#allocation4 + $0x6c] sm:$0xff]
    %v183 = vld [vmem:[#allocation4 + $0x74] sm:$0xf]
    %v184 = vld [vmem:[#allocation4 + $0x78] sm:$0xff]
    %v185 = vld [vmem:[#allocation4 + $0x80] sm:$0xf]
    %v186 = vld [vmem:[#allocation4 + $0x84] sm:$0xff]
    %v187 = vld [vmem:[#allocation4 + $0x8c] sm:$0xf]
    %v188 = vld [vmem:[#allocation4 + $0x90] sm:$0xff]
    %v189 = vld [vmem:[#allocation4 + $0x98] sm:$0xf]
    %v190 = vld [vmem:[#allocation4 + $0x9c] sm:$0xff]
    %v191 = vld [vmem:[#allocation4 + $0xa4] sm:$0xf]
    %v192 = vld [vmem:[#allocation4 + $0xa8] sm:$0xff]
    %v193 = vld [vmem:[#allocation4 + $0xb0] sm:$0xf]
    %v194 = vld [vmem:[#allocation4 + $0xb4] sm:$0xff]
    %v195 = vld [vmem:[#allocation4 + $0xbc] sm:$0xf]
    %v196 = vld [vmem:[#allocation6] sm:$0x7]
    %v198 = vperm.slane %v196, 0
    %v199 = vperm.slane %v196, 1
    %v200 = vperm.slane %v196, 2
    %v212 = vunpack.c.l.b16 %v156
    %v213 = vunpack.c.l.b16 %v157
    %v214 = vunpack.c.l.b16 %v158
    %v215 = vunpack.c.l.b16 %v159
    %v216 = vunpack.c.l.b16 %v160
    %v217 = vunpack.c.l.b16 %v161
    %v218 = vunpack.c.l.b16 %v162
    %v219 = vunpack.c.l.b16 %v163
    %v220 = vpack.c.b16 %v213, %v212
    %v221 = vpack.c.b16 %v215, %v214
    %v222 = vpack.c.b16 %v217, %v216
    %v223 = vpack.c.b16 %v219, %v218
    %v260 = vunpack.c.l.b16 %v164
    %v261 = vunpack.c.h.b16 %v164
    %v262 = vunpack.c.l.b16 %v165
    %v263 = vunpack.c.l.b16 %v166
    %v264 = vunpack.c.h.b16 %v166
    %v265 = vunpack.c.l.b16 %v167
    %v266 = vunpack.c.l.b16 %v168
    %v267 = vunpack.c.h.b16 %v168
    %v268 = vunpack.c.l.b16 %v169
    %v269 = vunpack.c.l.b16 %v170
    %v270 = vunpack.c.h.b16 %v170
    %v271 = vunpack.c.l.b16 %v171
    %v272 = vunpack.c.l.b16 %v172
    %v273 = vunpack.c.h.b16 %v172
    %v274 = vunpack.c.l.b16 %v173
    %v275 = vunpack.c.l.b16 %v174
    %v276 = vunpack.c.h.b16 %v174
    %v277 = vunpack.c.l.b16 %v175
    %v278 = vunpack.c.l.b16 %v176
    %v279 = vunpack.c.h.b16 %v176
    %v280 = vunpack.c.l.b16 %v177
    %v281 = vunpack.c.l.b16 %v178
    %v282 = vunpack.c.h.b16 %v178
    %v283 = vunpack.c.l.b16 %v179
    %v284 = vunpack.c.l.b16 %v180
    %v285 = vunpack.c.h.b16 %v180
    %v286 = vunpack.c.l.b16 %v181
    %v287 = vunpack.c.l.b16 %v182
    %v288 = vunpack.c.h.b16 %v182
    %v289 = vunpack.c.l.b16 %v183
    %v290 = vunpack.c.l.b16 %v184
    %v291 = vunpack.c.h.b16 %v184
    %v292 = vunpack.c.l.b16 %v185
    %v293 = vunpack.c.l.b16 %v186
    %v294 = vunpack.c.h.b16 %v186
    %v295 = vunpack.c.l.b16 %v187
    %v296 = vunpack.c.l.b16 %v188
    %v297 = vunpack.c.h.b16 %v188
    %v298 = vunpack.c.l.b16 %v189
    %v299 = vunpack.c.l.b16 %v190
    %v300 = vunpack.c.h.b16 %v190
    %v301 = vunpack.c.l.b16 %v191
    %v302 = vunpack.c.l.b16 %v192
    %v303 = vunpack.c.h.b16 %v192
    %v304 = vunpack.c.l.b16 %v193
    %v305 = vunpack.c.l.b16 %v194
    %v306 = vunpack.c.h.b16 %v194
    %v307 = vunpack.c.l.b16 %v195
    %v308 = vpack.c.b16 %v263, %v260
    %v309 = vpack.c.b16 %v264, %v261
    %v310 = vpack.c.b16 %v265, %v262
    %v311 = vpack.c.b16 %v269, %v266
    %v312 = vpack.c.b16 %v270, %v267
    %v313 = vpack.c.b16 %v271, %v268
    %v314 = vpack.c.b16 %v275, %v272
    %v315 = vpack.c.b16 %v276, %v273
    %v316 = vpack.c.b16 %v277, %v274
    %v317 = vpack.c.b16 %v281, %v278
    %v318 = vpack.c.b16 %v282, %v279
    %v319 = vpack.c.b16 %v283, %v280
    %v320 = vpack.c.b16 %v287, %v284
    %v321 = vpack.c.b16 %v288, %v285
    %v322 = vpack.c.b16 %v289, %v286
    %v323 = vpack.c.b16 %v293, %v290
    %v324 = vpack.c.b16 %v294, %v291
    %v325 = vpack.c.b16 %v295, %v292
    %v326 = vpack.c.b16 %v299, %v296
    %v327 = vpack.c.b16 %v300, %v297
    %v328 = vpack.c.b16 %v301, %v298
    %v329 = vpack.c.b16 %v305, %v302
    %v330 = vpack.c.b16 %v306, %v303
    %v331 = vpack.c.b16 %v307, %v304
    %356 = vmatpush.bf16.msra.mxu0 %v329
    %357 = vmatpush.bf16.msra.mxu0 %v326
    %358 = vmatpush.bf16.msra.mxu0 %v323
    %359 = vmatpush.bf16.msra.mxu0 %v320
    %360 = vmatpush.bf16.msra.mxu0 %v317
    %361 = vmatpush.bf16.msra.mxu0 %v314
    %362 = vmatpush.bf16.msra.mxu0 %v311
    %363 = vmatpush.bf16.msra.mxu0 %v308
    %364 = vmatmul.bf16.gmra.mxu0 %v220
    %v365 = vpop.f32.mrf.mxu0
    %v366 = vadd.f32 %v198, %v365
    %v367 = vpop.f32.mrf.mxu0
    %v368 = vadd.f32 %v198, %v367
    %369 = vmatmul.bf16.gmra.mxu0 %v221
    %v370 = vpop.f32.mrf.mxu0
    %v371 = vadd.f32 %v198, %v370
    %v372 = vpop.f32.mrf.mxu0
    %v373 = vadd.f32 %v198, %v372
    %374 = vmatmul.bf16.gmra.mxu0 %v222
    %v375 = vpop.f32.mrf.mxu0
    %v376 = vadd.f32 %v198, %v375
    %v377 = vpop.f32.mrf.mxu0
    %v378 = vadd.f32 %v198, %v377
    %379 = vmatmul.bf16.gmra.mxu0 %v223
    %v380 = vpop.f32.mrf.mxu0
    %v381 = vadd.f32 %v198, %v380
    %v382 = vpop.f32.mrf.mxu0
    %v383 = vadd.f32 %v198, %v382
    %384 = vdwg.mxu0
    %385 = vmatpush.bf16.msra.mxu0 %v330
    %386 = vmatpush.bf16.msra.mxu0 %v327
    %387 = vmatpush.bf16.msra.mxu0 %v324
    %388 = vmatpush.bf16.msra.mxu0 %v321
    %389 = vmatpush.bf16.msra.mxu0 %v318
    %390 = vmatpush.bf16.msra.mxu0 %v315
    %391 = vmatpush.bf16.msra.mxu0 %v312
    %392 = vmatpush.bf16.msra.mxu0 %v309
    %393 = vmatmul.bf16.gmra.mxu0 %v220
    %v394 = vpop.f32.mrf.mxu0
    %v395 = vadd.f32 %v199, %v394
    %v396 = vpop.f32.mrf.mxu0
    %v397 = vadd.f32 %v199, %v396
    %398 = vmatmul.bf16.gmra.mxu0 %v221
    %v399 = vpop.f32.mrf.mxu0
    %v400 = vadd.f32 %v199, %v399
    %v401 = vpop.f32.mrf.mxu0
    %v402 = vadd.f32 %v199, %v401
    %403 = vmatmul.bf16.gmra.mxu0 %v222
    %v404 = vpop.f32.mrf.mxu0
    %v405 = vadd.f32 %v199, %v404
    %v406 = vpop.f32.mrf.mxu0
    %v407 = vadd.f32 %v199, %v406
    %408 = vmatmul.bf16.gmra.mxu0 %v223
    %v409 = vpop.f32.mrf.mxu0
    %v410 = vadd.f32 %v199, %v409
    %v411 = vpop.f32.mrf.mxu0
    %v412 = vadd.f32 %v199, %v411
    %413 = vdwg.mxu0
    %414 = vmatpush.bf16.msra.mxu0 %v331
    %415 = vmatpush.bf16.msra.mxu0 %v328
    %416 = vmatpush.bf16.msra.mxu0 %v325
    %417 = vmatpush.bf16.msra.mxu0 %v322
    %418 = vmatpush.bf16.msra.mxu0 %v319
    %419 = vmatpush.bf16.msra.mxu0 %v316
    %420 = vmatpush.bf16.msra.mxu0 %v313
    %421 = vmatpush.bf16.msra.mxu0 %v310
    %422 = vmatmul.bf16.gmra.mxu0 %v220
    %v423 = vpop.f32.mrf.mxu0
    %v424 = vadd.f32 %v200, %v423
    %v425 = vpop.f32.mrf.mxu0
    %v426 = vadd.f32 %v200, %v425
    %427 = vmatmul.bf16.gmra.mxu0 %v221
    %v428 = vpop.f32.mrf.mxu0
    %v429 = vadd.f32 %v200, %v428
    %v430 = vpop.f32.mrf.mxu0
    %v431 = vadd.f32 %v200, %v430
    %432 = vmatmul.bf16.gmra.mxu0 %v222
    %v433 = vpop.f32.mrf.mxu0
    %v434 = vadd.f32 %v200, %v433
    %v435 = vpop.f32.mrf.mxu0
    %v436 = vadd.f32 %v200, %v435
    %437 = vmatmul.bf16.gmra.mxu0 %v223
    %v438 = vpop.f32.mrf.mxu0
    %v439 = vadd.f32 %v200, %v438
    %v440 = vpop.f32.mrf.mxu0
    %v441 = vadd.f32 %v200, %v440
    %442 = vdwg.mxu0
    %443 = vst [vmem:[#allocation2] sm:$0xff] %v366
    %444 = vst [vmem:[#allocation2 + $0x8] sm:$0xff] %v395
    %445 = vst [vmem:[#allocation2 + $0x10] sm:$0xff] %v424
    %446 = vst [vmem:[#allocation2 + $0x18] sm:$0xff] %v368
    %447 = vst [vmem:[#allocation2 + $0x20] sm:$0xff] %v397
    %448 = vst [vmem:[#allocation2 + $0x28] sm:$0xff] %v426
    %449 = vst [vmem:[#allocation2 + $0x30] sm:$0xff] %v371
    %450 = vst [vmem:[#allocation2 + $0x38] sm:$0xff] %v400
    %451 = vst [vmem:[#allocation2 + $0x40] sm:$0xff] %v429
    %452 = vst [vmem:[#allocation2 + $0x48] sm:$0xff] %v373
    %453 = vst [vmem:[#allocation2 + $0x50] sm:$0xff] %v402
    %454 = vst [vmem:[#allocation2 + $0x58] sm:$0xff] %v431
    %455 = vst [vmem:[#allocation2 + $0x60] sm:$0xff] %v376
    %456 = vst [vmem:[#allocation2 + $0x68] sm:$0xff] %v405
    %457 = vst [vmem:[#allocation2 + $0x70] sm:$0xff] %v434
    %458 = vst [vmem:[#allocation2 + $0x78] sm:$0xff] %v378
    %459 = vst [vmem:[#allocation2 + $0x80] sm:$0xff] %v407
    %460 = vst [vmem:[#allocation2 + $0x88] sm:$0xff] %v436
    %461 = vst [vmem:[#allocation2 + $0x90] sm:$0xff] %v381
    %462 = vst [vmem:[#allocation2 + $0x98] sm:$0xff] %v410
    %463 = vst [vmem:[#allocation2 + $0xa0] sm:$0xff] %v439
    %464 = vst [vmem:[#allocation2 + $0xa8] sm:$0xff] %v383
    %465 = vst [vmem:[#allocation2 + $0xb0] sm:$0xff] %v412
    %466 = vst [vmem:[#allocation2 + $0xb8] sm:$0xff] %v441
    %v467 = vld [vmem:[#allocation12] sm:$0x7]
    %v469 = vperm.slane %v467, 0
    %v470 = vperm.slane %v467, 1
    %v471 = vperm.slane %v467, 2
    %s475 = smul.u32 0, 3
    %s476 = smul.addr %s475, 8
    %s477 = scalar_lea.vmem [#allocation2], %s476
    %v478 = vld [vmem:[%s477] sm:$0xff]
    %v479 = vld [vmem:[%s477 + $0x8] sm:$0xff]
    %v480 = vld [vmem:[%s477 + $0x10] sm:$0xff]
    %v481 = vld [vmem:[#allocation11] sm:$0xff]
    %v482 = vld [vmem:[#allocation11 + $0x8] sm:$0xf]
    %v483 = vld [vmem:[#allocation11 + $0xc] sm:$0xff]
    %v484 = vld [vmem:[#allocation11 + $0x14] sm:$0xf]
    %v485 = vld [vmem:[#allocation11 + $0x18] sm:$0xff]
    %v486 = vld [vmem:[#allocation11 + $0x20] sm:$0xf]
    %v487 = vld [vmem:[#allocation11 + $0x24] sm:$0xff]
    %v488 = vld [vmem:[#allocation11 + $0x2c] sm:$0xf]
    %v489 = vld [vmem:[#allocation11 + $0x30] sm:$0xff]
    %v490 = vld [vmem:[#allocation11 + $0x38] sm:$0xf]
    %v491 = vld [vmem:[#allocation11 + $0x3c] sm:$0xff]
    %v492 = vld [vmem:[#allocation11 + $0x44] sm:$0xf]
    %v493 = vld [vmem:[#allocation11 + $0x48] sm:$0xff]
    %v494 = vld [vmem:[#allocation11 + $0x50] sm:$0xf]
    %v495 = vld [vmem:[#allocation11 + $0x54] sm:$0xff]
    %v496 = vld [vmem:[#allocation11 + $0x5c] sm:$0xf]
    %v497 = vld [vmem:[#allocation11 + $0x60] sm:$0xff]
    %v498 = vld [vmem:[#allocation11 + $0x68] sm:$0xf]
    %v499 = vld [vmem:[#allocation11 + $0x6c] sm:$0xff]
    %v500 = vld [vmem:[#allocation11 + $0x74] sm:$0xf]
    %v501 = vld [vmem:[#allocation11 + $0x78] sm:$0xff]
    %v502 = vld [vmem:[#allocation11 + $0x80] sm:$0xf]
    %v503 = vld [vmem:[#allocation11 + $0x84] sm:$0xff]
    %v504 = vld [vmem:[#allocation11 + $0x8c] sm:$0xf]
    %v505 = vld [vmem:[#allocation11 + $0x90] sm:$0xff]
    %v506 = vld [vmem:[#allocation11 + $0x98] sm:$0xf]
    %v507 = vld [vmem:[#allocation11 + $0x9c] sm:$0xff]
    %v508 = vld [vmem:[#allocation11 + $0xa4] sm:$0xf]
    %v509 = vld [vmem:[#allocation11 + $0xa8] sm:$0xff]
    %v510 = vld [vmem:[#allocation11 + $0xb0] sm:$0xf]
    %v511 = vld [vmem:[#allocation11 + $0xb4] sm:$0xff]
    %v512 = vld [vmem:[#allocation11 + $0xbc] sm:$0xf]
    %v545 = vunpack.c.l.b16 %v481
    %v546 = vunpack.c.h.b16 %v481
    %v547 = vunpack.c.l.b16 %v482
    %v548 = vunpack.c.l.b16 %v483
    %v549 = vunpack.c.h.b16 %v483
    %v550 = vunpack.c.l.b16 %v484
    %v551 = vunpack.c.l.b16 %v485
    %v552 = vunpack.c.h.b16 %v485
    %v553 = vunpack.c.l.b16 %v486
    %v554 = vunpack.c.l.b16 %v487
    %v555 = vunpack.c.h.b16 %v487
    %v556 = vunpack.c.l.b16 %v488
    %v557 = vunpack.c.l.b16 %v489
    %v558 = vunpack.c.h.b16 %v489
    %v559 = vunpack.c.l.b16 %v490
    %v560 = vunpack.c.l.b16 %v491
    %v561 = vunpack.c.h.b16 %v491
    %v562 = vunpack.c.l.b16 %v492
    %v563 = vunpack.c.l.b16 %v493
    %v564 = vunpack.c.h.b16 %v493
    %v565 = vunpack.c.l.b16 %v494
    %v566 = vunpack.c.l.b16 %v495
    %v567 = vunpack.c.h.b16 %v495
    %v568 = vunpack.c.l.b16 %v496
    %v569 = vunpack.c.l.b16 %v497
    %v570 = vunpack.c.h.b16 %v497
    %v571 = vunpack.c.l.b16 %v498
    %v572 = vunpack.c.l.b16 %v499
    %v573 = vunpack.c.h.b16 %v499
    %v574 = vunpack.c.l.b16 %v500
    %v575 = vunpack.c.l.b16 %v501
    %v576 = vunpack.c.h.b16 %v501
    %v577 = vunpack.c.l.b16 %v502
    %v578 = vunpack.c.l.b16 %v503
    %v579 = vunpack.c.h.b16 %v503
    %v580 = vunpack.c.l.b16 %v504
    %v581 = vunpack.c.l.b16 %v505
    %v582 = vunpack.c.h.b16 %v505
    %v583 = vunpack.c.l.b16 %v506
    %v584 = vunpack.c.l.b16 %v507
    %v585 = vunpack.c.h.b16 %v507
    %v586 = vunpack.c.l.b16 %v508
    %v587 = vunpack.c.l.b16 %v509
    %v588 = vunpack.c.h.b16 %v509
    %v589 = vunpack.c.l.b16 %v510
    %v590 = vunpack.c.l.b16 %v511
    %v591 = vunpack.c.h.b16 %v511
    %v592 = vunpack.c.l.b16 %v512
    %v593 = vpack.c.b16 %v548, %v545
    %v594 = vpack.c.b16 %v549, %v546
    %v595 = vpack.c.b16 %v550, %v547
    %v596 = vpack.c.b16 %v554, %v551
    %v597 = vpack.c.b16 %v555, %v552
    %v598 = vpack.c.b16 %v556, %v553
    %v599 = vpack.c.b16 %v560, %v557
    %v600 = vpack.c.b16 %v561, %v558
    %v601 = vpack.c.b16 %v562, %v559
    %v602 = vpack.c.b16 %v566, %v563
    %v603 = vpack.c.b16 %v567, %v564
    %v604 = vpack.c.b16 %v568, %v565
    %v605 = vpack.c.b16 %v572, %v569
    %v606 = vpack.c.b16 %v573, %v570
    %v607 = vpack.c.b16 %v574, %v571
    %v608 = vpack.c.b16 %v578, %v575
    %v609 = vpack.c.b16 %v579, %v576
    %v610 = vpack.c.b16 %v580, %v577
    %v611 = vpack.c.b16 %v584, %v581
    %v612 = vpack.c.b16 %v585, %v582
    %v613 = vpack.c.b16 %v586, %v583
    %v614 = vpack.c.b16 %v590, %v587
    %v615 = vpack.c.b16 %v591, %v588
    %v616 = vpack.c.b16 %v592, %v589
    %641 = vmatpush.bf16.msra.mxu0 %v614
    %642 = vmatpush.bf16.msra.mxu0 %v611
    %643 = vmatpush.bf16.msra.mxu0 %v608
    %644 = vmatpush.bf16.msra.mxu0 %v605
    %645 = vmatpush.bf16.msra.mxu0 %v602
    %646 = vmatpush.bf16.msra.mxu0 %v599
    %647 = vmatpush.bf16.msra.mxu0 %v596
    %648 = vmatpush.bf16.msra.mxu0 %v593
    %649 = vmatmul.bf16.gmra.mxu0 0
    %v650 = vpop.f32.mrf.mxu0
    %v651 = vadd.f32 %v469, %v650
    %v652 = vpop.f32.mrf.mxu0
    %653 = vdwg.mxu0
    %654 = vmatpush.bf16.msra.mxu0 %v615
    %655 = vmatpush.bf16.msra.mxu0 %v612
    %656 = vmatpush.bf16.msra.mxu0 %v609
    %657 = vmatpush.bf16.msra.mxu0 %v606
    %658 = vmatpush.bf16.msra.mxu0 %v603
    %659 = vmatpush.bf16.msra.mxu0 %v600
    %660 = vmatpush.bf16.msra.mxu0 %v597
    %661 = vmatpush.bf16.msra.mxu0 %v594
    %662 = vmatmul.bf16.gmra.mxu0 0
    %v663 = vpop.f32.mrf.mxu0
    %v664 = vadd.f32 %v470, %v663
    %v665 = vpop.f32.mrf.mxu0
    %666 = vdwg.mxu0
    %667 = vmatpush.bf16.msra.mxu0 %v616
    %668 = vmatpush.bf16.msra.mxu0 %v613
    %669 = vmatpush.bf16.msra.mxu0 %v610
    %670 = vmatpush.bf16.msra.mxu0 %v607
    %671 = vmatpush.bf16.msra.mxu0 %v604
    %672 = vmatpush.bf16.msra.mxu0 %v601
    %673 = vmatpush.bf16.msra.mxu0 %v598
    %674 = vmatpush.bf16.msra.mxu0 %v595
    %675 = vmatmul.bf16.gmra.mxu0 0
    %v676 = vpop.f32.mrf.mxu0
    %v677 = vadd.f32 %v471, %v676
    %v678 = vpop.f32.mrf.mxu0
    %679 = vdwg.mxu0
    %v680 = vadd.f32 %v478, %v651
    %v681 = vxor.u32 %v680, 2147483648
    %v682 = vmul.f32 %v681, 1.442695
    %v683 = vpow.pop %v682
    %v684 = vadd.f32 %v683, 1.0
    %v685 = vrcp.pop %v684
    %v686 = vmul.f32 %v684, %v685
    %v687 = vsub.f32 1.0, %v686
    %v688 = vmul.f32 %v685, %v687
    %v689 = vadd.f32 %v685, %v688
    %vm690 = vweird.f32 %v684
    %vm691 = vweird.f32 %v685
    %vm692 = vmor %vm690, %vm691
    %v693 = vsel %vm692, %v685, %v689
    %v694 = vand.u32 2147483647, %v684
    %vm695 = vcmp.eq.f32.partialorder %v694, 8.507059e+37
    %v696 = vand.u32 %v684, 2147483648
    %v697 = vor.u32 1.1754944e-38, %v696
    %v698 = vsel %vm695, %v697, %v693
    %v699 = vmul.f32 1.0, %v698
    %v700 = vadd.f32 %v479, %v664
    %v701 = vxor.u32 %v700, 2147483648
    %v702 = vmul.f32 %v701, 1.442695
    %v703 = vpow.pop %v702
    %v704 = vadd.f32 %v703, 1.0
    %v705 = vrcp.pop %v704
    %v706 = vmul.f32 %v704, %v705
    %v707 = vsub.f32 1.0, %v706
    %v708 = vmul.f32 %v705, %v707
    %v709 = vadd.f32 %v705, %v708
    %vm710 = vweird.f32 %v704
    %vm711 = vweird.f32 %v705
    %vm712 = vmor %vm710, %vm711
    %v713 = vsel %vm712, %v705, %v709
    %v714 = vand.u32 2147483647, %v704
    %vm715 = vcmp.eq.f32.partialorder %v714, 8.507059e+37
    %v716 = vand.u32 %v704, 2147483648
    %v717 = vor.u32 1.1754944e-38, %v716
    %v718 = vsel %vm715, %v717, %v713
    %v719 = vmul.f32 1.0, %v718
    %v720 = vmul.f32 %v699, %v677
    %v721 = vadd.f32 %v480, %v720
    %v722 = vtanh.pop %v721
    %v723 = vsub.f32 1.0, %v719
    %v724 = vmul.f32 %v723, %v722
    %v725 = vmul.f32 %v719, 0.0
    %v726 = vadd.f32 %v724, %v725
    %727 = vst [vmem:[#allocation3] sm:$0xff] %v726
    %s728 = smul.u32 1, 3
    %s729 = smul.addr %s728, 8
    %s730 = scalar_lea.vmem [#allocation2], %s729
    %v731 = vld [vmem:[%s730] sm:$0xff]
    %v732 = vld [vmem:[%s730 + $0x8] sm:$0xff]
    %v733 = vld [vmem:[%s730 + $0x10] sm:$0xff]
    %v734 = vpack.c.bf16 %v726, %v726
    %v735 = vld [vmem:[#allocation11] sm:$0xff]
    %v736 = vld [vmem:[#allocation11 + $0x8] sm:$0xf]
    %v737 = vld [vmem:[#allocation11 + $0xc] sm:$0xff]
    %v738 = vld [vmem:[#allocation11 + $0x14] sm:$0xf]
    %v739 = vld [vmem:[#allocation11 + $0x18] sm:$0xff]
    %v740 = vld [vmem:[#allocation11 + $0x20] sm:$0xf]
    %v741 = vld [vmem:[#allocation11 + $0x24] sm:$0xff]
    %v742 = vld [vmem:[#allocation11 + $0x2c] sm:$0xf]
    %v743 = vld [vmem:[#allocation11 + $0x30] sm:$0xff]
    %v744 = vld [vmem:[#allocation11 + $0x38] sm:$0xf]
    %v745 = vld [vmem:[#allocation11 + $0x3c] sm:$0xff]
    %v746 = vld [vmem:[#allocation11 + $0x44] sm:$0xf]
    %v747 = vld [vmem:[#allocation11 + $0x48] sm:$0xff]
    %v748 = vld [vmem:[#allocation11 + $0x50] sm:$0xf]
    %v749 = vld [vmem:[#allocation11 + $0x54] sm:$0xff]
    %v750 = vld [vmem:[#allocation11 + $0x5c] sm:$0xf]
    %v751 = vld [vmem:[#allocation11 + $0x60] sm:$0xff]
    %v752 = vld [vmem:[#allocation11 + $0x68] sm:$0xf]
    %v753 = vld [vmem:[#allocation11 + $0x6c] sm:$0xff]
    %v754 = vld [vmem:[#allocation11 + $0x74] sm:$0xf]
    %v755 = vld [vmem:[#allocation11 + $0x78] sm:$0xff]
    %v756 = vld [vmem:[#allocation11 + $0x80] sm:$0xf]
    %v757 = vld [vmem:[#allocation11 + $0x84] sm:$0xff]
    %v758 = vld [vmem:[#allocation11 + $0x8c] sm:$0xf]
    %v759 = vld [vmem:[#allocation11 + $0x90] sm:$0xff]
    %v760 = vld [vmem:[#allocation11 + $0x98] sm:$0xf]
    %v761 = vld [vmem:[#allocation11 + $0x9c] sm:$0xff]
    %v762 = vld [vmem:[#allocation11 + $0xa4] sm:$0xf]
    %v763 = vld [vmem:[#allocation11 + $0xa8] sm:$0xff]
    %v764 = vld [vmem:[#allocation11 + $0xb0] sm:$0xf]
    %v765 = vld [vmem:[#allocation11 + $0xb4] sm:$0xff]
    %v766 = vld [vmem:[#allocation11 + $0xbc] sm:$0xf]
    %v799 = vunpack.c.l.b16 %v735
    %v800 = vunpack.c.h.b16 %v735
    %v801 = vunpack.c.l.b16 %v736
    %v802 = vunpack.c.l.b16 %v737
    %v803 = vunpack.c.h.b16 %v737
    %v804 = vunpack.c.l.b16 %v738
    %v805 = vunpack.c.l.b16 %v739
    %v806 = vunpack.c.h.b16 %v739
    %v807 = vunpack.c.l.b16 %v740
    %v808 = vunpack.c.l.b16 %v741
    %v809 = vunpack.c.h.b16 %v741
    %v810 = vunpack.c.l.b16 %v742
    %v811 = vunpack.c.l.b16 %v743
    %v812 = vunpack.c.h.b16 %v743
    %v813 = vunpack.c.l.b16 %v744
    %v814 = vunpack.c.l.b16 %v745
    %v815 = vunpack.c.h.b16 %v745
    %v816 = vunpack.c.l.b16 %v746
    %v817 = vunpack.c.l.b16 %v747
    %v818 = vunpack.c.h.b16 %v747
    %v819 = vunpack.c.l.b16 %v748
    %v820 = vunpack.c.l.b16 %v749
    %v821 = vunpack.c.h.b16 %v749
    %v822 = vunpack.c.l.b16 %v750
    %v823 = vunpack.c.l.b16 %v751
    %v824 = vunpack.c.h.b16 %v751
    %v825 = vunpack.c.l.b16 %v752
    %v826 = vunpack.c.l.b16 %v753
    %v827 = vunpack.c.h.b16 %v753
    %v828 = vunpack.c.l.b16 %v754
    %v829 = vunpack.c.l.b16 %v755
    %v830 = vunpack.c.h.b16 %v755
    %v831 = vunpack.c.l.b16 %v756
    %v832 = vunpack.c.l.b16 %v757
    %v833 = vunpack.c.h.b16 %v757
    %v834 = vunpack.c.l.b16 %v758
    %v835 = vunpack.c.l.b16 %v759
    %v836 = vunpack.c.h.b16 %v759
    %v837 = vunpack.c.l.b16 %v760
    %v838 = vunpack.c.l.b16 %v761
    %v839 = vunpack.c.h.b16 %v761
    %v840 = vunpack.c.l.b16 %v762
    %v841 = vunpack.c.l.b16 %v763
    %v842 = vunpack.c.h.b16 %v763
    %v843 = vunpack.c.l.b16 %v764
    %v844 = vunpack.c.l.b16 %v765
    %v845 = vunpack.c.h.b16 %v765
    %v846 = vunpack.c.l.b16 %v766
    %v847 = vpack.c.b16 %v802, %v799
    %v848 = vpack.c.b16 %v803, %v800
    %v849 = vpack.c.b16 %v804, %v801
    %v850 = vpack.c.b16 %v808, %v805
    %v851 = vpack.c.b16 %v809, %v806
    %v852 = vpack.c.b16 %v810, %v807
    %v853 = vpack.c.b16 %v814, %v811
    %v854 = vpack.c.b16 %v815, %v812
    %v855 = vpack.c.b16 %v816, %v813
    %v856 = vpack.c.b16 %v820, %v817
    %v857 = vpack.c.b16 %v821, %v818
    %v858 = vpack.c.b16 %v822, %v819
    %v859 = vpack.c.b16 %v826, %v823
    %v860 = vpack.c.b16 %v827, %v824
    %v861 = vpack.c.b16 %v828, %v825
    %v862 = vpack.c.b16 %v832, %v829
    %v863 = vpack.c.b16 %v833, %v830
    %v864 = vpack.c.b16 %v834, %v831
    %v865 = vpack.c.b16 %v838, %v835
    %v866 = vpack.c.b16 %v839, %v836
    %v867 = vpack.c.b16 %v840, %v837
    %v868 = vpack.c.b16 %v844, %v841
    %v869 = vpack.c.b16 %v845, %v842
    %v870 = vpack.c.b16 %v846, %v843
    %895 = vmatpush.bf16.msra.mxu0 %v868
    %896 = vmatpush.bf16.msra.mxu0 %v865
    %897 = vmatpush.bf16.msra.mxu0 %v862
    %898 = vmatpush.bf16.msra.mxu0 %v859
    %899 = vmatpush.bf16.msra.mxu0 %v856
    %900 = vmatpush.bf16.msra.mxu0 %v853
    %901 = vmatpush.bf16.msra.mxu0 %v850
    %902 = vmatpush.bf16.msra.mxu0 %v847
    %903 = vmatmul.bf16.gmra.mxu0 %v734
    %v904 = vpop.f32.mrf.mxu0
    %v905 = vadd.f32 %v469, %v904
    %v906 = vpop.f32.mrf.mxu0
    %907 = vdwg.mxu0
    %908 = vmatpush.bf16.msra.mxu0 %v869
    %909 = vmatpush.bf16.msra.mxu0 %v866
    %910 = vmatpush.bf16.msra.mxu0 %v863
    %911 = vmatpush.bf16.msra.mxu0 %v860
    %912 = vmatpush.bf16.msra.mxu0 %v857
    %913 = vmatpush.bf16.msra.mxu0 %v854
    %914 = vmatpush.bf16.msra.mxu0 %v851
    %915 = vmatpush.bf16.msra.mxu0 %v848
    %916 = vmatmul.bf16.gmra.mxu0 %v734
    %v917 = vpop.f32.mrf.mxu0
    %v918 = vadd.f32 %v470, %v917
    %v919 = vpop.f32.mrf.mxu0
    %920 = vdwg.mxu0
    %921 = vmatpush.bf16.msra.mxu0 %v870
    %922 = vmatpush.bf16.msra.mxu0 %v867
    %923 = vmatpush.bf16.msra.mxu0 %v864
    %924 = vmatpush.bf16.msra.mxu0 %v861
    %925 = vmatpush.bf16.msra.mxu0 %v858
    %926 = vmatpush.bf16.msra.mxu0 %v855
    %927 = vmatpush.bf16.msra.mxu0 %v852
    %928 = vmatpush.bf16.msra.mxu0 %v849
    %929 = vmatmul.bf16.gmra.mxu0 %v734
    %v930 = vpop.f32.mrf.mxu0
    %v931 = vadd.f32 %v471, %v930
    %v932 = vpop.f32.mrf.mxu0
    %933 = vdwg.mxu0
    %v934 = vadd.f32 %v731, %v905
    %v935 = vxor.u32 %v934, 2147483648
    %v936 = vmul.f32 %v935, 1.442695
    %v937 = vpow.pop %v936
    %v938 = vadd.f32 %v937, 1.0
    %v939 = vrcp.pop %v938
    %v940 = vmul.f32 %v938, %v939
    %v941 = vsub.f32 1.0, %v940
    %v942 = vmul.f32 %v939, %v941
    %v943 = vadd.f32 %v939, %v942
    %vm944 = vweird.f32 %v938
    %vm945 = vweird.f32 %v939
    %vm946 = vmor %vm944, %vm945
    %v947 = vsel %vm946, %v939, %v943
    %v948 = vand.u32 2147483647, %v938
    %vm949 = vcmp.eq.f32.partialorder %v948, 8.507059e+37
    %v950 = vand.u32 %v938, 2147483648
    %v951 = vor.u32 1.1754944e-38, %v950
    %v952 = vsel %vm949, %v951, %v947
    %v953 = vmul.f32 1.0, %v952
    %v954 = vadd.f32 %v732, %v918
    %v955 = vxor.u32 %v954, 2147483648
    %v956 = vmul.f32 %v955, 1.442695
    %v957 = vpow.pop %v956
    %v958 = vadd.f32 %v957, 1.0
    %v959 = vrcp.pop %v958
    %v960 = vmul.f32 %v958, %v959
    %v961 = vsub.f32 1.0, %v960
    %v962 = vmul.f32 %v959, %v961
    %v963 = vadd.f32 %v959, %v962
    %vm964 = vweird.f32 %v958
    %vm965 = vweird.f32 %v959
    %vm966 = vmor %vm964, %vm965
    %v967 = vsel %vm966, %v959, %v963
    %v968 = vand.u32 2147483647, %v958
    %vm969 = vcmp.eq.f32.partialorder %v968, 8.507059e+37
    %v970 = vand.u32 %v958, 2147483648
    %v971 = vor.u32 1.1754944e-38, %v970
    %v972 = vsel %vm969, %v971, %v967
    %v973 = vmul.f32 1.0, %v972
    %v974 = vmul.f32 %v953, %v931
    %v975 = vadd.f32 %v733, %v974
    %v976 = vtanh.pop %v975
    %v977 = vsub.f32 1.0, %v973
    %v978 = vmul.f32 %v977, %v976
    %v979 = vmul.f32 %v973, %v726
    %v980 = vadd.f32 %v978, %v979
    %s981 = scalar_lea.vmem [#allocation3], 8
    %982 = vst [vmem:[%s981] sm:$0xff] %v980
    %s983 = smul.u32 2, 3
    %s984 = smul.addr %s983, 8
    %s985 = scalar_lea.vmem [#allocation2], %s984
    %v986 = vld [vmem:[%s985] sm:$0xff]
    %v987 = vld [vmem:[%s985 + $0x8] sm:$0xff]
    %v988 = vld [vmem:[%s985 + $0x10] sm:$0xff]
    %v989 = vpack.c.bf16 %v980, %v980
    %v990 = vld [vmem:[#allocation11] sm:$0xff]
    %v991 = vld [vmem:[#allocation11 + $0x8] sm:$0xf]
    %v992 = vld [vmem:[#allocation11 + $0xc] sm:$0xff]
    %v993 = vld [vmem:[#allocation11 + $0x14] sm:$0xf]
    %v994 = vld [vmem:[#allocation11 + $0x18] sm:$0xff]
    %v995 = vld [vmem:[#allocation11 + $0x20] sm:$0xf]
    %v996 = vld [vmem:[#allocation11 + $0x24] sm:$0xff]
    %v997 = vld [vmem:[#allocation11 + $0x2c] sm:$0xf]
    %v998 = vld [vmem:[#allocation11 + $0x30] sm:$0xff]
    %v999 = vld [vmem:[#allocation11 + $0x38] sm:$0xf]
    %v1000 = vld [vmem:[#allocation11 + $0x3c] sm:$0xff]
    %v1001 = vld [vmem:[#allocation11 + $0x44] sm:$0xf]
    %v1002 = vld [vmem:[#allocation11 + $0x48] sm:$0xff]
    %v1003 = vld [vmem:[#allocation11 + $0x50] sm:$0xf]
    %v1004 = vld [vmem:[#allocation11 + $0x54] sm:$0xff]
    %v1005 = vld [vmem:[#allocation11 + $0x5c] sm:$0xf]
    %v1006 = vld [vmem:[#allocation11 + $0x60] sm:$0xff]
    %v1007 = vld [vmem:[#allocation11 + $0x68] sm:$0xf]
    %v1008 = vld [vmem:[#allocation11 + $0x6c] sm:$0xff]
    %v1009 = vld [vmem:[#allocation11 + $0x74] sm:$0xf]
    %v1010 = vld [vmem:[#allocation11 + $0x78] sm:$0xff]
    %v1011 = vld [vmem:[#allocation11 + $0x80] sm:$0xf]
    %v1012 = vld [vmem:[#allocation11 + $0x84] sm:$0xff]
    %v1013 = vld [vmem:[#allocation11 + $0x8c] sm:$0xf]
    %v1014 = vld [vmem:[#allocation11 + $0x90] sm:$0xff]
    %v1015 = vld [vmem:[#allocation11 + $0x98] sm:$0xf]
    %v1016 = vld [vmem:[#allocation11 + $0x9c] sm:$0xff]
    %v1017 = vld [vmem:[#allocation11 + $0xa4] sm:$0xf]
    %v1018 = vld [vmem:[#allocation11 + $0xa8] sm:$0xff]
    %v1019 = vld [vmem:[#allocation11 + $0xb0] sm:$0xf]
    %v1020 = vld [vmem:[#allocation11 + $0xb4] sm:$0xff]
    %v1021 = vld [vmem:[#allocation11 + $0xbc] sm:$0xf]
    %v1054 = vunpack.c.l.b16 %v990
    %v1055 = vunpack.c.h.b16 %v990
    %v1056 = vunpack.c.l.b16 %v991
    %v1057 = vunpack.c.l.b16 %v992
    %v1058 = vunpack.c.h.b16 %v992
    %v1059 = vunpack.c.l.b16 %v993
    %v1060 = vunpack.c.l.b16 %v994
    %v1061 = vunpack.c.h.b16 %v994
    %v1062 = vunpack.c.l.b16 %v995
    %v1063 = vunpack.c.l.b16 %v996
    %v1064 = vunpack.c.h.b16 %v996
    %v1065 = vunpack.c.l.b16 %v997
    %v1066 = vunpack.c.l.b16 %v998
    %v1067 = vunpack.c.h.b16 %v998
    %v1068 = vunpack.c.l.b16 %v999
    %v1069 = vunpack.c.l.b16 %v1000
    %v1070 = vunpack.c.h.b16 %v1000
    %v1071 = vunpack.c.l.b16 %v1001
    %v1072 = vunpack.c.l.b16 %v1002
    %v1073 = vunpack.c.h.b16 %v1002
    %v1074 = vunpack.c.l.b16 %v1003
    %v1075 = vunpack.c.l.b16 %v1004
    %v1076 = vunpack.c.h.b16 %v1004
    %v1077 = vunpack.c.l.b16 %v1005
    %v1078 = vunpack.c.l.b16 %v1006
    %v1079 = vunpack.c.h.b16 %v1006
    %v1080 = vunpack.c.l.b16 %v1007
    %v1081 = vunpack.c.l.b16 %v1008
    %v1082 = vunpack.c.h.b16 %v1008
    %v1083 = vunpack.c.l.b16 %v1009
    %v1084 = vunpack.c.l.b16 %v1010
    %v1085 = vunpack.c.h.b16 %v1010
    %v1086 = vunpack.c.l.b16 %v1011
    %v1087 = vunpack.c.l.b16 %v1012
    %v1088 = vunpack.c.h.b16 %v1012
    %v1089 = vunpack.c.l.b16 %v1013
    %v1090 = vunpack.c.l.b16 %v1014
    %v1091 = vunpack.c.h.b16 %v1014
    %v1092 = vunpack.c.l.b16 %v1015
    %v1093 = vunpack.c.l.b16 %v1016
    %v1094 = vunpack.c.h.b16 %v1016
    %v1095 = vunpack.c.l.b16 %v1017
    %v1096 = vunpack.c.l.b16 %v1018
    %v1097 = vunpack.c.h.b16 %v1018
    %v1098 = vunpack.c.l.b16 %v1019
    %v1099 = vunpack.c.l.b16 %v1020
    %v1100 = vunpack.c.h.b16 %v1020
    %v1101 = vunpack.c.l.b16 %v1021
    %v1102 = vpack.c.b16 %v1057, %v1054
    %v1103 = vpack.c.b16 %v1058, %v1055
    %v1104 = vpack.c.b16 %v1059, %v1056
    %v1105 = vpack.c.b16 %v1063, %v1060
    %v1106 = vpack.c.b16 %v1064, %v1061
    %v1107 = vpack.c.b16 %v1065, %v1062
    %v1108 = vpack.c.b16 %v1069, %v1066
    %v1109 = vpack.c.b16 %v1070, %v1067
    %v1110 = vpack.c.b16 %v1071, %v1068
    %v1111 = vpack.c.b16 %v1075, %v1072
    %v1112 = vpack.c.b16 %v1076, %v1073
    %v1113 = vpack.c.b16 %v1077, %v1074
    %v1114 = vpack.c.b16 %v1081, %v1078
    %v1115 = vpack.c.b16 %v1082, %v1079
    %v1116 = vpack.c.b16 %v1083, %v1080
    %v1117 = vpack.c.b16 %v1087, %v1084
    %v1118 = vpack.c.b16 %v1088, %v1085
    %v1119 = vpack.c.b16 %v1089, %v1086
    %v1120 = vpack.c.b16 %v1093, %v1090
    %v1121 = vpack.c.b16 %v1094, %v1091
    %v1122 = vpack.c.b16 %v1095, %v1092
    %v1123 = vpack.c.b16 %v1099, %v1096
    %v1124 = vpack.c.b16 %v1100, %v1097
    %v1125 = vpack.c.b16 %v1101, %v1098
    %1150 = vmatpush.bf16.msra.mxu0 %v1123
    %1151 = vmatpush.bf16.msra.mxu0 %v1120
    %1152 = vmatpush.bf16.msra.mxu0 %v1117
    %1153 = vmatpush.bf16.msra.mxu0 %v1114
    %1154 = vmatpush.bf16.msra.mxu0 %v1111
    %1155 = vmatpush.bf16.msra.mxu0 %v1108
    %1156 = vmatpush.bf16.msra.mxu0 %v1105
    %1157 = vmatpush.bf16.msra.mxu0 %v1102
    %1158 = vmatmul.bf16.gmra.mxu0 %v989
    %v1159 = vpop.f32.mrf.mxu0
    %v1160 = vadd.f32 %v469, %v1159
    %v1161 = vpop.f32.mrf.mxu0
    %1162 = vdwg.mxu0
    %1163 = vmatpush.bf16.msra.mxu0 %v1124
    %1164 = vmatpush.bf16.msra.mxu0 %v1121
    %1165 = vmatpush.bf16.msra.mxu0 %v1118
    %1166 = vmatpush.bf16.msra.mxu0 %v1115
    %1167 = vmatpush.bf16.msra.mxu0 %v1112
    %1168 = vmatpush.bf16.msra.mxu0 %v1109
    %1169 = vmatpush.bf16.msra.mxu0 %v1106
    %1170 = vmatpush.bf16.msra.mxu0 %v1103
    %1171 = vmatmul.bf16.gmra.mxu0 %v989
    %v1172 = vpop.f32.mrf.mxu0
    %v1173 = vadd.f32 %v470, %v1172
    %v1174 = vpop.f32.mrf.mxu0
    %1175 = vdwg.mxu0
    %1176 = vmatpush.bf16.msra.mxu0 %v1125
    %1177 = vmatpush.bf16.msra.mxu0 %v1122
    %1178 = vmatpush.bf16.msra.mxu0 %v1119
    %1179 = vmatpush.bf16.msra.mxu0 %v1116
    %1180 = vmatpush.bf16.msra.mxu0 %v1113
    %1181 = vmatpush.bf16.msra.mxu0 %v1110
    %1182 = vmatpush.bf16.msra.mxu0 %v1107
    %1183 = vmatpush.bf16.msra.mxu0 %v1104
    %1184 = vmatmul.bf16.gmra.mxu0 %v989
    %v1185 = vpop.f32.mrf.mxu0
    %v1186 = vadd.f32 %v471, %v1185
    %v1187 = vpop.f32.mrf.mxu0
    %1188 = vdwg.mxu0
    %v1189 = vadd.f32 %v986, %v1160
    %v1190 = vxor.u32 %v1189, 2147483648
    %v1191 = vmul.f32 %v1190, 1.442695
    %v1192 = vpow.pop %v1191
    %v1193 = vadd.f32 %v1192, 1.0
    %v1194 = vrcp.pop %v1193
    %v1195 = vmul.f32 %v1193, %v1194
    %v1196 = vsub.f32 1.0, %v1195
    %v1197 = vmul.f32 %v1194, %v1196
    %v1198 = vadd.f32 %v1194, %v1197
    %vm1199 = vweird.f32 %v1193
    %vm1200 = vweird.f32 %v1194
    %vm1201 = vmor %vm1199, %vm1200
    %v1202 = vsel %vm1201, %v1194, %v1198
    %v1203 = vand.u32 2147483647, %v1193
    %vm1204 = vcmp.eq.f32.partialorder %v1203, 8.507059e+37
    %v1205 = vand.u32 %v1193, 2147483648
    %v1206 = vor.u32 1.1754944e-38, %v1205
    %v1207 = vsel %vm1204, %v1206, %v1202
    %v1208 = vmul.f32 1.0, %v1207
    %v1209 = vadd.f32 %v987, %v1173
    %v1210 = vxor.u32 %v1209, 2147483648
    %v1211 = vmul.f32 %v1210, 1.442695
    %v1212 = vpow.pop %v1211
    %v1213 = vadd.f32 %v1212, 1.0
    %v1214 = vrcp.pop %v1213
    %v1215 = vmul.f32 %v1213, %v1214
    %v1216 = vsub.f32 1.0, %v1215
    %v1217 = vmul.f32 %v1214, %v1216
    %v1218 = vadd.f32 %v1214, %v1217
    %vm1219 = vweird.f32 %v1213
    %vm1220 = vweird.f32 %v1214
    %vm1221 = vmor %vm1219, %vm1220
    %v1222 = vsel %vm1221, %v1214, %v1218
    %v1223 = vand.u32 2147483647, %v1213
    %vm1224 = vcmp.eq.f32.partialorder %v1223, 8.507059e+37
    %v1225 = vand.u32 %v1213, 2147483648
    %v1226 = vor.u32 1.1754944e-38, %v1225
    %v1227 = vsel %vm1224, %v1226, %v1222
    %v1228 = vmul.f32 1.0, %v1227
    %v1229 = vmul.f32 %v1208, %v1186
    %v1230 = vadd.f32 %v988, %v1229
    %v1231 = vtanh.pop %v1230
    %v1232 = vsub.f32 1.0, %v1228
    %v1233 = vmul.f32 %v1232, %v1231
    %v1234 = vmul.f32 %v1228, %v980
    %v1235 = vadd.f32 %v1233, %v1234
    %s1236 = scalar_lea.vmem [#allocation3], 16
    %1237 = vst [vmem:[%s1236] sm:$0xff] %v1235
    %s1238 = smul.u32 3, 3
    %s1239 = smul.addr %s1238, 8
    %s1240 = scalar_lea.vmem [#allocation2], %s1239
    %v1241 = vld [vmem:[%s1240] sm:$0xff]
    %v1242 = vld [vmem:[%s1240 + $0x8] sm:$0xff]
    %v1243 = vld [vmem:[%s1240 + $0x10] sm:$0xff]
    %v1244 = vpack.c.bf16 %v1235, %v1235
    %v1245 = vld [vmem:[#allocation11] sm:$0xff]
    %v1246 = vld [vmem:[#allocation11 + $0x8] sm:$0xf]
    %v1247 = vld [vmem:[#allocation11 + $0xc] sm:$0xff]
    %v1248 = vld [vmem:[#allocation11 + $0x14] sm:$0xf]
    %v1249 = vld [vmem:[#allocation11 + $0x18] sm:$0xff]
    %v1250 = vld [vmem:[#allocation11 + $0x20] sm:$0xf]
    %v1251 = vld [vmem:[#allocation11 + $0x24] sm:$0xff]
    %v1252 = vld [vmem:[#allocation11 + $0x2c] sm:$0xf]
    %v1253 = vld [vmem:[#allocation11 + $0x30] sm:$0xff]
    %v1254 = vld [vmem:[#allocation11 + $0x38] sm:$0xf]
    %v1255 = vld [vmem:[#allocation11 + $0x3c] sm:$0xff]
    %v1256 = vld [vmem:[#allocation11 + $0x44] sm:$0xf]
    %v1257 = vld [vmem:[#allocation11 + $0x48] sm:$0xff]
    %v1258 = vld [vmem:[#allocation11 + $0x50] sm:$0xf]
    %v1259 = vld [vmem:[#allocation11 + $0x54] sm:$0xff]
    %v1260 = vld [vmem:[#allocation11 + $0x5c] sm:$0xf]
    %v1261 = vld [vmem:[#allocation11 + $0x60] sm:$0xff]
    %v1262 = vld [vmem:[#allocation11 + $0x68] sm:$0xf]
    %v1263 = vld [vmem:[#allocation11 + $0x6c] sm:$0xff]
    %v1264 = vld [vmem:[#allocation11 + $0x74] sm:$0xf]
    %v1265 = vld [vmem:[#allocation11 + $0x78] sm:$0xff]
    %v1266 = vld [vmem:[#allocation11 + $0x80] sm:$0xf]
    %v1267 = vld [vmem:[#allocation11 + $0x84] sm:$0xff]
    %v1268 = vld [vmem:[#allocation11 + $0x8c] sm:$0xf]
    %v1269 = vld [vmem:[#allocation11 + $0x90] sm:$0xff]
    %v1270 = vld [vmem:[#allocation11 + $0x98] sm:$0xf]
    %v1271 = vld [vmem:[#allocation11 + $0x9c] sm:$0xff]
    %v1272 = vld [vmem:[#allocation11 + $0xa4] sm:$0xf]
    %v1273 = vld [vmem:[#allocation11 + $0xa8] sm:$0xff]
    %v1274 = vld [vmem:[#allocation11 + $0xb0] sm:$0xf]
    %v1275 = vld [vmem:[#allocation11 + $0xb4] sm:$0xff]
    %v1276 = vld [vmem:[#allocation11 + $0xbc] sm:$0xf]
    %v1309 = vunpack.c.l.b16 %v1245
    %v1310 = vunpack.c.h.b16 %v1245
    %v1311 = vunpack.c.l.b16 %v1246
    %v1312 = vunpack.c.l.b16 %v1247
    %v1313 = vunpack.c.h.b16 %v1247
    %v1314 = vunpack.c.l.b16 %v1248
    %v1315 = vunpack.c.l.b16 %v1249
    %v1316 = vunpack.c.h.b16 %v1249
    %v1317 = vunpack.c.l.b16 %v1250
    %v1318 = vunpack.c.l.b16 %v1251
    %v1319 = vunpack.c.h.b16 %v1251
    %v1320 = vunpack.c.l.b16 %v1252
    %v1321 = vunpack.c.l.b16 %v1253
    %v1322 = vunpack.c.h.b16 %v1253
    %v1323 = vunpack.c.l.b16 %v1254
    %v1324 = vunpack.c.l.b16 %v1255
    %v1325 = vunpack.c.h.b16 %v1255
    %v1326 = vunpack.c.l.b16 %v1256
    %v1327 = vunpack.c.l.b16 %v1257
    %v1328 = vunpack.c.h.b16 %v1257
    %v1329 = vunpack.c.l.b16 %v1258
    %v1330 = vunpack.c.l.b16 %v1259
    %v1331 = vunpack.c.h.b16 %v1259
    %v1332 = vunpack.c.l.b16 %v1260
    %v1333 = vunpack.c.l.b16 %v1261
    %v1334 = vunpack.c.h.b16 %v1261
    %v1335 = vunpack.c.l.b16 %v1262
    %v1336 = vunpack.c.l.b16 %v1263
    %v1337 = vunpack.c.h.b16 %v1263
    %v1338 = vunpack.c.l.b16 %v1264
    %v1339 = vunpack.c.l.b16 %v1265
    %v1340 = vunpack.c.h.b16 %v1265
    %v1341 = vunpack.c.l.b16 %v1266
    %v1342 = vunpack.c.l.b16 %v1267
    %v1343 = vunpack.c.h.b16 %v1267
    %v1344 = vunpack.c.l.b16 %v1268
    %v1345 = vunpack.c.l.b16 %v1269
    %v1346 = vunpack.c.h.b16 %v1269
    %v1347 = vunpack.c.l.b16 %v1270
    %v1348 = vunpack.c.l.b16 %v1271
    %v1349 = vunpack.c.h.b16 %v1271
    %v1350 = vunpack.c.l.b16 %v1272
    %v1351 = vunpack.c.l.b16 %v1273
    %v1352 = vunpack.c.h.b16 %v1273
    %v1353 = vunpack.c.l.b16 %v1274
    %v1354 = vunpack.c.l.b16 %v1275
    %v1355 = vunpack.c.h.b16 %v1275
    %v1356 = vunpack.c.l.b16 %v1276
    %v1357 = vpack.c.b16 %v1312, %v1309
    %v1358 = vpack.c.b16 %v1313, %v1310
    %v1359 = vpack.c.b16 %v1314, %v1311
    %v1360 = vpack.c.b16 %v1318, %v1315
    %v1361 = vpack.c.b16 %v1319, %v1316
    %v1362 = vpack.c.b16 %v1320, %v1317
    %v1363 = vpack.c.b16 %v1324, %v1321
    %v1364 = vpack.c.b16 %v1325, %v1322
    %v1365 = vpack.c.b16 %v1326, %v1323
    %v1366 = vpack.c.b16 %v1330, %v1327
    %v1367 = vpack.c.b16 %v1331, %v1328
    %v1368 = vpack.c.b16 %v1332, %v1329
    %v1369 = vpack.c.b16 %v1336, %v1333
    %v1370 = vpack.c.b16 %v1337, %v1334
    %v1371 = vpack.c.b16 %v1338, %v1335
    %v1372 = vpack.c.b16 %v1342, %v1339
    %v1373 = vpack.c.b16 %v1343, %v1340
    %v1374 = vpack.c.b16 %v1344, %v1341
    %v1375 = vpack.c.b16 %v1348, %v1345
    %v1376 = vpack.c.b16 %v1349, %v1346
    %v1377 = vpack.c.b16 %v1350, %v1347
    %v1378 = vpack.c.b16 %v1354, %v1351
    %v1379 = vpack.c.b16 %v1355, %v1352
    %v1380 = vpack.c.b16 %v1356, %v1353
    %1405 = vmatpush.bf16.msra.mxu0 %v1378
    %1406 = vmatpush.bf16.msra.mxu0 %v1375
    %1407 = vmatpush.bf16.msra.mxu0 %v1372
    %1408 = vmatpush.bf16.msra.mxu0 %v1369
    %1409 = vmatpush.bf16.msra.mxu0 %v1366
    %1410 = vmatpush.bf16.msra.mxu0 %v1363
    %1411 = vmatpush.bf16.msra.mxu0 %v1360
    %1412 = vmatpush.bf16.msra.mxu0 %v1357
    %1413 = vmatmul.bf16.gmra.mxu0 %v1244
    %v1414 = vpop.f32.mrf.mxu0
    %v1415 = vadd.f32 %v469, %v1414
    %v1416 = vpop.f32.mrf.mxu0
    %1417 = vdwg.mxu0
    %1418 = vmatpush.bf16.msra.mxu0 %v1379
    %1419 = vmatpush.bf16.msra.mxu0 %v1376
    %1420 = vmatpush.bf16.msra.mxu0 %v1373
    %1421 = vmatpush.bf16.msra.mxu0 %v1370
    %1422 = vmatpush.bf16.msra.mxu0 %v1367
    %1423 = vmatpush.bf16.msra.mxu0 %v1364
    %1424 = vmatpush.bf16.msra.mxu0 %v1361
    %1425 = vmatpush.bf16.msra.mxu0 %v1358
    %1426 = vmatmul.bf16.gmra.mxu0 %v1244
    %v1427 = vpop.f32.mrf.mxu0
    %v1428 = vadd.f32 %v470, %v1427
    %v1429 = vpop.f32.mrf.mxu0
    %1430 = vdwg.mxu0
    %1431 = vmatpush.bf16.msra.mxu0 %v1380
    %1432 = vmatpush.bf16.msra.mxu0 %v1377
    %1433 = vmatpush.bf16.msra.mxu0 %v1374
    %1434 = vmatpush.bf16.msra.mxu0 %v1371
    %1435 = vmatpush.bf16.msra.mxu0 %v1368
    %1436 = vmatpush.bf16.msra.mxu0 %v1365
    %1437 = vmatpush.bf16.msra.mxu0 %v1362
    %1438 = vmatpush.bf16.msra.mxu0 %v1359
    %1439 = vmatmul.bf16.gmra.mxu0 %v1244
    %v1440 = vpop.f32.mrf.mxu0
    %v1441 = vadd.f32 %v471, %v1440
    %v1442 = vpop.f32.mrf.mxu0
    %1443 = vdwg.mxu0
    %v1444 = vadd.f32 %v1241, %v1415
    %v1445 = vxor.u32 %v1444, 2147483648
    %v1446 = vmul.f32 %v1445, 1.442695
    %v1447 = vpow.pop %v1446
    %v1448 = vadd.f32 %v1447, 1.0
    %v1449 = vrcp.pop %v1448
    %v1450 = vmul.f32 %v1448, %v1449
    %v1451 = vsub.f32 1.0, %v1450
    %v1452 = vmul.f32 %v1449, %v1451
    %v1453 = vadd.f32 %v1449, %v1452
    %vm1454 = vweird.f32 %v1448
    %vm1455 = vweird.f32 %v1449
    %vm1456 = vmor %vm1454, %vm1455
    %v1457 = vsel %vm1456, %v1449, %v1453
    %v1458 = vand.u32 2147483647, %v1448
    %vm1459 = vcmp.eq.f32.partialorder %v1458, 8.507059e+37
    %v1460 = vand.u32 %v1448, 2147483648
    %v1461 = vor.u32 1.1754944e-38, %v1460
    %v1462 = vsel %vm1459, %v1461, %v1457
    %v1463 = vmul.f32 1.0, %v1462
    %v1464 = vadd.f32 %v1242, %v1428
    %v1465 = vxor.u32 %v1464, 2147483648
    %v1466 = vmul.f32 %v1465, 1.442695
    %v1467 = vpow.pop %v1466
    %v1468 = vadd.f32 %v1467, 1.0
    %v1469 = vrcp.pop %v1468
    %v1470 = vmul.f32 %v1468, %v1469
    %v1471 = vsub.f32 1.0, %v1470
    %v1472 = vmul.f32 %v1469, %v1471
    %v1473 = vadd.f32 %v1469, %v1472
    %vm1474 = vweird.f32 %v1468
    %vm1475 = vweird.f32 %v1469
    %vm1476 = vmor %vm1474, %vm1475
    %v1477 = vsel %vm1476, %v1469, %v1473
    %v1478 = vand.u32 2147483647, %v1468
    %vm1479 = vcmp.eq.f32.partialorder %v1478, 8.507059e+37
    %v1480 = vand.u32 %v1468, 2147483648
    %v1481 = vor.u32 1.1754944e-38, %v1480
    %v1482 = vsel %vm1479, %v1481, %v1477
    %v1483 = vmul.f32 1.0, %v1482
    %v1484 = vmul.f32 %v1463, %v1441
    %v1485 = vadd.f32 %v1243, %v1484
    %v1486 = vtanh.pop %v1485
    %v1487 = vsub.f32 1.0, %v1483
    %v1488 = vmul.f32 %v1487, %v1486
    %v1489 = vmul.f32 %v1483, %v1235
    %v1490 = vadd.f32 %v1488, %v1489
    %s1491 = scalar_lea.vmem [#allocation3], 24
    %1492 = vst [vmem:[%s1491] sm:$0xff] %v1490
    %s1493 = smul.u32 4, 3
    %s1494 = smul.addr %s1493, 8
    %s1495 = scalar_lea.vmem [#allocation2], %s1494
    %v1496 = vld [vmem:[%s1495] sm:$0xff]
    %v1497 = vld [vmem:[%s1495 + $0x8] sm:$0xff]
    %v1498 = vld [vmem:[%s1495 + $0x10] sm:$0xff]
    %v1499 = vpack.c.bf16 %v1490, %v1490
    %v1500 = vld [vmem:[#allocation11] sm:$0xff]
    %v1501 = vld [vmem:[#allocation11 + $0x8] sm:$0xf]
    %v1502 = vld [vmem:[#allocation11 + $0xc] sm:$0xff]
    %v1503 = vld [vmem:[#allocation11 + $0x14] sm:$0xf]
    %v1504 = vld [vmem:[#allocation11 + $0x18] sm:$0xff]
    %v1505 = vld [vmem:[#allocation11 + $0x20] sm:$0xf]
    %v1506 = vld [vmem:[#allocation11 + $0x24] sm:$0xff]
    %v1507 = vld [vmem:[#allocation11 + $0x2c] sm:$0xf]
    %v1508 = vld [vmem:[#allocation11 + $0x30] sm:$0xff]
    %v1509 = vld [vmem:[#allocation11 + $0x38] sm:$0xf]
    %v1510 = vld [vmem:[#allocation11 + $0x3c] sm:$0xff]
    %v1511 = vld [vmem:[#allocation11 + $0x44] sm:$0xf]
    %v1512 = vld [vmem:[#allocation11 + $0x48] sm:$0xff]
    %v1513 = vld [vmem:[#allocation11 + $0x50] sm:$0xf]
    %v1514 = vld [vmem:[#allocation11 + $0x54] sm:$0xff]
    %v1515 = vld [vmem:[#allocation11 + $0x5c] sm:$0xf]
    %v1516 = vld [vmem:[#allocation11 + $0x60] sm:$0xff]
    %v1517 = vld [vmem:[#allocation11 + $0x68] sm:$0xf]
    %v1518 = vld [vmem:[#allocation11 + $0x6c] sm:$0xff]
    %v1519 = vld [vmem:[#allocation11 + $0x74] sm:$0xf]
    %v1520 = vld [vmem:[#allocation11 + $0x78] sm:$0xff]
    %v1521 = vld [vmem:[#allocation11 + $0x80] sm:$0xf]
    %v1522 = vld [vmem:[#allocation11 + $0x84] sm:$0xff]
    %v1523 = vld [vmem:[#allocation11 + $0x8c] sm:$0xf]
    %v1524 = vld [vmem:[#allocation11 + $0x90] sm:$0xff]
    %v1525 = vld [vmem:[#allocation11 + $0x98] sm:$0xf]
    %v1526 = vld [vmem:[#allocation11 + $0x9c] sm:$0xff]
    %v1527 = vld [vmem:[#allocation11 + $0xa4] sm:$0xf]
    %v1528 = vld [vmem:[#allocation11 + $0xa8] sm:$0xff]
    %v1529 = vld [vmem:[#allocation11 + $0xb0] sm:$0xf]
    %v1530 = vld [vmem:[#allocation11 + $0xb4] sm:$0xff]
    %v1531 = vld [vmem:[#allocation11 + $0xbc] sm:$0xf]
    %v1564 = vunpack.c.l.b16 %v1500
    %v1565 = vunpack.c.h.b16 %v1500
    %v1566 = vunpack.c.l.b16 %v1501
    %v1567 = vunpack.c.l.b16 %v1502
    %v1568 = vunpack.c.h.b16 %v1502
    %v1569 = vunpack.c.l.b16 %v1503
    %v1570 = vunpack.c.l.b16 %v1504
    %v1571 = vunpack.c.h.b16 %v1504
    %v1572 = vunpack.c.l.b16 %v1505
    %v1573 = vunpack.c.l.b16 %v1506
    %v1574 = vunpack.c.h.b16 %v1506
    %v1575 = vunpack.c.l.b16 %v1507
    %v1576 = vunpack.c.l.b16 %v1508
    %v1577 = vunpack.c.h.b16 %v1508
    %v1578 = vunpack.c.l.b16 %v1509
    %v1579 = vunpack.c.l.b16 %v1510
    %v1580 = vunpack.c.h.b16 %v1510
    %v1581 = vunpack.c.l.b16 %v1511
    %v1582 = vunpack.c.l.b16 %v1512
    %v1583 = vunpack.c.h.b16 %v1512
    %v1584 = vunpack.c.l.b16 %v1513
    %v1585 = vunpack.c.l.b16 %v1514
    %v1586 = vunpack.c.h.b16 %v1514
    %v1587 = vunpack.c.l.b16 %v1515
    %v1588 = vunpack.c.l.b16 %v1516
    %v1589 = vunpack.c.h.b16 %v1516
    %v1590 = vunpack.c.l.b16 %v1517
    %v1591 = vunpack.c.l.b16 %v1518
    %v1592 = vunpack.c.h.b16 %v1518
    %v1593 = vunpack.c.l.b16 %v1519
    %v1594 = vunpack.c.l.b16 %v1520
    %v1595 = vunpack.c.h.b16 %v1520
    %v1596 = vunpack.c.l.b16 %v1521
    %v1597 = vunpack.c.l.b16 %v1522
    %v1598 = vunpack.c.h.b16 %v1522
    %v1599 = vunpack.c.l.b16 %v1523
    %v1600 = vunpack.c.l.b16 %v1524
    %v1601 = vunpack.c.h.b16 %v1524
    %v1602 = vunpack.c.l.b16 %v1525
    %v1603 = vunpack.c.l.b16 %v1526
    %v1604 = vunpack.c.h.b16 %v1526
    %v1605 = vunpack.c.l.b16 %v1527
    %v1606 = vunpack.c.l.b16 %v1528
    %v1607 = vunpack.c.h.b16 %v1528
    %v1608 = vunpack.c.l.b16 %v1529
    %v1609 = vunpack.c.l.b16 %v1530
    %v1610 = vunpack.c.h.b16 %v1530
    %v1611 = vunpack.c.l.b16 %v1531
    %v1612 = vpack.c.b16 %v1567, %v1564
    %v1613 = vpack.c.b16 %v1568, %v1565
    %v1614 = vpack.c.b16 %v1569, %v1566
    %v1615 = vpack.c.b16 %v1573, %v1570
    %v1616 = vpack.c.b16 %v1574, %v1571
    %v1617 = vpack.c.b16 %v1575, %v1572
    %v1618 = vpack.c.b16 %v1579, %v1576
    %v1619 = vpack.c.b16 %v1580, %v1577
    %v1620 = vpack.c.b16 %v1581, %v1578
    %v1621 = vpack.c.b16 %v1585, %v1582
    %v1622 = vpack.c.b16 %v1586, %v1583
    %v1623 = vpack.c.b16 %v1587, %v1584
    %v1624 = vpack.c.b16 %v1591, %v1588
    %v1625 = vpack.c.b16 %v1592, %v1589
    %v1626 = vpack.c.b16 %v1593, %v1590
    %v1627 = vpack.c.b16 %v1597, %v1594
    %v1628 = vpack.c.b16 %v1598, %v1595
    %v1629 = vpack.c.b16 %v1599, %v1596
    %v1630 = vpack.c.b16 %v1603, %v1600
    %v1631 = vpack.c.b16 %v1604, %v1601
    %v1632 = vpack.c.b16 %v1605, %v1602
    %v1633 = vpack.c.b16 %v1609, %v1606
    %v1634 = vpack.c.b16 %v1610, %v1607
    %v1635 = vpack.c.b16 %v1611, %v1608
    %1660 = vmatpush.bf16.msra.mxu0 %v1633
    %1661 = vmatpush.bf16.msra.mxu0 %v1630
    %1662 = vmatpush.bf16.msra.mxu0 %v1627
    %1663 = vmatpush.bf16.msra.mxu0 %v1624
    %1664 = vmatpush.bf16.msra.mxu0 %v1621
    %1665 = vmatpush.bf16.msra.mxu0 %v1618
    %1666 = vmatpush.bf16.msra.mxu0 %v1615
    %1667 = vmatpush.bf16.msra.mxu0 %v1612
    %1668 = vmatmul.bf16.gmra.mxu0 %v1499
    %v1669 = vpop.f32.mrf.mxu0
    %v1670 = vadd.f32 %v469, %v1669
    %v1671 = vpop.f32.mrf.mxu0
    %1672 = vdwg.mxu0
    %1673 = vmatpush.bf16.msra.mxu0 %v1634
    %1674 = vmatpush.bf16.msra.mxu0 %v1631
    %1675 = vmatpush.bf16.msra.mxu0 %v1628
    %1676 = vmatpush.bf16.msra.mxu0 %v1625
    %1677 = vmatpush.bf16.msra.mxu0 %v1622
    %1678 = vmatpush.bf16.msra.mxu0 %v1619
    %1679 = vmatpush.bf16.msra.mxu0 %v1616
    %1680 = vmatpush.bf16.msra.mxu0 %v1613
    %1681 = vmatmul.bf16.gmra.mxu0 %v1499
    %v1682 = vpop.f32.mrf.mxu0
    %v1683 = vadd.f32 %v470, %v1682
    %v1684 = vpop.f32.mrf.mxu0
    %1685 = vdwg.mxu0
    %1686 = vmatpush.bf16.msra.mxu0 %v1635
    %1687 = vmatpush.bf16.msra.mxu0 %v1632
    %1688 = vmatpush.bf16.msra.mxu0 %v1629
    %1689 = vmatpush.bf16.msra.mxu0 %v1626
    %1690 = vmatpush.bf16.msra.mxu0 %v1623
    %1691 = vmatpush.bf16.msra.mxu0 %v1620
    %1692 = vmatpush.bf16.msra.mxu0 %v1617
    %1693 = vmatpush.bf16.msra.mxu0 %v1614
    %1694 = vmatmul.bf16.gmra.mxu0 %v1499
    %v1695 = vpop.f32.mrf.mxu0
    %v1696 = vadd.f32 %v471, %v1695
    %v1697 = vpop.f32.mrf.mxu0
    %1698 = vdwg.mxu0
    %v1699 = vadd.f32 %v1496, %v1670
    %v1700 = vxor.u32 %v1699, 2147483648
    %v1701 = vmul.f32 %v1700, 1.442695
    %v1702 = vpow.pop %v1701
    %v1703 = vadd.f32 %v1702, 1.0
    %v1704 = vrcp.pop %v1703
    %v1705 = vmul.f32 %v1703, %v1704
    %v1706 = vsub.f32 1.0, %v1705
    %v1707 = vmul.f32 %v1704, %v1706
    %v1708 = vadd.f32 %v1704, %v1707
    %vm1709 = vweird.f32 %v1703
    %vm1710 = vweird.f32 %v1704
    %vm1711 = vmor %vm1709, %vm1710
    %v1712 = vsel %vm1711, %v1704, %v1708
    %v1713 = vand.u32 2147483647, %v1703
    %vm1714 = vcmp.eq.f32.partialorder %v1713, 8.507059e+37
    %v1715 = vand.u32 %v1703, 2147483648
    %v1716 = vor.u32 1.1754944e-38, %v1715
    %v1717 = vsel %vm1714, %v1716, %v1712
    %v1718 = vmul.f32 1.0, %v1717
    %v1719 = vadd.f32 %v1497, %v1683
    %v1720 = vxor.u32 %v1719, 2147483648
    %v1721 = vmul.f32 %v1720, 1.442695
    %v1722 = vpow.pop %v1721
    %v1723 = vadd.f32 %v1722, 1.0
    %v1724 = vrcp.pop %v1723
    %v1725 = vmul.f32 %v1723, %v1724
    %v1726 = vsub.f32 1.0, %v1725
    %v1727 = vmul.f32 %v1724, %v1726
    %v1728 = vadd.f32 %v1724, %v1727
    %vm1729 = vweird.f32 %v1723
    %vm1730 = vweird.f32 %v1724
    %vm1731 = vmor %vm1729, %vm1730
    %v1732 = vsel %vm1731, %v1724, %v1728
    %v1733 = vand.u32 2147483647, %v1723
    %vm1734 = vcmp.eq.f32.partialorder %v1733, 8.507059e+37
    %v1735 = vand.u32 %v1723, 2147483648
    %v1736 = vor.u32 1.1754944e-38, %v1735
    %v1737 = vsel %vm1734, %v1736, %v1732
    %v1738 = vmul.f32 1.0, %v1737
    %v1739 = vmul.f32 %v1718, %v1696
    %v1740 = vadd.f32 %v1498, %v1739
    %v1741 = vtanh.pop %v1740
    %v1742 = vsub.f32 1.0, %v1738
    %v1743 = vmul.f32 %v1742, %v1741
    %v1744 = vmul.f32 %v1738, %v1490
    %v1745 = vadd.f32 %v1743, %v1744
    %s1746 = scalar_lea.vmem [#allocation3], 32
    %1747 = vst [vmem:[%s1746] sm:$0xff] %v1745
    %s1748 = smul.u32 5, 3
    %s1749 = smul.addr %s1748, 8
    %s1750 = scalar_lea.vmem [#allocation2], %s1749
    %v1751 = vld [vmem:[%s1750] sm:$0xff]
    %v1752 = vld [vmem:[%s1750 + $0x8] sm:$0xff]
    %v1753 = vld [vmem:[%s1750 + $0x10] sm:$0xff]
    %v1754 = vpack.c.bf16 %v1745, %v1745
    %v1755 = vld [vmem:[#allocation11] sm:$0xff]
    %v1756 = vld [vmem:[#allocation11 + $0x8] sm:$0xf]
    %v1757 = vld [vmem:[#allocation11 + $0xc] sm:$0xff]
    %v1758 = vld [vmem:[#allocation11 + $0x14] sm:$0xf]
    %v1759 = vld [vmem:[#allocation11 + $0x18] sm:$0xff]
    %v1760 = vld [vmem:[#allocation11 + $0x20] sm:$0xf]
    %v1761 = vld [vmem:[#allocation11 + $0x24] sm:$0xff]
    %v1762 = vld [vmem:[#allocation11 + $0x2c] sm:$0xf]
    %v1763 = vld [vmem:[#allocation11 + $0x30] sm:$0xff]
    %v1764 = vld [vmem:[#allocation11 + $0x38] sm:$0xf]
    %v1765 = vld [vmem:[#allocation11 + $0x3c] sm:$0xff]
    %v1766 = vld [vmem:[#allocation11 + $0x44] sm:$0xf]
    %v1767 = vld [vmem:[#allocation11 + $0x48] sm:$0xff]
    %v1768 = vld [vmem:[#allocation11 + $0x50] sm:$0xf]
    %v1769 = vld [vmem:[#allocation11 + $0x54] sm:$0xff]
    %v1770 = vld [vmem:[#allocation11 + $0x5c] sm:$0xf]
    %v1771 = vld [vmem:[#allocation11 + $0x60] sm:$0xff]
    %v1772 = vld [vmem:[#allocation11 + $0x68] sm:$0xf]
    %v1773 = vld [vmem:[#allocation11 + $0x6c] sm:$0xff]
    %v1774 = vld [vmem:[#allocation11 + $0x74] sm:$0xf]
    %v1775 = vld [vmem:[#allocation11 + $0x78] sm:$0xff]
    %v1776 = vld [vmem:[#allocation11 + $0x80] sm:$0xf]
    %v1777 = vld [vmem:[#allocation11 + $0x84] sm:$0xff]
    %v1778 = vld [vmem:[#allocation11 + $0x8c] sm:$0xf]
    %v1779 = vld [vmem:[#allocation11 + $0x90] sm:$0xff]
    %v1780 = vld [vmem:[#allocation11 + $0x98] sm:$0xf]
    %v1781 = vld [vmem:[#allocation11 + $0x9c] sm:$0xff]
    %v1782 = vld [vmem:[#allocation11 + $0xa4] sm:$0xf]
    %v1783 = vld [vmem:[#allocation11 + $0xa8] sm:$0xff]
    %v1784 = vld [vmem:[#allocation11 + $0xb0] sm:$0xf]
    %v1785 = vld [vmem:[#allocation11 + $0xb4] sm:$0xff]
    %v1786 = vld [vmem:[#allocation11 + $0xbc] sm:$0xf]
    %v1819 = vunpack.c.l.b16 %v1755
    %v1820 = vunpack.c.h.b16 %v1755
    %v1821 = vunpack.c.l.b16 %v1756
    %v1822 = vunpack.c.l.b16 %v1757
    %v1823 = vunpack.c.h.b16 %v1757
    %v1824 = vunpack.c.l.b16 %v1758
    %v1825 = vunpack.c.l.b16 %v1759
    %v1826 = vunpack.c.h.b16 %v1759
    %v1827 = vunpack.c.l.b16 %v1760
    %v1828 = vunpack.c.l.b16 %v1761
    %v1829 = vunpack.c.h.b16 %v1761
    %v1830 = vunpack.c.l.b16 %v1762
    %v1831 = vunpack.c.l.b16 %v1763
    %v1832 = vunpack.c.h.b16 %v1763
    %v1833 = vunpack.c.l.b16 %v1764
    %v1834 = vunpack.c.l.b16 %v1765
    %v1835 = vunpack.c.h.b16 %v1765
    %v1836 = vunpack.c.l.b16 %v1766
    %v1837 = vunpack.c.l.b16 %v1767
    %v1838 = vunpack.c.h.b16 %v1767
    %v1839 = vunpack.c.l.b16 %v1768
    %v1840 = vunpack.c.l.b16 %v1769
    %v1841 = vunpack.c.h.b16 %v1769
    %v1842 = vunpack.c.l.b16 %v1770
    %v1843 = vunpack.c.l.b16 %v1771
    %v1844 = vunpack.c.h.b16 %v1771
    %v1845 = vunpack.c.l.b16 %v1772
    %v1846 = vunpack.c.l.b16 %v1773
    %v1847 = vunpack.c.h.b16 %v1773
    %v1848 = vunpack.c.l.b16 %v1774
    %v1849 = vunpack.c.l.b16 %v1775
    %v1850 = vunpack.c.h.b16 %v1775
    %v1851 = vunpack.c.l.b16 %v1776
    %v1852 = vunpack.c.l.b16 %v1777
    %v1853 = vunpack.c.h.b16 %v1777
    %v1854 = vunpack.c.l.b16 %v1778
    %v1855 = vunpack.c.l.b16 %v1779
    %v1856 = vunpack.c.h.b16 %v1779
    %v1857 = vunpack.c.l.b16 %v1780
    %v1858 = vunpack.c.l.b16 %v1781
    %v1859 = vunpack.c.h.b16 %v1781
    %v1860 = vunpack.c.l.b16 %v1782
    %v1861 = vunpack.c.l.b16 %v1783
    %v1862 = vunpack.c.h.b16 %v1783
    %v1863 = vunpack.c.l.b16 %v1784
    %v1864 = vunpack.c.l.b16 %v1785
    %v1865 = vunpack.c.h.b16 %v1785
    %v1866 = vunpack.c.l.b16 %v1786
    %v1867 = vpack.c.b16 %v1822, %v1819
    %v1868 = vpack.c.b16 %v1823, %v1820
    %v1869 = vpack.c.b16 %v1824, %v1821
    %v1870 = vpack.c.b16 %v1828, %v1825
    %v1871 = vpack.c.b16 %v1829, %v1826
    %v1872 = vpack.c.b16 %v1830, %v1827
    %v1873 = vpack.c.b16 %v1834, %v1831
    %v1874 = vpack.c.b16 %v1835, %v1832
    %v1875 = vpack.c.b16 %v1836, %v1833
    %v1876 = vpack.c.b16 %v1840, %v1837
    %v1877 = vpack.c.b16 %v1841, %v1838
    %v1878 = vpack.c.b16 %v1842, %v1839
    %v1879 = vpack.c.b16 %v1846, %v1843
    %v1880 = vpack.c.b16 %v1847, %v1844
    %v1881 = vpack.c.b16 %v1848, %v1845
    %v1882 = vpack.c.b16 %v1852, %v1849
    %v1883 = vpack.c.b16 %v1853, %v1850
    %v1884 = vpack.c.b16 %v1854, %v1851
    %v1885 = vpack.c.b16 %v1858, %v1855
    %v1886 = vpack.c.b16 %v1859, %v1856
    %v1887 = vpack.c.b16 %v1860, %v1857
    %v1888 = vpack.c.b16 %v1864, %v1861
    %v1889 = vpack.c.b16 %v1865, %v1862
    %v1890 = vpack.c.b16 %v1866, %v1863
    %1915 = vmatpush.bf16.msra.mxu0 %v1888
    %1916 = vmatpush.bf16.msra.mxu0 %v1885
    %1917 = vmatpush.bf16.msra.mxu0 %v1882
    %1918 = vmatpush.bf16.msra.mxu0 %v1879
    %1919 = vmatpush.bf16.msra.mxu0 %v1876
    %1920 = vmatpush.bf16.msra.mxu0 %v1873
    %1921 = vmatpush.bf16.msra.mxu0 %v1870
    %1922 = vmatpush.bf16.msra.mxu0 %v1867
    %1923 = vmatmul.bf16.gmra.mxu0 %v1754
    %v1924 = vpop.f32.mrf.mxu0
    %v1925 = vadd.f32 %v469, %v1924
    %v1926 = vpop.f32.mrf.mxu0
    %1927 = vdwg.mxu0
    %1928 = vmatpush.bf16.msra.mxu0 %v1889
    %1929 = vmatpush.bf16.msra.mxu0 %v1886
    %1930 = vmatpush.bf16.msra.mxu0 %v1883
    %1931 = vmatpush.bf16.msra.mxu0 %v1880
    %1932 = vmatpush.bf16.msra.mxu0 %v1877
    %1933 = vmatpush.bf16.msra.mxu0 %v1874
    %1934 = vmatpush.bf16.msra.mxu0 %v1871
    %1935 = vmatpush.bf16.msra.mxu0 %v1868
    %1936 = vmatmul.bf16.gmra.mxu0 %v1754
    %v1937 = vpop.f32.mrf.mxu0
    %v1938 = vadd.f32 %v470, %v1937
    %v1939 = vpop.f32.mrf.mxu0
    %1940 = vdwg.mxu0
    %1941 = vmatpush.bf16.msra.mxu0 %v1890
    %1942 = vmatpush.bf16.msra.mxu0 %v1887
    %1943 = vmatpush.bf16.msra.mxu0 %v1884
    %1944 = vmatpush.bf16.msra.mxu0 %v1881
    %1945 = vmatpush.bf16.msra.mxu0 %v1878
    %1946 = vmatpush.bf16.msra.mxu0 %v1875
    %1947 = vmatpush.bf16.msra.mxu0 %v1872
    %1948 = vmatpush.bf16.msra.mxu0 %v1869
    %1949 = vmatmul.bf16.gmra.mxu0 %v1754
    %v1950 = vpop.f32.mrf.mxu0
    %v1951 = vadd.f32 %v471, %v1950
    %v1952 = vpop.f32.mrf.mxu0
    %1953 = vdwg.mxu0
    %v1954 = vadd.f32 %v1751, %v1925
    %v1955 = vxor.u32 %v1954, 2147483648
    %v1956 = vmul.f32 %v1955, 1.442695
    %v1957 = vpow.pop %v1956
    %v1958 = vadd.f32 %v1957, 1.0
    %v1959 = vrcp.pop %v1958
    %v1960 = vmul.f32 %v1958, %v1959
    %v1961 = vsub.f32 1.0, %v1960
    %v1962 = vmul.f32 %v1959, %v1961
    %v1963 = vadd.f32 %v1959, %v1962
    %vm1964 = vweird.f32 %v1958
    %vm1965 = vweird.f32 %v1959
    %vm1966 = vmor %vm1964, %vm1965
    %v1967 = vsel %vm1966, %v1959, %v1963
    %v1968 = vand.u32 2147483647, %v1958
    %vm1969 = vcmp.eq.f32.partialorder %v1968, 8.507059e+37
    %v1970 = vand.u32 %v1958, 2147483648
    %v1971 = vor.u32 1.1754944e-38, %v1970
    %v1972 = vsel %vm1969, %v1971, %v1967
    %v1973 = vmul.f32 1.0, %v1972
    %v1974 = vadd.f32 %v1752, %v1938
    %v1975 = vxor.u32 %v1974, 2147483648
    %v1976 = vmul.f32 %v1975, 1.442695
    %v1977 = vpow.pop %v1976
    %v1978 = vadd.f32 %v1977, 1.0
    %v1979 = vrcp.pop %v1978
    %v1980 = vmul.f32 %v1978, %v1979
    %v1981 = vsub.f32 1.0, %v1980
    %v1982 = vmul.f32 %v1979, %v1981
    %v1983 = vadd.f32 %v1979, %v1982
    %vm1984 = vweird.f32 %v1978
    %vm1985 = vweird.f32 %v1979
    %vm1986 = vmor %vm1984, %vm1985
    %v1987 = vsel %vm1986, %v1979, %v1983
    %v1988 = vand.u32 2147483647, %v1978
    %vm1989 = vcmp.eq.f32.partialorder %v1988, 8.507059e+37
    %v1990 = vand.u32 %v1978, 2147483648
    %v1991 = vor.u32 1.1754944e-38, %v1990
    %v1992 = vsel %vm1989, %v1991, %v1987
    %v1993 = vmul.f32 1.0, %v1992
    %v1994 = vmul.f32 %v1973, %v1951
    %v1995 = vadd.f32 %v1753, %v1994
    %v1996 = vtanh.pop %v1995
    %v1997 = vsub.f32 1.0, %v1993
    %v1998 = vmul.f32 %v1997, %v1996
    %v1999 = vmul.f32 %v1993, %v1745
    %v2000 = vadd.f32 %v1998, %v1999
    %s2001 = scalar_lea.vmem [#allocation3], 40
    %2002 = vst [vmem:[%s2001] sm:$0xff] %v2000
    %s2003 = smul.u32 6, 3
    %s2004 = smul.addr %s2003, 8
    %s2005 = scalar_lea.vmem [#allocation2], %s2004
    %v2006 = vld [vmem:[%s2005] sm:$0xff]
    %v2007 = vld [vmem:[%s2005 + $0x8] sm:$0xff]
    %v2008 = vld [vmem:[%s2005 + $0x10] sm:$0xff]
    %v2009 = vpack.c.bf16 %v2000, %v2000
    %v2010 = vld [vmem:[#allocation11] sm:$0xff]
    %v2011 = vld [vmem:[#allocation11 + $0x8] sm:$0xf]
    %v2012 = vld [vmem:[#allocation11 + $0xc] sm:$0xff]
    %v2013 = vld [vmem:[#allocation11 + $0x14] sm:$0xf]
    %v2014 = vld [vmem:[#allocation11 + $0x18] sm:$0xff]
    %v2015 = vld [vmem:[#allocation11 + $0x20] sm:$0xf]
    %v2016 = vld [vmem:[#allocation11 + $0x24] sm:$0xff]
    %v2017 = vld [vmem:[#allocation11 + $0x2c] sm:$0xf]
    %v2018 = vld [vmem:[#allocation11 + $0x30] sm:$0xff]
    %v2019 = vld [vmem:[#allocation11 + $0x38] sm:$0xf]
    %v2020 = vld [vmem:[#allocation11 + $0x3c] sm:$0xff]
    %v2021 = vld [vmem:[#allocation11 + $0x44] sm:$0xf]
    %v2022 = vld [vmem:[#allocation11 + $0x48] sm:$0xff]
    %v2023 = vld [vmem:[#allocation11 + $0x50] sm:$0xf]
    %v2024 = vld [vmem:[#allocation11 + $0x54] sm:$0xff]
    %v2025 = vld [vmem:[#allocation11 + $0x5c] sm:$0xf]
    %v2026 = vld [vmem:[#allocation11 + $0x60] sm:$0xff]
    %v2027 = vld [vmem:[#allocation11 + $0x68] sm:$0xf]
    %v2028 = vld [vmem:[#allocation11 + $0x6c] sm:$0xff]
    %v2029 = vld [vmem:[#allocation11 + $0x74] sm:$0xf]
    %v2030 = vld [vmem:[#allocation11 + $0x78] sm:$0xff]
    %v2031 = vld [vmem:[#allocation11 + $0x80] sm:$0xf]
    %v2032 = vld [vmem:[#allocation11 + $0x84] sm:$0xff]
    %v2033 = vld [vmem:[#allocation11 + $0x8c] sm:$0xf]
    %v2034 = vld [vmem:[#allocation11 + $0x90] sm:$0xff]
    %v2035 = vld [vmem:[#allocation11 + $0x98] sm:$0xf]
    %v2036 = vld [vmem:[#allocation11 + $0x9c] sm:$0xff]
    %v2037 = vld [vmem:[#allocation11 + $0xa4] sm:$0xf]
    %v2038 = vld [vmem:[#allocation11 + $0xa8] sm:$0xff]
    %v2039 = vld [vmem:[#allocation11 + $0xb0] sm:$0xf]
    %v2040 = vld [vmem:[#allocation11 + $0xb4] sm:$0xff]
    %v2041 = vld [vmem:[#allocation11 + $0xbc] sm:$0xf]
    %v2074 = vunpack.c.l.b16 %v2010
    %v2075 = vunpack.c.h.b16 %v2010
    %v2076 = vunpack.c.l.b16 %v2011
    %v2077 = vunpack.c.l.b16 %v2012
    %v2078 = vunpack.c.h.b16 %v2012
    %v2079 = vunpack.c.l.b16 %v2013
    %v2080 = vunpack.c.l.b16 %v2014
    %v2081 = vunpack.c.h.b16 %v2014
    %v2082 = vunpack.c.l.b16 %v2015
    %v2083 = vunpack.c.l.b16 %v2016
    %v2084 = vunpack.c.h.b16 %v2016
    %v2085 = vunpack.c.l.b16 %v2017
    %v2086 = vunpack.c.l.b16 %v2018
    %v2087 = vunpack.c.h.b16 %v2018
    %v2088 = vunpack.c.l.b16 %v2019
    %v2089 = vunpack.c.l.b16 %v2020
    %v2090 = vunpack.c.h.b16 %v2020
    %v2091 = vunpack.c.l.b16 %v2021
    %v2092 = vunpack.c.l.b16 %v2022
    %v2093 = vunpack.c.h.b16 %v2022
    %v2094 = vunpack.c.l.b16 %v2023
    %v2095 = vunpack.c.l.b16 %v2024
    %v2096 = vunpack.c.h.b16 %v2024
    %v2097 = vunpack.c.l.b16 %v2025
    %v2098 = vunpack.c.l.b16 %v2026
    %v2099 = vunpack.c.h.b16 %v2026
    %v2100 = vunpack.c.l.b16 %v2027
    %v2101 = vunpack.c.l.b16 %v2028
    %v2102 = vunpack.c.h.b16 %v2028
    %v2103 = vunpack.c.l.b16 %v2029
    %v2104 = vunpack.c.l.b16 %v2030
    %v2105 = vunpack.c.h.b16 %v2030
    %v2106 = vunpack.c.l.b16 %v2031
    %v2107 = vunpack.c.l.b16 %v2032
    %v2108 = vunpack.c.h.b16 %v2032
    %v2109 = vunpack.c.l.b16 %v2033
    %v2110 = vunpack.c.l.b16 %v2034
    %v2111 = vunpack.c.h.b16 %v2034
    %v2112 = vunpack.c.l.b16 %v2035
    %v2113 = vunpack.c.l.b16 %v2036
    %v2114 = vunpack.c.h.b16 %v2036
    %v2115 = vunpack.c.l.b16 %v2037
    %v2116 = vunpack.c.l.b16 %v2038
    %v2117 = vunpack.c.h.b16 %v2038
    %v2118 = vunpack.c.l.b16 %v2039
    %v2119 = vunpack.c.l.b16 %v2040
    %v2120 = vunpack.c.h.b16 %v2040
    %v2121 = vunpack.c.l.b16 %v2041
    %v2122 = vpack.c.b16 %v2077, %v2074
    %v2123 = vpack.c.b16 %v2078, %v2075
    %v2124 = vpack.c.b16 %v2079, %v2076
    %v2125 = vpack.c.b16 %v2083, %v2080
    %v2126 = vpack.c.b16 %v2084, %v2081
    %v2127 = vpack.c.b16 %v2085, %v2082
    %v2128 = vpack.c.b16 %v2089, %v2086
    %v2129 = vpack.c.b16 %v2090, %v2087
    %v2130 = vpack.c.b16 %v2091, %v2088
    %v2131 = vpack.c.b16 %v2095, %v2092
    %v2132 = vpack.c.b16 %v2096, %v2093
    %v2133 = vpack.c.b16 %v2097, %v2094
    %v2134 = vpack.c.b16 %v2101, %v2098
    %v2135 = vpack.c.b16 %v2102, %v2099
    %v2136 = vpack.c.b16 %v2103, %v2100
    %v2137 = vpack.c.b16 %v2107, %v2104
    %v2138 = vpack.c.b16 %v2108, %v2105
    %v2139 = vpack.c.b16 %v2109, %v2106
    %v2140 = vpack.c.b16 %v2113, %v2110
    %v2141 = vpack.c.b16 %v2114, %v2111
    %v2142 = vpack.c.b16 %v2115, %v2112
    %v2143 = vpack.c.b16 %v2119, %v2116
    %v2144 = vpack.c.b16 %v2120, %v2117
    %v2145 = vpack.c.b16 %v2121, %v2118
    %2170 = vmatpush.bf16.msra.mxu0 %v2143
    %2171 = vmatpush.bf16.msra.mxu0 %v2140
    %2172 = vmatpush.bf16.msra.mxu0 %v2137
    %2173 = vmatpush.bf16.msra.mxu0 %v2134
    %2174 = vmatpush.bf16.msra.mxu0 %v2131
    %2175 = vmatpush.bf16.msra.mxu0 %v2128
    %2176 = vmatpush.bf16.msra.mxu0 %v2125
    %2177 = vmatpush.bf16.msra.mxu0 %v2122
    %2178 = vmatmul.bf16.gmra.mxu0 %v2009
    %v2179 = vpop.f32.mrf.mxu0
    %v2180 = vadd.f32 %v469, %v2179
    %v2181 = vpop.f32.mrf.mxu0
    %2182 = vdwg.mxu0
    %2183 = vmatpush.bf16.msra.mxu0 %v2144
    %2184 = vmatpush.bf16.msra.mxu0 %v2141
    %2185 = vmatpush.bf16.msra.mxu0 %v2138
    %2186 = vmatpush.bf16.msra.mxu0 %v2135
    %2187 = vmatpush.bf16.msra.mxu0 %v2132
    %2188 = vmatpush.bf16.msra.mxu0 %v2129
    %2189 = vmatpush.bf16.msra.mxu0 %v2126
    %2190 = vmatpush.bf16.msra.mxu0 %v2123
    %2191 = vmatmul.bf16.gmra.mxu0 %v2009
    %v2192 = vpop.f32.mrf.mxu0
    %v2193 = vadd.f32 %v470, %v2192
    %v2194 = vpop.f32.mrf.mxu0
    %2195 = vdwg.mxu0
    %2196 = vmatpush.bf16.msra.mxu0 %v2145
    %2197 = vmatpush.bf16.msra.mxu0 %v2142
    %2198 = vmatpush.bf16.msra.mxu0 %v2139
    %2199 = vmatpush.bf16.msra.mxu0 %v2136
    %2200 = vmatpush.bf16.msra.mxu0 %v2133
    %2201 = vmatpush.bf16.msra.mxu0 %v2130
    %2202 = vmatpush.bf16.msra.mxu0 %v2127
    %2203 = vmatpush.bf16.msra.mxu0 %v2124
    %2204 = vmatmul.bf16.gmra.mxu0 %v2009
    %v2205 = vpop.f32.mrf.mxu0
    %v2206 = vadd.f32 %v471, %v2205
    %v2207 = vpop.f32.mrf.mxu0
    %2208 = vdwg.mxu0
    %v2209 = vadd.f32 %v2006, %v2180
    %v2210 = vxor.u32 %v2209, 2147483648
    %v2211 = vmul.f32 %v2210, 1.442695
    %v2212 = vpow.pop %v2211
    %v2213 = vadd.f32 %v2212, 1.0
    %v2214 = vrcp.pop %v2213
    %v2215 = vmul.f32 %v2213, %v2214
    %v2216 = vsub.f32 1.0, %v2215
    %v2217 = vmul.f32 %v2214, %v2216
    %v2218 = vadd.f32 %v2214, %v2217
    %vm2219 = vweird.f32 %v2213
    %vm2220 = vweird.f32 %v2214
    %vm2221 = vmor %vm2219, %vm2220
    %v2222 = vsel %vm2221, %v2214, %v2218
    %v2223 = vand.u32 2147483647, %v2213
    %vm2224 = vcmp.eq.f32.partialorder %v2223, 8.507059e+37
    %v2225 = vand.u32 %v2213, 2147483648
    %v2226 = vor.u32 1.1754944e-38, %v2225
    %v2227 = vsel %vm2224, %v2226, %v2222
    %v2228 = vmul.f32 1.0, %v2227
    %v2229 = vadd.f32 %v2007, %v2193
    %v2230 = vxor.u32 %v2229, 2147483648
    %v2231 = vmul.f32 %v2230, 1.442695
    %v2232 = vpow.pop %v2231
    %v2233 = vadd.f32 %v2232, 1.0
    %v2234 = vrcp.pop %v2233
    %v2235 = vmul.f32 %v2233, %v2234
    %v2236 = vsub.f32 1.0, %v2235
    %v2237 = vmul.f32 %v2234, %v2236
    %v2238 = vadd.f32 %v2234, %v2237
    %vm2239 = vweird.f32 %v2233
    %vm2240 = vweird.f32 %v2234
    %vm2241 = vmor %vm2239, %vm2240
    %v2242 = vsel %vm2241, %v2234, %v2238
    %v2243 = vand.u32 2147483647, %v2233
    %vm2244 = vcmp.eq.f32.partialorder %v2243, 8.507059e+37
    %v2245 = vand.u32 %v2233, 2147483648
    %v2246 = vor.u32 1.1754944e-38, %v2245
    %v2247 = vsel %vm2244, %v2246, %v2242
    %v2248 = vmul.f32 1.0, %v2247
    %v2249 = vmul.f32 %v2228, %v2206
    %v2250 = vadd.f32 %v2008, %v2249
    %v2251 = vtanh.pop %v2250
    %v2252 = vsub.f32 1.0, %v2248
    %v2253 = vmul.f32 %v2252, %v2251
    %v2254 = vmul.f32 %v2248, %v2000
    %v2255 = vadd.f32 %v2253, %v2254
    %s2256 = scalar_lea.vmem [#allocation3], 48
    %2257 = vst [vmem:[%s2256] sm:$0xff] %v2255
    %s2258 = smul.u32 7, 3
    %s2259 = smul.addr %s2258, 8
    %s2260 = scalar_lea.vmem [#allocation2], %s2259
    %v2261 = vld [vmem:[%s2260] sm:$0xff]
    %v2262 = vld [vmem:[%s2260 + $0x8] sm:$0xff]
    %v2263 = vld [vmem:[%s2260 + $0x10] sm:$0xff]
    %v2264 = vpack.c.bf16 %v2255, %v2255
    %v2265 = vld [vmem:[#allocation11] sm:$0xff]
    %v2266 = vld [vmem:[#allocation11 + $0x8] sm:$0xf]
    %v2267 = vld [vmem:[#allocation11 + $0xc] sm:$0xff]
    %v2268 = vld [vmem:[#allocation11 + $0x14] sm:$0xf]
    %v2269 = vld [vmem:[#allocation11 + $0x18] sm:$0xff]
    %v2270 = vld [vmem:[#allocation11 + $0x20] sm:$0xf]
    %v2271 = vld [vmem:[#allocation11 + $0x24] sm:$0xff]
    %v2272 = vld [vmem:[#allocation11 + $0x2c] sm:$0xf]
    %v2273 = vld [vmem:[#allocation11 + $0x30] sm:$0xff]
    %v2274 = vld [vmem:[#allocation11 + $0x38] sm:$0xf]
    %v2275 = vld [vmem:[#allocation11 + $0x3c] sm:$0xff]
    %v2276 = vld [vmem:[#allocation11 + $0x44] sm:$0xf]
    %v2277 = vld [vmem:[#allocation11 + $0x48] sm:$0xff]
    %v2278 = vld [vmem:[#allocation11 + $0x50] sm:$0xf]
    %v2279 = vld [vmem:[#allocation11 + $0x54] sm:$0xff]
    %v2280 = vld [vmem:[#allocation11 + $0x5c] sm:$0xf]
    %v2281 = vld [vmem:[#allocation11 + $0x60] sm:$0xff]
    %v2282 = vld [vmem:[#allocation11 + $0x68] sm:$0xf]
    %v2283 = vld [vmem:[#allocation11 + $0x6c] sm:$0xff]
    %v2284 = vld [vmem:[#allocation11 + $0x74] sm:$0xf]
    %v2285 = vld [vmem:[#allocation11 + $0x78] sm:$0xff]
    %v2286 = vld [vmem:[#allocation11 + $0x80] sm:$0xf]
    %v2287 = vld [vmem:[#allocation11 + $0x84] sm:$0xff]
    %v2288 = vld [vmem:[#allocation11 + $0x8c] sm:$0xf]
    %v2289 = vld [vmem:[#allocation11 + $0x90] sm:$0xff]
    %v2290 = vld [vmem:[#allocation11 + $0x98] sm:$0xf]
    %v2291 = vld [vmem:[#allocation11 + $0x9c] sm:$0xff]
    %v2292 = vld [vmem:[#allocation11 + $0xa4] sm:$0xf]
    %v2293 = vld [vmem:[#allocation11 + $0xa8] sm:$0xff]
    %v2294 = vld [vmem:[#allocation11 + $0xb0] sm:$0xf]
    %v2295 = vld [vmem:[#allocation11 + $0xb4] sm:$0xff]
    %v2296 = vld [vmem:[#allocation11 + $0xbc] sm:$0xf]
    %v2329 = vunpack.c.l.b16 %v2265
    %v2330 = vunpack.c.h.b16 %v2265
    %v2331 = vunpack.c.l.b16 %v2266
    %v2332 = vunpack.c.l.b16 %v2267
    %v2333 = vunpack.c.h.b16 %v2267
    %v2334 = vunpack.c.l.b16 %v2268
    %v2335 = vunpack.c.l.b16 %v2269
    %v2336 = vunpack.c.h.b16 %v2269
    %v2337 = vunpack.c.l.b16 %v2270
    %v2338 = vunpack.c.l.b16 %v2271
    %v2339 = vunpack.c.h.b16 %v2271
    %v2340 = vunpack.c.l.b16 %v2272
    %v2341 = vunpack.c.l.b16 %v2273
    %v2342 = vunpack.c.h.b16 %v2273
    %v2343 = vunpack.c.l.b16 %v2274
    %v2344 = vunpack.c.l.b16 %v2275
    %v2345 = vunpack.c.h.b16 %v2275
    %v2346 = vunpack.c.l.b16 %v2276
    %v2347 = vunpack.c.l.b16 %v2277
    %v2348 = vunpack.c.h.b16 %v2277
    %v2349 = vunpack.c.l.b16 %v2278
    %v2350 = vunpack.c.l.b16 %v2279
    %v2351 = vunpack.c.h.b16 %v2279
    %v2352 = vunpack.c.l.b16 %v2280
    %v2353 = vunpack.c.l.b16 %v2281
    %v2354 = vunpack.c.h.b16 %v2281
    %v2355 = vunpack.c.l.b16 %v2282
    %v2356 = vunpack.c.l.b16 %v2283
    %v2357 = vunpack.c.h.b16 %v2283
    %v2358 = vunpack.c.l.b16 %v2284
    %v2359 = vunpack.c.l.b16 %v2285
    %v2360 = vunpack.c.h.b16 %v2285
    %v2361 = vunpack.c.l.b16 %v2286
    %v2362 = vunpack.c.l.b16 %v2287
    %v2363 = vunpack.c.h.b16 %v2287
    %v2364 = vunpack.c.l.b16 %v2288
    %v2365 = vunpack.c.l.b16 %v2289
    %v2366 = vunpack.c.h.b16 %v2289
    %v2367 = vunpack.c.l.b16 %v2290
    %v2368 = vunpack.c.l.b16 %v2291
    %v2369 = vunpack.c.h.b16 %v2291
    %v2370 = vunpack.c.l.b16 %v2292
    %v2371 = vunpack.c.l.b16 %v2293
    %v2372 = vunpack.c.h.b16 %v2293
    %v2373 = vunpack.c.l.b16 %v2294
    %v2374 = vunpack.c.l.b16 %v2295
    %v2375 = vunpack.c.h.b16 %v2295
    %v2376 = vunpack.c.l.b16 %v2296
    %v2377 = vpack.c.b16 %v2332, %v2329
    %v2378 = vpack.c.b16 %v2333, %v2330
    %v2379 = vpack.c.b16 %v2334, %v2331
    %v2380 = vpack.c.b16 %v2338, %v2335
    %v2381 = vpack.c.b16 %v2339, %v2336
    %v2382 = vpack.c.b16 %v2340, %v2337
    %v2383 = vpack.c.b16 %v2344, %v2341
    %v2384 = vpack.c.b16 %v2345, %v2342
    %v2385 = vpack.c.b16 %v2346, %v2343
    %v2386 = vpack.c.b16 %v2350, %v2347
    %v2387 = vpack.c.b16 %v2351, %v2348
    %v2388 = vpack.c.b16 %v2352, %v2349
    %v2389 = vpack.c.b16 %v2356, %v2353
    %v2390 = vpack.c.b16 %v2357, %v2354
    %v2391 = vpack.c.b16 %v2358, %v2355
    %v2392 = vpack.c.b16 %v2362, %v2359
    %v2393 = vpack.c.b16 %v2363, %v2360
    %v2394 = vpack.c.b16 %v2364, %v2361
    %v2395 = vpack.c.b16 %v2368, %v2365
    %v2396 = vpack.c.b16 %v2369, %v2366
    %v2397 = vpack.c.b16 %v2370, %v2367
    %v2398 = vpack.c.b16 %v2374, %v2371
    %v2399 = vpack.c.b16 %v2375, %v2372
    %v2400 = vpack.c.b16 %v2376, %v2373
    %2425 = vmatpush.bf16.msra.mxu0 %v2398
    %2426 = vmatpush.bf16.msra.mxu0 %v2395
    %2427 = vmatpush.bf16.msra.mxu0 %v2392
    %2428 = vmatpush.bf16.msra.mxu0 %v2389
    %2429 = vmatpush.bf16.msra.mxu0 %v2386
    %2430 = vmatpush.bf16.msra.mxu0 %v2383
    %2431 = vmatpush.bf16.msra.mxu0 %v2380
    %2432 = vmatpush.bf16.msra.mxu0 %v2377
    %2433 = vmatmul.bf16.gmra.mxu0 %v2264
    %v2434 = vpop.f32.mrf.mxu0
    %v2435 = vadd.f32 %v469, %v2434
    %v2436 = vpop.f32.mrf.mxu0
    %2437 = vdwg.mxu0
    %2438 = vmatpush.bf16.msra.mxu0 %v2399
    %2439 = vmatpush.bf16.msra.mxu0 %v2396
    %2440 = vmatpush.bf16.msra.mxu0 %v2393
    %2441 = vmatpush.bf16.msra.mxu0 %v2390
    %2442 = vmatpush.bf16.msra.mxu0 %v2387
    %2443 = vmatpush.bf16.msra.mxu0 %v2384
    %2444 = vmatpush.bf16.msra.mxu0 %v2381
    %2445 = vmatpush.bf16.msra.mxu0 %v2378
    %2446 = vmatmul.bf16.gmra.mxu0 %v2264
    %v2447 = vpop.f32.mrf.mxu0
    %v2448 = vadd.f32 %v470, %v2447
    %v2449 = vpop.f32.mrf.mxu0
    %2450 = vdwg.mxu0
    %2451 = vmatpush.bf16.msra.mxu0 %v2400
    %2452 = vmatpush.bf16.msra.mxu0 %v2397
    %2453 = vmatpush.bf16.msra.mxu0 %v2394
    %2454 = vmatpush.bf16.msra.mxu0 %v2391
    %2455 = vmatpush.bf16.msra.mxu0 %v2388
    %2456 = vmatpush.bf16.msra.mxu0 %v2385
    %2457 = vmatpush.bf16.msra.mxu0 %v2382
    %2458 = vmatpush.bf16.msra.mxu0 %v2379
    %2459 = vmatmul.bf16.gmra.mxu0 %v2264
    %v2460 = vpop.f32.mrf.mxu0
    %v2461 = vadd.f32 %v471, %v2460
    %v2462 = vpop.f32.mrf.mxu0
    %2463 = vdwg.mxu0
    %v2464 = vadd.f32 %v2261, %v2435
    %v2465 = vxor.u32 %v2464, 2147483648
    %v2466 = vmul.f32 %v2465, 1.442695
    %v2467 = vpow.pop %v2466
    %v2468 = vadd.f32 %v2467, 1.0
    %v2469 = vrcp.pop %v2468
    %v2470 = vmul.f32 %v2468, %v2469
    %v2471 = vsub.f32 1.0, %v2470
    %v2472 = vmul.f32 %v2469, %v2471
    %v2473 = vadd.f32 %v2469, %v2472
    %vm2474 = vweird.f32 %v2468
    %vm2475 = vweird.f32 %v2469
    %vm2476 = vmor %vm2474, %vm2475
    %v2477 = vsel %vm2476, %v2469, %v2473
    %v2478 = vand.u32 2147483647, %v2468
    %vm2479 = vcmp.eq.f32.partialorder %v2478, 8.507059e+37
    %v2480 = vand.u32 %v2468, 2147483648
    %v2481 = vor.u32 1.1754944e-38, %v2480
    %v2482 = vsel %vm2479, %v2481, %v2477
    %v2483 = vmul.f32 1.0, %v2482
    %v2484 = vadd.f32 %v2262, %v2448
    %v2485 = vxor.u32 %v2484, 2147483648
    %v2486 = vmul.f32 %v2485, 1.442695
    %v2487 = vpow.pop %v2486
    %v2488 = vadd.f32 %v2487, 1.0
    %v2489 = vrcp.pop %v2488
    %v2490 = vmul.f32 %v2488, %v2489
    %v2491 = vsub.f32 1.0, %v2490
    %v2492 = vmul.f32 %v2489, %v2491
    %v2493 = vadd.f32 %v2489, %v2492
    %vm2494 = vweird.f32 %v2488
    %vm2495 = vweird.f32 %v2489
    %vm2496 = vmor %vm2494, %vm2495
    %v2497 = vsel %vm2496, %v2489, %v2493
    %v2498 = vand.u32 2147483647, %v2488
    %vm2499 = vcmp.eq.f32.partialorder %v2498, 8.507059e+37
    %v2500 = vand.u32 %v2488, 2147483648
    %v2501 = vor.u32 1.1754944e-38, %v2500
    %v2502 = vsel %vm2499, %v2501, %v2497
    %v2503 = vmul.f32 1.0, %v2502
    %v2504 = vmul.f32 %v2483, %v2461
    %v2505 = vadd.f32 %v2263, %v2504
    %v2506 = vtanh.pop %v2505
    %v2507 = vsub.f32 1.0, %v2503
    %v2508 = vmul.f32 %v2507, %v2506
    %v2509 = vmul.f32 %v2503, %v2255
    %v2510 = vadd.f32 %v2508, %v2509
    %s2511 = scalar_lea.vmem [#allocation3], 56
    %2512 = vst [vmem:[%s2511] sm:$0xff] %v2510
    %v2513 = vld [vmem:[#allocation3] sm:$0xff]
    %v2514 = vld [vmem:[#allocation3 + $0x8] sm:$0xff]
    %v2515 = vld [vmem:[#allocation3 + $0x10] sm:$0xff]
    %v2516 = vld [vmem:[#allocation3 + $0x18] sm:$0xff]
    %v2517 = vld [vmem:[#allocation3 + $0x20] sm:$0xff]
    %v2518 = vld [vmem:[#allocation3 + $0x28] sm:$0xff]
    %v2519 = vld [vmem:[#allocation3 + $0x30] sm:$0xff]
    %v2520 = vld [vmem:[#allocation3 + $0x38] sm:$0xff]
    %v2521 = vpack.c.bf16 %v2514, %v2513
    %v2522 = vpack.c.bf16 %v2516, %v2515
    %v2523 = vpack.c.bf16 %v2518, %v2517
    %v2524 = vpack.c.bf16 %v2520, %v2519
    %v2525 = vld [vmem:[#allocation8] sm:$0xff]
    %v2526 = vld [vmem:[#allocation8 + $0x8] sm:$0xf]
    %v2527 = vld [vmem:[#allocation8 + $0xc] sm:$0xff]
    %v2528 = vld [vmem:[#allocation8 + $0x14] sm:$0xf]
    %v2529 = vld [vmem:[#allocation8 + $0x18] sm:$0xff]
    %v2530 = vld [vmem:[#allocation8 + $0x20] sm:$0xf]
    %v2531 = vld [vmem:[#allocation8 + $0x24] sm:$0xff]
    %v2532 = vld [vmem:[#allocation8 + $0x2c] sm:$0xf]
    %v2533 = vld [vmem:[#allocation8 + $0x30] sm:$0xff]
    %v2534 = vld [vmem:[#allocation8 + $0x38] sm:$0xf]
    %v2535 = vld [vmem:[#allocation8 + $0x3c] sm:$0xff]
    %v2536 = vld [vmem:[#allocation8 + $0x44] sm:$0xf]
    %v2537 = vld [vmem:[#allocation8 + $0x48] sm:$0xff]
    %v2538 = vld [vmem:[#allocation8 + $0x50] sm:$0xf]
    %v2539 = vld [vmem:[#allocation8 + $0x54] sm:$0xff]
    %v2540 = vld [vmem:[#allocation8 + $0x5c] sm:$0xf]
    %v2541 = vld [vmem:[#allocation8 + $0x60] sm:$0xff]
    %v2542 = vld [vmem:[#allocation8 + $0x68] sm:$0xf]
    %v2543 = vld [vmem:[#allocation8 + $0x6c] sm:$0xff]
    %v2544 = vld [vmem:[#allocation8 + $0x74] sm:$0xf]
    %v2545 = vld [vmem:[#allocation8 + $0x78] sm:$0xff]
    %v2546 = vld [vmem:[#allocation8 + $0x80] sm:$0xf]
    %v2547 = vld [vmem:[#allocation8 + $0x84] sm:$0xff]
    %v2548 = vld [vmem:[#allocation8 + $0x8c] sm:$0xf]
    %v2549 = vld [vmem:[#allocation8 + $0x90] sm:$0xff]
    %v2550 = vld [vmem:[#allocation8 + $0x98] sm:$0xf]
    %v2551 = vld [vmem:[#allocation8 + $0x9c] sm:$0xff]
    %v2552 = vld [vmem:[#allocation8 + $0xa4] sm:$0xf]
    %v2553 = vld [vmem:[#allocation8 + $0xa8] sm:$0xff]
    %v2554 = vld [vmem:[#allocation8 + $0xb0] sm:$0xf]
    %v2555 = vld [vmem:[#allocation8 + $0xb4] sm:$0xff]
    %v2556 = vld [vmem:[#allocation8 + $0xbc] sm:$0xf]
    %v2557 = vld [vmem:[#allocation9] sm:$0x7]
    %v2559 = vperm.slane %v2557, 0
    %v2560 = vperm.slane %v2557, 1
    %v2561 = vperm.slane %v2557, 2
    %v2597 = vunpack.c.l.b16 %v2525
    %v2598 = vunpack.c.h.b16 %v2525
    %v2599 = vunpack.c.l.b16 %v2526
    %v2600 = vunpack.c.l.b16 %v2527
    %v2601 = vunpack.c.h.b16 %v2527
    %v2602 = vunpack.c.l.b16 %v2528
    %v2603 = vunpack.c.l.b16 %v2529
    %v2604 = vunpack.c.h.b16 %v2529
    %v2605 = vunpack.c.l.b16 %v2530
    %v2606 = vunpack.c.l.b16 %v2531
    %v2607 = vunpack.c.h.b16 %v2531
    %v2608 = vunpack.c.l.b16 %v2532
    %v2609 = vunpack.c.l.b16 %v2533
    %v2610 = vunpack.c.h.b16 %v2533
    %v2611 = vunpack.c.l.b16 %v2534
    %v2612 = vunpack.c.l.b16 %v2535
    %v2613 = vunpack.c.h.b16 %v2535
    %v2614 = vunpack.c.l.b16 %v2536
    %v2615 = vunpack.c.l.b16 %v2537
    %v2616 = vunpack.c.h.b16 %v2537
    %v2617 = vunpack.c.l.b16 %v2538
    %v2618 = vunpack.c.l.b16 %v2539
    %v2619 = vunpack.c.h.b16 %v2539
    %v2620 = vunpack.c.l.b16 %v2540
    %v2621 = vunpack.c.l.b16 %v2541
    %v2622 = vunpack.c.h.b16 %v2541
    %v2623 = vunpack.c.l.b16 %v2542
    %v2624 = vunpack.c.l.b16 %v2543
    %v2625 = vunpack.c.h.b16 %v2543
    %v2626 = vunpack.c.l.b16 %v2544
    %v2627 = vunpack.c.l.b16 %v2545
    %v2628 = vunpack.c.h.b16 %v2545
    %v2629 = vunpack.c.l.b16 %v2546
    %v2630 = vunpack.c.l.b16 %v2547
    %v2631 = vunpack.c.h.b16 %v2547
    %v2632 = vunpack.c.l.b16 %v2548
    %v2633 = vunpack.c.l.b16 %v2549
    %v2634 = vunpack.c.h.b16 %v2549
    %v2635 = vunpack.c.l.b16 %v2550
    %v2636 = vunpack.c.l.b16 %v2551
    %v2637 = vunpack.c.h.b16 %v2551
    %v2638 = vunpack.c.l.b16 %v2552
    %v2639 = vunpack.c.l.b16 %v2553
    %v2640 = vunpack.c.h.b16 %v2553
    %v2641 = vunpack.c.l.b16 %v2554
    %v2642 = vunpack.c.l.b16 %v2555
    %v2643 = vunpack.c.h.b16 %v2555
    %v2644 = vunpack.c.l.b16 %v2556
    %v2645 = vpack.c.b16 %v2600, %v2597
    %v2646 = vpack.c.b16 %v2601, %v2598
    %v2647 = vpack.c.b16 %v2602, %v2599
    %v2648 = vpack.c.b16 %v2606, %v2603
    %v2649 = vpack.c.b16 %v2607, %v2604
    %v2650 = vpack.c.b16 %v2608, %v2605
    %v2651 = vpack.c.b16 %v2612, %v2609
    %v2652 = vpack.c.b16 %v2613, %v2610
    %v2653 = vpack.c.b16 %v2614, %v2611
    %v2654 = vpack.c.b16 %v2618, %v2615
    %v2655 = vpack.c.b16 %v2619, %v2616
    %v2656 = vpack.c.b16 %v2620, %v2617
    %v2657 = vpack.c.b16 %v2624, %v2621
    %v2658 = vpack.c.b16 %v2625, %v2622
    %v2659 = vpack.c.b16 %v2626, %v2623
    %v2660 = vpack.c.b16 %v2630, %v2627
    %v2661 = vpack.c.b16 %v2631, %v2628
    %v2662 = vpack.c.b16 %v2632, %v2629
    %v2663 = vpack.c.b16 %v2636, %v2633
    %v2664 = vpack.c.b16 %v2637, %v2634
    %v2665 = vpack.c.b16 %v2638, %v2635
    %v2666 = vpack.c.b16 %v2642, %v2639
    %v2667 = vpack.c.b16 %v2643, %v2640
    %v2668 = vpack.c.b16 %v2644, %v2641
    %2693 = vmatpush.bf16.msra.mxu0 %v2666
    %2694 = vmatpush.bf16.msra.mxu0 %v2663
    %2695 = vmatpush.bf16.msra.mxu0 %v2660
    %2696 = vmatpush.bf16.msra.mxu0 %v2657
    %2697 = vmatpush.bf16.msra.mxu0 %v2654
    %2698 = vmatpush.bf16.msra.mxu0 %v2651
    %2699 = vmatpush.bf16.msra.mxu0 %v2648
    %2700 = vmatpush.bf16.msra.mxu0 %v2645
    %2701 = vmatmul.bf16.gmra.mxu0 %v2521
    %v2702 = vpop.f32.mrf.mxu0
    %v2703 = vadd.f32 %v2559, %v2702
    %v2704 = vpop.f32.mrf.mxu0
    %v2705 = vadd.f32 %v2559, %v2704
    %2706 = vmatmul.bf16.gmra.mxu0 %v2522
    %v2707 = vpop.f32.mrf.mxu0
    %v2708 = vadd.f32 %v2559, %v2707
    %v2709 = vpop.f32.mrf.mxu0
    %v2710 = vadd.f32 %v2559, %v2709
    %2711 = vmatmul.bf16.gmra.mxu0 %v2523
    %v2712 = vpop.f32.mrf.mxu0
    %v2713 = vadd.f32 %v2559, %v2712
    %v2714 = vpop.f32.mrf.mxu0
    %v2715 = vadd.f32 %v2559, %v2714
    %2716 = vmatmul.bf16.gmra.mxu0 %v2524
    %v2717 = vpop.f32.mrf.mxu0
    %v2718 = vadd.f32 %v2559, %v2717
    %v2719 = vpop.f32.mrf.mxu0
    %v2720 = vadd.f32 %v2559, %v2719
    %2721 = vdwg.mxu0
    %2722 = vmatpush.bf16.msra.mxu0 %v2667
    %2723 = vmatpush.bf16.msra.mxu0 %v2664
    %2724 = vmatpush.bf16.msra.mxu0 %v2661
    %2725 = vmatpush.bf16.msra.mxu0 %v2658
    %2726 = vmatpush.bf16.msra.mxu0 %v2655
    %2727 = vmatpush.bf16.msra.mxu0 %v2652
    %2728 = vmatpush.bf16.msra.mxu0 %v2649
    %2729 = vmatpush.bf16.msra.mxu0 %v2646
    %2730 = vmatmul.bf16.gmra.mxu0 %v2521
    %v2731 = vpop.f32.mrf.mxu0
    %v2732 = vadd.f32 %v2560, %v2731
    %v2733 = vpop.f32.mrf.mxu0
    %v2734 = vadd.f32 %v2560, %v2733
    %2735 = vmatmul.bf16.gmra.mxu0 %v2522
    %v2736 = vpop.f32.mrf.mxu0
    %v2737 = vadd.f32 %v2560, %v2736
    %v2738 = vpop.f32.mrf.mxu0
    %v2739 = vadd.f32 %v2560, %v2738
    %2740 = vmatmul.bf16.gmra.mxu0 %v2523
    %v2741 = vpop.f32.mrf.mxu0
    %v2742 = vadd.f32 %v2560, %v2741
    %v2743 = vpop.f32.mrf.mxu0
    %v2744 = vadd.f32 %v2560, %v2743
    %2745 = vmatmul.bf16.gmra.mxu0 %v2524
    %v2746 = vpop.f32.mrf.mxu0
    %v2747 = vadd.f32 %v2560, %v2746
    %v2748 = vpop.f32.mrf.mxu0
    %v2749 = vadd.f32 %v2560, %v2748
    %2750 = vdwg.mxu0
    %2751 = vmatpush.bf16.msra.mxu0 %v2668
    %2752 = vmatpush.bf16.msra.mxu0 %v2665
    %2753 = vmatpush.bf16.msra.mxu0 %v2662
    %2754 = vmatpush.bf16.msra.mxu0 %v2659
    %2755 = vmatpush.bf16.msra.mxu0 %v2656
    %2756 = vmatpush.bf16.msra.mxu0 %v2653
    %2757 = vmatpush.bf16.msra.mxu0 %v2650
    %2758 = vmatpush.bf16.msra.mxu0 %v2647
    %2759 = vmatmul.bf16.gmra.mxu0 %v2521
    %v2760 = vpop.f32.mrf.mxu0
    %v2761 = vadd.f32 %v2561, %v2760
    %v2762 = vpop.f32.mrf.mxu0
    %v2763 = vadd.f32 %v2561, %v2762
    %2764 = vmatmul.bf16.gmra.mxu0 %v2522
    %v2765 = vpop.f32.mrf.mxu0
    %v2766 = vadd.f32 %v2561, %v2765
    %v2767 = vpop.f32.mrf.mxu0
    %v2768 = vadd.f32 %v2561, %v2767
    %2769 = vmatmul.bf16.gmra.mxu0 %v2523
    %v2770 = vpop.f32.mrf.mxu0
    %v2771 = vadd.f32 %v2561, %v2770
    %v2772 = vpop.f32.mrf.mxu0
    %v2773 = vadd.f32 %v2561, %v2772
    %2774 = vmatmul.bf16.gmra.mxu0 %v2524
    %v2775 = vpop.f32.mrf.mxu0
    %v2776 = vadd.f32 %v2561, %v2775
    %v2777 = vpop.f32.mrf.mxu0
    %v2778 = vadd.f32 %v2561, %v2777
    %2779 = vdwg.mxu0
    %2780 = vst [vmem:[#allocation2] sm:$0xff] %v2703
    %2781 = vst [vmem:[#allocation2 + $0x8] sm:$0xff] %v2732
    %2782 = vst [vmem:[#allocation2 + $0x10] sm:$0xff] %v2761
    %2783 = vst [vmem:[#allocation2 + $0x18] sm:$0xff] %v2705
    %2784 = vst [vmem:[#allocation2 + $0x20] sm:$0xff] %v2734
    %2785 = vst [vmem:[#allocation2 + $0x28] sm:$0xff] %v2763
    %2786 = vst [vmem:[#allocation2 + $0x30] sm:$0xff] %v2708
    %2787 = vst [vmem:[#allocation2 + $0x38] sm:$0xff] %v2737
    %2788 = vst [vmem:[#allocation2 + $0x40] sm:$0xff] %v2766
    %2789 = vst [vmem:[#allocation2 + $0x48] sm:$0xff] %v2710
    %2790 = vst [vmem:[#allocation2 + $0x50] sm:$0xff] %v2739
    %2791 = vst [vmem:[#allocation2 + $0x58] sm:$0xff] %v2768
    %2792 = vst [vmem:[#allocation2 + $0x60] sm:$0xff] %v2713
    %2793 = vst [vmem:[#allocation2 + $0x68] sm:$0xff] %v2742
    %2794 = vst [vmem:[#allocation2 + $0x70] sm:$0xff] %v2771
    %2795 = vst [vmem:[#allocation2 + $0x78] sm:$0xff] %v2715
    %2796 = vst [vmem:[#allocation2 + $0x80] sm:$0xff] %v2744
    %2797 = vst [vmem:[#allocation2 + $0x88] sm:$0xff] %v2773
    %2798 = vst [vmem:[#allocation2 + $0x90] sm:$0xff] %v2718
    %2799 = vst [vmem:[#allocation2 + $0x98] sm:$0xff] %v2747
    %2800 = vst [vmem:[#allocation2 + $0xa0] sm:$0xff] %v2776
    %2801 = vst [vmem:[#allocation2 + $0xa8] sm:$0xff] %v2720
    %2802 = vst [vmem:[#allocation2 + $0xb0] sm:$0xff] %v2749
    %2803 = vst [vmem:[#allocation2 + $0xb8] sm:$0xff] %v2778
    %v2804 = vld [vmem:[#allocation15] sm:$0x7]
    %v2806 = vperm.slane %v2804, 0
    %v2807 = vperm.slane %v2804, 1
    %v2808 = vperm.slane %v2804, 2
    %v2812 = vld [vmem:[%s477] sm:$0xff]
    %v2813 = vld [vmem:[%s477 + $0x8] sm:$0xff]
    %v2814 = vld [vmem:[%s477 + $0x10] sm:$0xff]
    %v2815 = vld [vmem:[#allocation14] sm:$0xff]
    %v2816 = vld [vmem:[#allocation14 + $0x8] sm:$0xf]
    %v2817 = vld [vmem:[#allocation14 + $0xc] sm:$0xff]
    %v2818 = vld [vmem:[#allocation14 + $0x14] sm:$0xf]
    %v2819 = vld [vmem:[#allocation14 + $0x18] sm:$0xff]
    %v2820 = vld [vmem:[#allocation14 + $0x20] sm:$0xf]
    %v2821 = vld [vmem:[#allocation14 + $0x24] sm:$0xff]
    %v2822 = vld [vmem:[#allocation14 + $0x2c] sm:$0xf]
    %v2823 = vld [vmem:[#allocation14 + $0x30] sm:$0xff]
    %v2824 = vld [vmem:[#allocation14 + $0x38] sm:$0xf]
    %v2825 = vld [vmem:[#allocation14 + $0x3c] sm:$0xff]
    %v2826 = vld [vmem:[#allocation14 + $0x44] sm:$0xf]
    %v2827 = vld [vmem:[#allocation14 + $0x48] sm:$0xff]
    %v2828 = vld [vmem:[#allocation14 + $0x50] sm:$0xf]
    %v2829 = vld [vmem:[#allocation14 + $0x54] sm:$0xff]
    %v2830 = vld [vmem:[#allocation14 + $0x5c] sm:$0xf]
    %v2831 = vld [vmem:[#allocation14 + $0x60] sm:$0xff]
    %v2832 = vld [vmem:[#allocation14 + $0x68] sm:$0xf]
    %v2833 = vld [vmem:[#allocation14 + $0x6c] sm:$0xff]
    %v2834 = vld [vmem:[#allocation14 + $0x74] sm:$0xf]
    %v2835 = vld [vmem:[#allocation14 + $0x78] sm:$0xff]
    %v2836 = vld [vmem:[#allocation14 + $0x80] sm:$0xf]
    %v2837 = vld [vmem:[#allocation14 + $0x84] sm:$0xff]
    %v2838 = vld [vmem:[#allocation14 + $0x8c] sm:$0xf]
    %v2839 = vld [vmem:[#allocation14 + $0x90] sm:$0xff]
    %v2840 = vld [vmem:[#allocation14 + $0x98] sm:$0xf]
    %v2841 = vld [vmem:[#allocation14 + $0x9c] sm:$0xff]
    %v2842 = vld [vmem:[#allocation14 + $0xa4] sm:$0xf]
    %v2843 = vld [vmem:[#allocation14 + $0xa8] sm:$0xff]
    %v2844 = vld [vmem:[#allocation14 + $0xb0] sm:$0xf]
    %v2845 = vld [vmem:[#allocation14 + $0xb4] sm:$0xff]
    %v2846 = vld [vmem:[#allocation14 + $0xbc] sm:$0xf]
    %v2879 = vunpack.c.l.b16 %v2815
    %v2880 = vunpack.c.h.b16 %v2815
    %v2881 = vunpack.c.l.b16 %v2816
    %v2882 = vunpack.c.l.b16 %v2817
    %v2883 = vunpack.c.h.b16 %v2817
    %v2884 = vunpack.c.l.b16 %v2818
    %v2885 = vunpack.c.l.b16 %v2819
    %v2886 = vunpack.c.h.b16 %v2819
    %v2887 = vunpack.c.l.b16 %v2820
    %v2888 = vunpack.c.l.b16 %v2821
    %v2889 = vunpack.c.h.b16 %v2821
    %v2890 = vunpack.c.l.b16 %v2822
    %v2891 = vunpack.c.l.b16 %v2823
    %v2892 = vunpack.c.h.b16 %v2823
    %v2893 = vunpack.c.l.b16 %v2824
    %v2894 = vunpack.c.l.b16 %v2825
    %v2895 = vunpack.c.h.b16 %v2825
    %v2896 = vunpack.c.l.b16 %v2826
    %v2897 = vunpack.c.l.b16 %v2827
    %v2898 = vunpack.c.h.b16 %v2827
    %v2899 = vunpack.c.l.b16 %v2828
    %v2900 = vunpack.c.l.b16 %v2829
    %v2901 = vunpack.c.h.b16 %v2829
    %v2902 = vunpack.c.l.b16 %v2830
    %v2903 = vunpack.c.l.b16 %v2831
    %v2904 = vunpack.c.h.b16 %v2831
    %v2905 = vunpack.c.l.b16 %v2832
    %v2906 = vunpack.c.l.b16 %v2833
    %v2907 = vunpack.c.h.b16 %v2833
    %v2908 = vunpack.c.l.b16 %v2834
    %v2909 = vunpack.c.l.b16 %v2835
    %v2910 = vunpack.c.h.b16 %v2835
    %v2911 = vunpack.c.l.b16 %v2836
    %v2912 = vunpack.c.l.b16 %v2837
    %v2913 = vunpack.c.h.b16 %v2837
    %v2914 = vunpack.c.l.b16 %v2838
    %v2915 = vunpack.c.l.b16 %v2839
    %v2916 = vunpack.c.h.b16 %v2839
    %v2917 = vunpack.c.l.b16 %v2840
    %v2918 = vunpack.c.l.b16 %v2841
    %v2919 = vunpack.c.h.b16 %v2841
    %v2920 = vunpack.c.l.b16 %v2842
    %v2921 = vunpack.c.l.b16 %v2843
    %v2922 = vunpack.c.h.b16 %v2843
    %v2923 = vunpack.c.l.b16 %v2844
    %v2924 = vunpack.c.l.b16 %v2845
    %v2925 = vunpack.c.h.b16 %v2845
    %v2926 = vunpack.c.l.b16 %v2846
    %v2927 = vpack.c.b16 %v2882, %v2879
    %v2928 = vpack.c.b16 %v2883, %v2880
    %v2929 = vpack.c.b16 %v2884, %v2881
    %v2930 = vpack.c.b16 %v2888, %v2885
    %v2931 = vpack.c.b16 %v2889, %v2886
    %v2932 = vpack.c.b16 %v2890, %v2887
    %v2933 = vpack.c.b16 %v2894, %v2891
    %v2934 = vpack.c.b16 %v2895, %v2892
    %v2935 = vpack.c.b16 %v2896, %v2893
    %v2936 = vpack.c.b16 %v2900, %v2897
    %v2937 = vpack.c.b16 %v2901, %v2898
    %v2938 = vpack.c.b16 %v2902, %v2899
    %v2939 = vpack.c.b16 %v2906, %v2903
    %v2940 = vpack.c.b16 %v2907, %v2904
    %v2941 = vpack.c.b16 %v2908, %v2905
    %v2942 = vpack.c.b16 %v2912, %v2909
    %v2943 = vpack.c.b16 %v2913, %v2910
    %v2944 = vpack.c.b16 %v2914, %v2911
    %v2945 = vpack.c.b16 %v2918, %v2915
    %v2946 = vpack.c.b16 %v2919, %v2916
    %v2947 = vpack.c.b16 %v2920, %v2917
    %v2948 = vpack.c.b16 %v2924, %v2921
    %v2949 = vpack.c.b16 %v2925, %v2922
    %v2950 = vpack.c.b16 %v2926, %v2923
    %2975 = vmatpush.bf16.msra.mxu0 %v2948
    %2976 = vmatpush.bf16.msra.mxu0 %v2945
    %2977 = vmatpush.bf16.msra.mxu0 %v2942
    %2978 = vmatpush.bf16.msra.mxu0 %v2939
    %2979 = vmatpush.bf16.msra.mxu0 %v2936
    %2980 = vmatpush.bf16.msra.mxu0 %v2933
    %2981 = vmatpush.bf16.msra.mxu0 %v2930
    %2982 = vmatpush.bf16.msra.mxu0 %v2927
    %2983 = vmatmul.bf16.gmra.mxu0 0
    %v2984 = vpop.f32.mrf.mxu0
    %v2985 = vadd.f32 %v2806, %v2984
    %v2986 = vpop.f32.mrf.mxu0
    %2987 = vdwg.mxu0
    %2988 = vmatpush.bf16.msra.mxu0 %v2949
    %2989 = vmatpush.bf16.msra.mxu0 %v2946
    %2990 = vmatpush.bf16.msra.mxu0 %v2943
    %2991 = vmatpush.bf16.msra.mxu0 %v2940
    %2992 = vmatpush.bf16.msra.mxu0 %v2937
    %2993 = vmatpush.bf16.msra.mxu0 %v2934
    %2994 = vmatpush.bf16.msra.mxu0 %v2931
    %2995 = vmatpush.bf16.msra.mxu0 %v2928
    %2996 = vmatmul.bf16.gmra.mxu0 0
    %v2997 = vpop.f32.mrf.mxu0
    %v2998 = vadd.f32 %v2807, %v2997
    %v2999 = vpop.f32.mrf.mxu0
    %3000 = vdwg.mxu0
    %3001 = vmatpush.bf16.msra.mxu0 %v2950
    %3002 = vmatpush.bf16.msra.mxu0 %v2947
    %3003 = vmatpush.bf16.msra.mxu0 %v2944
    %3004 = vmatpush.bf16.msra.mxu0 %v2941
    %3005 = vmatpush.bf16.msra.mxu0 %v2938
    %3006 = vmatpush.bf16.msra.mxu0 %v2935
    %3007 = vmatpush.bf16.msra.mxu0 %v2932
    %3008 = vmatpush.bf16.msra.mxu0 %v2929
    %3009 = vmatmul.bf16.gmra.mxu0 0
    %v3010 = vpop.f32.mrf.mxu0
    %v3011 = vadd.f32 %v2808, %v3010
    %v3012 = vpop.f32.mrf.mxu0
    %3013 = vdwg.mxu0
    %v3014 = vadd.f32 %v2812, %v2985
    %v3015 = vxor.u32 %v3014, 2147483648
    %v3016 = vmul.f32 %v3015, 1.442695
    %v3017 = vpow.pop %v3016
    %v3018 = vadd.f32 %v3017, 1.0
    %v3019 = vrcp.pop %v3018
    %v3020 = vmul.f32 %v3018, %v3019
    %v3021 = vsub.f32 1.0, %v3020
    %v3022 = vmul.f32 %v3019, %v3021
    %v3023 = vadd.f32 %v3019, %v3022
    %vm3024 = vweird.f32 %v3018
    %vm3025 = vweird.f32 %v3019
    %vm3026 = vmor %vm3024, %vm3025
    %v3027 = vsel %vm3026, %v3019, %v3023
    %v3028 = vand.u32 2147483647, %v3018
    %vm3029 = vcmp.eq.f32.partialorder %v3028, 8.507059e+37
    %v3030 = vand.u32 %v3018, 2147483648
    %v3031 = vor.u32 1.1754944e-38, %v3030
    %v3032 = vsel %vm3029, %v3031, %v3027
    %v3033 = vmul.f32 1.0, %v3032
    %v3034 = vadd.f32 %v2813, %v2998
    %v3035 = vxor.u32 %v3034, 2147483648
    %v3036 = vmul.f32 %v3035, 1.442695
    %v3037 = vpow.pop %v3036
    %v3038 = vadd.f32 %v3037, 1.0
    %v3039 = vrcp.pop %v3038
    %v3040 = vmul.f32 %v3038, %v3039
    %v3041 = vsub.f32 1.0, %v3040
    %v3042 = vmul.f32 %v3039, %v3041
    %v3043 = vadd.f32 %v3039, %v3042
    %vm3044 = vweird.f32 %v3038
    %vm3045 = vweird.f32 %v3039
    %vm3046 = vmor %vm3044, %vm3045
    %v3047 = vsel %vm3046, %v3039, %v3043
    %v3048 = vand.u32 2147483647, %v3038
    %vm3049 = vcmp.eq.f32.partialorder %v3048, 8.507059e+37
    %v3050 = vand.u32 %v3038, 2147483648
    %v3051 = vor.u32 1.1754944e-38, %v3050
    %v3052 = vsel %vm3049, %v3051, %v3047
    %v3053 = vmul.f32 1.0, %v3052
    %v3054 = vmul.f32 %v3033, %v3011
    %v3055 = vadd.f32 %v2814, %v3054
    %v3056 = vtanh.pop %v3055
    %v3057 = vsub.f32 1.0, %v3053
    %v3058 = vmul.f32 %v3057, %v3056
    %v3059 = vmul.f32 %v3053, 0.0
    %v3060 = vadd.f32 %v3058, %v3059
    %v3061 = vld [vmem:[%s730] sm:$0xff]
    %v3062 = vld [vmem:[%s730 + $0x8] sm:$0xff]
    %v3063 = vld [vmem:[%s730 + $0x10] sm:$0xff]
    %v3064 = vpack.c.bf16 %v3060, %v3060
    %3065 = vmatpush.bf16.msra.mxu0 %v2948
    %3066 = vmatpush.bf16.msra.mxu0 %v2945
    %3067 = vmatpush.bf16.msra.mxu0 %v2942
    %3068 = vmatpush.bf16.msra.mxu0 %v2939
    %3069 = vmatpush.bf16.msra.mxu0 %v2936
    %3070 = vmatpush.bf16.msra.mxu0 %v2933
    %3071 = vmatpush.bf16.msra.mxu0 %v2930
    %3072 = vmatpush.bf16.msra.mxu0 %v2927
    %3073 = vmatmul.bf16.gmra.mxu0 %v3064
    %v3074 = vpop.f32.mrf.mxu0
    %v3075 = vadd.f32 %v2806, %v3074
    %v3076 = vpop.f32.mrf.mxu0
    %3077 = vdwg.mxu0
    %3078 = vmatpush.bf16.msra.mxu0 %v2949
    %3079 = vmatpush.bf16.msra.mxu0 %v2946
    %3080 = vmatpush.bf16.msra.mxu0 %v2943
    %3081 = vmatpush.bf16.msra.mxu0 %v2940
    %3082 = vmatpush.bf16.msra.mxu0 %v2937
    %3083 = vmatpush.bf16.msra.mxu0 %v2934
    %3084 = vmatpush.bf16.msra.mxu0 %v2931
    %3085 = vmatpush.bf16.msra.mxu0 %v2928
    %3086 = vmatmul.bf16.gmra.mxu0 %v3064
    %v3087 = vpop.f32.mrf.mxu0
    %v3088 = vadd.f32 %v2807, %v3087
    %v3089 = vpop.f32.mrf.mxu0
    %3090 = vdwg.mxu0
    %3091 = vmatpush.bf16.msra.mxu0 %v2950
    %3092 = vmatpush.bf16.msra.mxu0 %v2947
    %3093 = vmatpush.bf16.msra.mxu0 %v2944
    %3094 = vmatpush.bf16.msra.mxu0 %v2941
    %3095 = vmatpush.bf16.msra.mxu0 %v2938
    %3096 = vmatpush.bf16.msra.mxu0 %v2935
    %3097 = vmatpush.bf16.msra.mxu0 %v2932
    %3098 = vmatpush.bf16.msra.mxu0 %v2929
    %3099 = vmatmul.bf16.gmra.mxu0 %v3064
    %v3100 = vpop.f32.mrf.mxu0
    %v3101 = vadd.f32 %v2808, %v3100
    %v3102 = vpop.f32.mrf.mxu0
    %3103 = vdwg.mxu0
    %v3104 = vadd.f32 %v3061, %v3075
    %v3105 = vxor.u32 %v3104, 2147483648
    %v3106 = vmul.f32 %v3105, 1.442695
    %v3107 = vpow.pop %v3106
    %v3108 = vadd.f32 %v3107, 1.0
    %v3109 = vrcp.pop %v3108
    %v3110 = vmul.f32 %v3108, %v3109
    %v3111 = vsub.f32 1.0, %v3110
    %v3112 = vmul.f32 %v3109, %v3111
    %v3113 = vadd.f32 %v3109, %v3112
    %vm3114 = vweird.f32 %v3108
    %vm3115 = vweird.f32 %v3109
    %vm3116 = vmor %vm3114, %vm3115
    %v3117 = vsel %vm3116, %v3109, %v3113
    %v3118 = vand.u32 2147483647, %v3108
    %vm3119 = vcmp.eq.f32.partialorder %v3118, 8.507059e+37
    %v3120 = vand.u32 %v3108, 2147483648
    %v3121 = vor.u32 1.1754944e-38, %v3120
    %v3122 = vsel %vm3119, %v3121, %v3117
    %v3123 = vmul.f32 1.0, %v3122
    %v3124 = vadd.f32 %v3062, %v3088
    %v3125 = vxor.u32 %v3124, 2147483648
    %v3126 = vmul.f32 %v3125, 1.442695
    %v3127 = vpow.pop %v3126
    %v3128 = vadd.f32 %v3127, 1.0
    %v3129 = vrcp.pop %v3128
    %v3130 = vmul.f32 %v3128, %v3129
    %v3131 = vsub.f32 1.0, %v3130
    %v3132 = vmul.f32 %v3129, %v3131
    %v3133 = vadd.f32 %v3129, %v3132
    %vm3134 = vweird.f32 %v3128
    %vm3135 = vweird.f32 %v3129
    %vm3136 = vmor %vm3134, %vm3135
    %v3137 = vsel %vm3136, %v3129, %v3133
    %v3138 = vand.u32 2147483647, %v3128
    %vm3139 = vcmp.eq.f32.partialorder %v3138, 8.507059e+37
    %v3140 = vand.u32 %v3128, 2147483648
    %v3141 = vor.u32 1.1754944e-38, %v3140
    %v3142 = vsel %vm3139, %v3141, %v3137
    %v3143 = vmul.f32 1.0, %v3142
    %v3144 = vmul.f32 %v3123, %v3101
    %v3145 = vadd.f32 %v3063, %v3144
    %v3146 = vtanh.pop %v3145
    %v3147 = vsub.f32 1.0, %v3143
    %v3148 = vmul.f32 %v3147, %v3146
    %v3149 = vmul.f32 %v3143, %v3060
    %v3150 = vadd.f32 %v3148, %v3149
    %v3151 = vld [vmem:[%s985] sm:$0xff]
    %v3152 = vld [vmem:[%s985 + $0x8] sm:$0xff]
    %v3153 = vld [vmem:[%s985 + $0x10] sm:$0xff]
    %v3154 = vpack.c.bf16 %v3150, %v3150
    %3155 = vmatpush.bf16.msra.mxu0 %v2948
    %3156 = vmatpush.bf16.msra.mxu0 %v2945
    %3157 = vmatpush.bf16.msra.mxu0 %v2942
    %3158 = vmatpush.bf16.msra.mxu0 %v2939
    %3159 = vmatpush.bf16.msra.mxu0 %v2936
    %3160 = vmatpush.bf16.msra.mxu0 %v2933
    %3161 = vmatpush.bf16.msra.mxu0 %v2930
    %3162 = vmatpush.bf16.msra.mxu0 %v2927
    %3163 = vmatmul.bf16.gmra.mxu0 %v3154
    %v3164 = vpop.f32.mrf.mxu0
    %v3165 = vadd.f32 %v2806, %v3164
    %v3166 = vpop.f32.mrf.mxu0
    %3167 = vdwg.mxu0
    %3168 = vmatpush.bf16.msra.mxu0 %v2949
    %3169 = vmatpush.bf16.msra.mxu0 %v2946
    %3170 = vmatpush.bf16.msra.mxu0 %v2943
    %3171 = vmatpush.bf16.msra.mxu0 %v2940
    %3172 = vmatpush.bf16.msra.mxu0 %v2937
    %3173 = vmatpush.bf16.msra.mxu0 %v2934
    %3174 = vmatpush.bf16.msra.mxu0 %v2931
    %3175 = vmatpush.bf16.msra.mxu0 %v2928
    %3176 = vmatmul.bf16.gmra.mxu0 %v3154
    %v3177 = vpop.f32.mrf.mxu0
    %v3178 = vadd.f32 %v2807, %v3177
    %v3179 = vpop.f32.mrf.mxu0
    %3180 = vdwg.mxu0
    %3181 = vmatpush.bf16.msra.mxu0 %v2950
    %3182 = vmatpush.bf16.msra.mxu0 %v2947
    %3183 = vmatpush.bf16.msra.mxu0 %v2944
    %3184 = vmatpush.bf16.msra.mxu0 %v2941
    %3185 = vmatpush.bf16.msra.mxu0 %v2938
    %3186 = vmatpush.bf16.msra.mxu0 %v2935
    %3187 = vmatpush.bf16.msra.mxu0 %v2932
    %3188 = vmatpush.bf16.msra.mxu0 %v2929
    %3189 = vmatmul.bf16.gmra.mxu0 %v3154
    %v3190 = vpop.f32.mrf.mxu0
    %v3191 = vadd.f32 %v2808, %v3190
    %v3192 = vpop.f32.mrf.mxu0
    %3193 = vdwg.mxu0
    %v3194 = vadd.f32 %v3151, %v3165
    %v3195 = vxor.u32 %v3194, 2147483648
    %v3196 = vmul.f32 %v3195, 1.442695
    %v3197 = vpow.pop %v3196
    %v3198 = vadd.f32 %v3197, 1.0
    %v3199 = vrcp.pop %v3198
    %v3200 = vmul.f32 %v3198, %v3199
    %v3201 = vsub.f32 1.0, %v3200
    %v3202 = vmul.f32 %v3199, %v3201
    %v3203 = vadd.f32 %v3199, %v3202
    %vm3204 = vweird.f32 %v3198
    %vm3205 = vweird.f32 %v3199
    %vm3206 = vmor %vm3204, %vm3205
    %v3207 = vsel %vm3206, %v3199, %v3203
    %v3208 = vand.u32 2147483647, %v3198
    %vm3209 = vcmp.eq.f32.partialorder %v3208, 8.507059e+37
    %v3210 = vand.u32 %v3198, 2147483648
    %v3211 = vor.u32 1.1754944e-38, %v3210
    %v3212 = vsel %vm3209, %v3211, %v3207
    %v3213 = vmul.f32 1.0, %v3212
    %v3214 = vadd.f32 %v3152, %v3178
    %v3215 = vxor.u32 %v3214, 2147483648
    %v3216 = vmul.f32 %v3215, 1.442695
    %v3217 = vpow.pop %v3216
    %v3218 = vadd.f32 %v3217, 1.0
    %v3219 = vrcp.pop %v3218
    %v3220 = vmul.f32 %v3218, %v3219
    %v3221 = vsub.f32 1.0, %v3220
    %v3222 = vmul.f32 %v3219, %v3221
    %v3223 = vadd.f32 %v3219, %v3222
    %vm3224 = vweird.f32 %v3218
    %vm3225 = vweird.f32 %v3219
    %vm3226 = vmor %vm3224, %vm3225
    %v3227 = vsel %vm3226, %v3219, %v3223
    %v3228 = vand.u32 2147483647, %v3218
    %vm3229 = vcmp.eq.f32.partialorder %v3228, 8.507059e+37
    %v3230 = vand.u32 %v3218, 2147483648
    %v3231 = vor.u32 1.1754944e-38, %v3230
    %v3232 = vsel %vm3229, %v3231, %v3227
    %v3233 = vmul.f32 1.0, %v3232
    %v3234 = vmul.f32 %v3213, %v3191
    %v3235 = vadd.f32 %v3153, %v3234
    %v3236 = vtanh.pop %v3235
    %v3237 = vsub.f32 1.0, %v3233
    %v3238 = vmul.f32 %v3237, %v3236
    %v3239 = vmul.f32 %v3233, %v3150
    %v3240 = vadd.f32 %v3238, %v3239
    %v3241 = vld [vmem:[%s1240] sm:$0xff]
    %v3242 = vld [vmem:[%s1240 + $0x8] sm:$0xff]
    %v3243 = vld [vmem:[%s1240 + $0x10] sm:$0xff]
    %v3244 = vpack.c.bf16 %v3240, %v3240
    %3245 = vmatpush.bf16.msra.mxu0 %v2948
    %3246 = vmatpush.bf16.msra.mxu0 %v2945
    %3247 = vmatpush.bf16.msra.mxu0 %v2942
    %3248 = vmatpush.bf16.msra.mxu0 %v2939
    %3249 = vmatpush.bf16.msra.mxu0 %v2936
    %3250 = vmatpush.bf16.msra.mxu0 %v2933
    %3251 = vmatpush.bf16.msra.mxu0 %v2930
    %3252 = vmatpush.bf16.msra.mxu0 %v2927
    %3253 = vmatmul.bf16.gmra.mxu0 %v3244
    %v3254 = vpop.f32.mrf.mxu0
    %v3255 = vadd.f32 %v2806, %v3254
    %v3256 = vpop.f32.mrf.mxu0
    %3257 = vdwg.mxu0
    %3258 = vmatpush.bf16.msra.mxu0 %v2949
    %3259 = vmatpush.bf16.msra.mxu0 %v2946
    %3260 = vmatpush.bf16.msra.mxu0 %v2943
    %3261 = vmatpush.bf16.msra.mxu0 %v2940
    %3262 = vmatpush.bf16.msra.mxu0 %v2937
    %3263 = vmatpush.bf16.msra.mxu0 %v2934
    %3264 = vmatpush.bf16.msra.mxu0 %v2931
    %3265 = vmatpush.bf16.msra.mxu0 %v2928
    %3266 = vmatmul.bf16.gmra.mxu0 %v3244
    %v3267 = vpop.f32.mrf.mxu0
    %v3268 = vadd.f32 %v2807, %v3267
    %v3269 = vpop.f32.mrf.mxu0
    %3270 = vdwg.mxu0
    %3271 = vmatpush.bf16.msra.mxu0 %v2950
    %3272 = vmatpush.bf16.msra.mxu0 %v2947
    %3273 = vmatpush.bf16.msra.mxu0 %v2944
    %3274 = vmatpush.bf16.msra.mxu0 %v2941
    %3275 = vmatpush.bf16.msra.mxu0 %v2938
    %3276 = vmatpush.bf16.msra.mxu0 %v2935
    %3277 = vmatpush.bf16.msra.mxu0 %v2932
    %3278 = vmatpush.bf16.msra.mxu0 %v2929
    %3279 = vmatmul.bf16.gmra.mxu0 %v3244
    %v3280 = vpop.f32.mrf.mxu0
    %v3281 = vadd.f32 %v2808, %v3280
    %v3282 = vpop.f32.mrf.mxu0
    %3283 = vdwg.mxu0
    %v3284 = vadd.f32 %v3241, %v3255
    %v3285 = vxor.u32 %v3284, 2147483648
    %v3286 = vmul.f32 %v3285, 1.442695
    %v3287 = vpow.pop %v3286
    %v3288 = vadd.f32 %v3287, 1.0
    %v3289 = vrcp.pop %v3288
    %v3290 = vmul.f32 %v3288, %v3289
    %v3291 = vsub.f32 1.0, %v3290
    %v3292 = vmul.f32 %v3289, %v3291
    %v3293 = vadd.f32 %v3289, %v3292
    %vm3294 = vweird.f32 %v3288
    %vm3295 = vweird.f32 %v3289
    %vm3296 = vmor %vm3294, %vm3295
    %v3297 = vsel %vm3296, %v3289, %v3293
    %v3298 = vand.u32 2147483647, %v3288
    %vm3299 = vcmp.eq.f32.partialorder %v3298, 8.507059e+37
    %v3300 = vand.u32 %v3288, 2147483648
    %v3301 = vor.u32 1.1754944e-38, %v3300
    %v3302 = vsel %vm3299, %v3301, %v3297
    %v3303 = vmul.f32 1.0, %v3302
    %v3304 = vadd.f32 %v3242, %v3268
    %v3305 = vxor.u32 %v3304, 2147483648
    %v3306 = vmul.f32 %v3305, 1.442695
    %v3307 = vpow.pop %v3306
    %v3308 = vadd.f32 %v3307, 1.0
    %v3309 = vrcp.pop %v3308
    %v3310 = vmul.f32 %v3308, %v3309
    %v3311 = vsub.f32 1.0, %v3310
    %v3312 = vmul.f32 %v3309, %v3311
    %v3313 = vadd.f32 %v3309, %v3312
    %vm3314 = vweird.f32 %v3308
    %vm3315 = vweird.f32 %v3309
    %vm3316 = vmor %vm3314, %vm3315
    %v3317 = vsel %vm3316, %v3309, %v3313
    %v3318 = vand.u32 2147483647, %v3308
    %vm3319 = vcmp.eq.f32.partialorder %v3318, 8.507059e+37
    %v3320 = vand.u32 %v3308, 2147483648
    %v3321 = vor.u32 1.1754944e-38, %v3320
    %v3322 = vsel %vm3319, %v3321, %v3317
    %v3323 = vmul.f32 1.0, %v3322
    %v3324 = vmul.f32 %v3303, %v3281
    %v3325 = vadd.f32 %v3243, %v3324
    %v3326 = vtanh.pop %v3325
    %v3327 = vsub.f32 1.0, %v3323
    %v3328 = vmul.f32 %v3327, %v3326
    %v3329 = vmul.f32 %v3323, %v3240
    %v3330 = vadd.f32 %v3328, %v3329
    %v3331 = vld [vmem:[%s1495] sm:$0xff]
    %v3332 = vld [vmem:[%s1495 + $0x8] sm:$0xff]
    %v3333 = vld [vmem:[%s1495 + $0x10] sm:$0xff]
    %v3334 = vpack.c.bf16 %v3330, %v3330
    %3335 = vmatpush.bf16.msra.mxu0 %v2948
    %3336 = vmatpush.bf16.msra.mxu0 %v2945
    %3337 = vmatpush.bf16.msra.mxu0 %v2942
    %3338 = vmatpush.bf16.msra.mxu0 %v2939
    %3339 = vmatpush.bf16.msra.mxu0 %v2936
    %3340 = vmatpush.bf16.msra.mxu0 %v2933
    %3341 = vmatpush.bf16.msra.mxu0 %v2930
    %3342 = vmatpush.bf16.msra.mxu0 %v2927
    %3343 = vmatmul.bf16.gmra.mxu0 %v3334
    %v3344 = vpop.f32.mrf.mxu0
    %v3345 = vadd.f32 %v2806, %v3344
    %v3346 = vpop.f32.mrf.mxu0
    %3347 = vdwg.mxu0
    %3348 = vmatpush.bf16.msra.mxu0 %v2949
    %3349 = vmatpush.bf16.msra.mxu0 %v2946
    %3350 = vmatpush.bf16.msra.mxu0 %v2943
    %3351 = vmatpush.bf16.msra.mxu0 %v2940
    %3352 = vmatpush.bf16.msra.mxu0 %v2937
    %3353 = vmatpush.bf16.msra.mxu0 %v2934
    %3354 = vmatpush.bf16.msra.mxu0 %v2931
    %3355 = vmatpush.bf16.msra.mxu0 %v2928
    %3356 = vmatmul.bf16.gmra.mxu0 %v3334
    %v3357 = vpop.f32.mrf.mxu0
    %v3358 = vadd.f32 %v2807, %v3357
    %v3359 = vpop.f32.mrf.mxu0
    %3360 = vdwg.mxu0
    %3361 = vmatpush.bf16.msra.mxu0 %v2950
    %3362 = vmatpush.bf16.msra.mxu0 %v2947
    %3363 = vmatpush.bf16.msra.mxu0 %v2944
    %3364 = vmatpush.bf16.msra.mxu0 %v2941
    %3365 = vmatpush.bf16.msra.mxu0 %v2938
    %3366 = vmatpush.bf16.msra.mxu0 %v2935
    %3367 = vmatpush.bf16.msra.mxu0 %v2932
    %3368 = vmatpush.bf16.msra.mxu0 %v2929
    %3369 = vmatmul.bf16.gmra.mxu0 %v3334
    %v3370 = vpop.f32.mrf.mxu0
    %v3371 = vadd.f32 %v2808, %v3370
    %v3372 = vpop.f32.mrf.mxu0
    %3373 = vdwg.mxu0
    %v3374 = vadd.f32 %v3331, %v3345
    %v3375 = vxor.u32 %v3374, 2147483648
    %v3376 = vmul.f32 %v3375, 1.442695
    %v3377 = vpow.pop %v3376
    %v3378 = vadd.f32 %v3377, 1.0
    %v3379 = vrcp.pop %v3378
    %v3380 = vmul.f32 %v3378, %v3379
    %v3381 = vsub.f32 1.0, %v3380
    %v3382 = vmul.f32 %v3379, %v3381
    %v3383 = vadd.f32 %v3379, %v3382
    %vm3384 = vweird.f32 %v3378
    %vm3385 = vweird.f32 %v3379
    %vm3386 = vmor %vm3384, %vm3385
    %v3387 = vsel %vm3386, %v3379, %v3383
    %v3388 = vand.u32 2147483647, %v3378
    %vm3389 = vcmp.eq.f32.partialorder %v3388, 8.507059e+37
    %v3390 = vand.u32 %v3378, 2147483648
    %v3391 = vor.u32 1.1754944e-38, %v3390
    %v3392 = vsel %vm3389, %v3391, %v3387
    %v3393 = vmul.f32 1.0, %v3392
    %v3394 = vadd.f32 %v3332, %v3358
    %v3395 = vxor.u32 %v3394, 2147483648
    %v3396 = vmul.f32 %v3395, 1.442695
    %v3397 = vpow.pop %v3396
    %v3398 = vadd.f32 %v3397, 1.0
    %v3399 = vrcp.pop %v3398
    %v3400 = vmul.f32 %v3398, %v3399
    %v3401 = vsub.f32 1.0, %v3400
    %v3402 = vmul.f32 %v3399, %v3401
    %v3403 = vadd.f32 %v3399, %v3402
    %vm3404 = vweird.f32 %v3398
    %vm3405 = vweird.f32 %v3399
    %vm3406 = vmor %vm3404, %vm3405
    %v3407 = vsel %vm3406, %v3399, %v3403
    %v3408 = vand.u32 2147483647, %v3398
    %vm3409 = vcmp.eq.f32.partialorder %v3408, 8.507059e+37
    %v3410 = vand.u32 %v3398, 2147483648
    %v3411 = vor.u32 1.1754944e-38, %v3410
    %v3412 = vsel %vm3409, %v3411, %v3407
    %v3413 = vmul.f32 1.0, %v3412
    %v3414 = vmul.f32 %v3393, %v3371
    %v3415 = vadd.f32 %v3333, %v3414
    %v3416 = vtanh.pop %v3415
    %v3417 = vsub.f32 1.0, %v3413
    %v3418 = vmul.f32 %v3417, %v3416
    %v3419 = vmul.f32 %v3413, %v3330
    %v3420 = vadd.f32 %v3418, %v3419
    %v3421 = vld [vmem:[%s1750] sm:$0xff]
    %v3422 = vld [vmem:[%s1750 + $0x8] sm:$0xff]
    %v3423 = vld [vmem:[%s1750 + $0x10] sm:$0xff]
    %v3424 = vpack.c.bf16 %v3420, %v3420
    %3425 = vmatpush.bf16.msra.mxu0 %v2948
    %3426 = vmatpush.bf16.msra.mxu0 %v2945
    %3427 = vmatpush.bf16.msra.mxu0 %v2942
    %3428 = vmatpush.bf16.msra.mxu0 %v2939
    %3429 = vmatpush.bf16.msra.mxu0 %v2936
    %3430 = vmatpush.bf16.msra.mxu0 %v2933
    %3431 = vmatpush.bf16.msra.mxu0 %v2930
    %3432 = vmatpush.bf16.msra.mxu0 %v2927
    %3433 = vmatmul.bf16.gmra.mxu0 %v3424
    %v3434 = vpop.f32.mrf.mxu0
    %v3435 = vadd.f32 %v2806, %v3434
    %v3436 = vpop.f32.mrf.mxu0
    %3437 = vdwg.mxu0
    %3438 = vmatpush.bf16.msra.mxu0 %v2949
    %3439 = vmatpush.bf16.msra.mxu0 %v2946
    %3440 = vmatpush.bf16.msra.mxu0 %v2943
    %3441 = vmatpush.bf16.msra.mxu0 %v2940
    %3442 = vmatpush.bf16.msra.mxu0 %v2937
    %3443 = vmatpush.bf16.msra.mxu0 %v2934
    %3444 = vmatpush.bf16.msra.mxu0 %v2931
    %3445 = vmatpush.bf16.msra.mxu0 %v2928
    %3446 = vmatmul.bf16.gmra.mxu0 %v3424
    %v3447 = vpop.f32.mrf.mxu0
    %v3448 = vadd.f32 %v2807, %v3447
    %v3449 = vpop.f32.mrf.mxu0
    %3450 = vdwg.mxu0
    %3451 = vmatpush.bf16.msra.mxu0 %v2950
    %3452 = vmatpush.bf16.msra.mxu0 %v2947
    %3453 = vmatpush.bf16.msra.mxu0 %v2944
    %3454 = vmatpush.bf16.msra.mxu0 %v2941
    %3455 = vmatpush.bf16.msra.mxu0 %v2938
    %3456 = vmatpush.bf16.msra.mxu0 %v2935
    %3457 = vmatpush.bf16.msra.mxu0 %v2932
    %3458 = vmatpush.bf16.msra.mxu0 %v2929
    %3459 = vmatmul.bf16.gmra.mxu0 %v3424
    %v3460 = vpop.f32.mrf.mxu0
    %v3461 = vadd.f32 %v2808, %v3460
    %v3462 = vpop.f32.mrf.mxu0
    %3463 = vdwg.mxu0
    %v3464 = vadd.f32 %v3421, %v3435
    %v3465 = vxor.u32 %v3464, 2147483648
    %v3466 = vmul.f32 %v3465, 1.442695
    %v3467 = vpow.pop %v3466
    %v3468 = vadd.f32 %v3467, 1.0
    %v3469 = vrcp.pop %v3468
    %v3470 = vmul.f32 %v3468, %v3469
    %v3471 = vsub.f32 1.0, %v3470
    %v3472 = vmul.f32 %v3469, %v3471
    %v3473 = vadd.f32 %v3469, %v3472
    %vm3474 = vweird.f32 %v3468
    %vm3475 = vweird.f32 %v3469
    %vm3476 = vmor %vm3474, %vm3475
    %v3477 = vsel %vm3476, %v3469, %v3473
    %v3478 = vand.u32 2147483647, %v3468
    %vm3479 = vcmp.eq.f32.partialorder %v3478, 8.507059e+37
    %v3480 = vand.u32 %v3468, 2147483648
    %v3481 = vor.u32 1.1754944e-38, %v3480
    %v3482 = vsel %vm3479, %v3481, %v3477
    %v3483 = vmul.f32 1.0, %v3482
    %v3484 = vadd.f32 %v3422, %v3448
    %v3485 = vxor.u32 %v3484, 2147483648
    %v3486 = vmul.f32 %v3485, 1.442695
    %v3487 = vpow.pop %v3486
    %v3488 = vadd.f32 %v3487, 1.0
    %v3489 = vrcp.pop %v3488
    %v3490 = vmul.f32 %v3488, %v3489
    %v3491 = vsub.f32 1.0, %v3490
    %v3492 = vmul.f32 %v3489, %v3491
    %v3493 = vadd.f32 %v3489, %v3492
    %vm3494 = vweird.f32 %v3488
    %vm3495 = vweird.f32 %v3489
    %vm3496 = vmor %vm3494, %vm3495
    %v3497 = vsel %vm3496, %v3489, %v3493
    %v3498 = vand.u32 2147483647, %v3488
    %vm3499 = vcmp.eq.f32.partialorder %v3498, 8.507059e+37
    %v3500 = vand.u32 %v3488, 2147483648
    %v3501 = vor.u32 1.1754944e-38, %v3500
    %v3502 = vsel %vm3499, %v3501, %v3497
    %v3503 = vmul.f32 1.0, %v3502
    %v3504 = vmul.f32 %v3483, %v3461
    %v3505 = vadd.f32 %v3423, %v3504
    %v3506 = vtanh.pop %v3505
    %v3507 = vsub.f32 1.0, %v3503
    %v3508 = vmul.f32 %v3507, %v3506
    %v3509 = vmul.f32 %v3503, %v3420
    %v3510 = vadd.f32 %v3508, %v3509
    %v3511 = vld [vmem:[%s2005] sm:$0xff]
    %v3512 = vld [vmem:[%s2005 + $0x8] sm:$0xff]
    %v3513 = vld [vmem:[%s2005 + $0x10] sm:$0xff]
    %v3514 = vpack.c.bf16 %v3510, %v3510
    %3515 = vmatpush.bf16.msra.mxu0 %v2948
    %3516 = vmatpush.bf16.msra.mxu0 %v2945
    %3517 = vmatpush.bf16.msra.mxu0 %v2942
    %3518 = vmatpush.bf16.msra.mxu0 %v2939
    %3519 = vmatpush.bf16.msra.mxu0 %v2936
    %3520 = vmatpush.bf16.msra.mxu0 %v2933
    %3521 = vmatpush.bf16.msra.mxu0 %v2930
    %3522 = vmatpush.bf16.msra.mxu0 %v2927
    %3523 = vmatmul.bf16.gmra.mxu0 %v3514
    %v3524 = vpop.f32.mrf.mxu0
    %v3525 = vadd.f32 %v2806, %v3524
    %v3526 = vpop.f32.mrf.mxu0
    %3527 = vdwg.mxu0
    %3528 = vmatpush.bf16.msra.mxu0 %v2949
    %3529 = vmatpush.bf16.msra.mxu0 %v2946
    %3530 = vmatpush.bf16.msra.mxu0 %v2943
    %3531 = vmatpush.bf16.msra.mxu0 %v2940
    %3532 = vmatpush.bf16.msra.mxu0 %v2937
    %3533 = vmatpush.bf16.msra.mxu0 %v2934
    %3534 = vmatpush.bf16.msra.mxu0 %v2931
    %3535 = vmatpush.bf16.msra.mxu0 %v2928
    %3536 = vmatmul.bf16.gmra.mxu0 %v3514
    %v3537 = vpop.f32.mrf.mxu0
    %v3538 = vadd.f32 %v2807, %v3537
    %v3539 = vpop.f32.mrf.mxu0
    %3540 = vdwg.mxu0
    %3541 = vmatpush.bf16.msra.mxu0 %v2950
    %3542 = vmatpush.bf16.msra.mxu0 %v2947
    %3543 = vmatpush.bf16.msra.mxu0 %v2944
    %3544 = vmatpush.bf16.msra.mxu0 %v2941
    %3545 = vmatpush.bf16.msra.mxu0 %v2938
    %3546 = vmatpush.bf16.msra.mxu0 %v2935
    %3547 = vmatpush.bf16.msra.mxu0 %v2932
    %3548 = vmatpush.bf16.msra.mxu0 %v2929
    %3549 = vmatmul.bf16.gmra.mxu0 %v3514
    %v3550 = vpop.f32.mrf.mxu0
    %v3551 = vadd.f32 %v2808, %v3550
    %v3552 = vpop.f32.mrf.mxu0
    %3553 = vdwg.mxu0
    %v3554 = vadd.f32 %v3511, %v3525
    %v3555 = vxor.u32 %v3554, 2147483648
    %v3556 = vmul.f32 %v3555, 1.442695
    %v3557 = vpow.pop %v3556
    %v3558 = vadd.f32 %v3557, 1.0
    %v3559 = vrcp.pop %v3558
    %v3560 = vmul.f32 %v3558, %v3559
    %v3561 = vsub.f32 1.0, %v3560
    %v3562 = vmul.f32 %v3559, %v3561
    %v3563 = vadd.f32 %v3559, %v3562
    %vm3564 = vweird.f32 %v3558
    %vm3565 = vweird.f32 %v3559
    %vm3566 = vmor %vm3564, %vm3565
    %v3567 = vsel %vm3566, %v3559, %v3563
    %v3568 = vand.u32 2147483647, %v3558
    %vm3569 = vcmp.eq.f32.partialorder %v3568, 8.507059e+37
    %v3570 = vand.u32 %v3558, 2147483648
    %v3571 = vor.u32 1.1754944e-38, %v3570
    %v3572 = vsel %vm3569, %v3571, %v3567
    %v3573 = vmul.f32 1.0, %v3572
    %v3574 = vadd.f32 %v3512, %v3538
    %v3575 = vxor.u32 %v3574, 2147483648
    %v3576 = vmul.f32 %v3575, 1.442695
    %v3577 = vpow.pop %v3576
    %v3578 = vadd.f32 %v3577, 1.0
    %v3579 = vrcp.pop %v3578
    %v3580 = vmul.f32 %v3578, %v3579
    %v3581 = vsub.f32 1.0, %v3580
    %v3582 = vmul.f32 %v3579, %v3581
    %v3583 = vadd.f32 %v3579, %v3582
    %vm3584 = vweird.f32 %v3578
    %vm3585 = vweird.f32 %v3579
    %vm3586 = vmor %vm3584, %vm3585
    %v3587 = vsel %vm3586, %v3579, %v3583
    %v3588 = vand.u32 2147483647, %v3578
    %vm3589 = vcmp.eq.f32.partialorder %v3588, 8.507059e+37
    %v3590 = vand.u32 %v3578, 2147483648
    %v3591 = vor.u32 1.1754944e-38, %v3590
    %v3592 = vsel %vm3589, %v3591, %v3587
    %v3593 = vmul.f32 1.0, %v3592
    %v3594 = vmul.f32 %v3573, %v3551
    %v3595 = vadd.f32 %v3513, %v3594
    %v3596 = vtanh.pop %v3595
    %v3597 = vsub.f32 1.0, %v3593
    %v3598 = vmul.f32 %v3597, %v3596
    %v3599 = vmul.f32 %v3593, %v3510
    %v3600 = vadd.f32 %v3598, %v3599
    %v3601 = vld [vmem:[%s2260] sm:$0xff]
    %v3602 = vld [vmem:[%s2260 + $0x8] sm:$0xff]
    %v3603 = vld [vmem:[%s2260 + $0x10] sm:$0xff]
    %v3604 = vpack.c.bf16 %v3600, %v3600
    %3605 = vmatpush.bf16.msra.mxu0 %v2948
    %3606 = vmatpush.bf16.msra.mxu0 %v2945
    %3607 = vmatpush.bf16.msra.mxu0 %v2942
    %3608 = vmatpush.bf16.msra.mxu0 %v2939
    %3609 = vmatpush.bf16.msra.mxu0 %v2936
    %3610 = vmatpush.bf16.msra.mxu0 %v2933
    %3611 = vmatpush.bf16.msra.mxu0 %v2930
    %3612 = vmatpush.bf16.msra.mxu0 %v2927
    %3613 = vmatmul.bf16.gmra.mxu0 %v3604
    %v3614 = vpop.f32.mrf.mxu0
    %v3615 = vadd.f32 %v2806, %v3614
    %v3616 = vpop.f32.mrf.mxu0
    %3617 = vdwg.mxu0
    %3618 = vmatpush.bf16.msra.mxu0 %v2949
    %3619 = vmatpush.bf16.msra.mxu0 %v2946
    %3620 = vmatpush.bf16.msra.mxu0 %v2943
    %3621 = vmatpush.bf16.msra.mxu0 %v2940
    %3622 = vmatpush.bf16.msra.mxu0 %v2937
    %3623 = vmatpush.bf16.msra.mxu0 %v2934
    %3624 = vmatpush.bf16.msra.mxu0 %v2931
    %3625 = vmatpush.bf16.msra.mxu0 %v2928
    %3626 = vmatmul.bf16.gmra.mxu0 %v3604
    %v3627 = vpop.f32.mrf.mxu0
    %v3628 = vadd.f32 %v2807, %v3627
    %v3629 = vpop.f32.mrf.mxu0
    %3630 = vdwg.mxu0
    %3631 = vmatpush.bf16.msra.mxu0 %v2950
    %3632 = vmatpush.bf16.msra.mxu0 %v2947
    %3633 = vmatpush.bf16.msra.mxu0 %v2944
    %3634 = vmatpush.bf16.msra.mxu0 %v2941
    %3635 = vmatpush.bf16.msra.mxu0 %v2938
    %3636 = vmatpush.bf16.msra.mxu0 %v2935
    %3637 = vmatpush.bf16.msra.mxu0 %v2932
    %3638 = vmatpush.bf16.msra.mxu0 %v2929
    %3639 = vmatmul.bf16.gmra.mxu0 %v3604
    %v3640 = vpop.f32.mrf.mxu0
    %v3641 = vadd.f32 %v2808, %v3640
    %v3642 = vpop.f32.mrf.mxu0
    %3643 = vdwg.mxu0
    %v3644 = vadd.f32 %v3601, %v3615
    %v3645 = vxor.u32 %v3644, 2147483648
    %v3646 = vmul.f32 %v3645, 1.442695
    %v3647 = vpow.pop %v3646
    %v3648 = vadd.f32 %v3647, 1.0
    %v3649 = vrcp.pop %v3648
    %v3650 = vmul.f32 %v3648, %v3649
    %v3651 = vsub.f32 1.0, %v3650
    %v3652 = vmul.f32 %v3649, %v3651
    %v3653 = vadd.f32 %v3649, %v3652
    %vm3654 = vweird.f32 %v3648
    %vm3655 = vweird.f32 %v3649
    %vm3656 = vmor %vm3654, %vm3655
    %v3657 = vsel %vm3656, %v3649, %v3653
    %v3658 = vand.u32 2147483647, %v3648
    %vm3659 = vcmp.eq.f32.partialorder %v3658, 8.507059e+37
    %v3660 = vand.u32 %v3648, 2147483648
    %v3661 = vor.u32 1.1754944e-38, %v3660
    %v3662 = vsel %vm3659, %v3661, %v3657
    %v3663 = vmul.f32 1.0, %v3662
    %v3664 = vadd.f32 %v3602, %v3628
    %v3665 = vxor.u32 %v3664, 2147483648
    %v3666 = vmul.f32 %v3665, 1.442695
    %v3667 = vpow.pop %v3666
    %v3668 = vadd.f32 %v3667, 1.0
    %v3669 = vrcp.pop %v3668
    %v3670 = vmul.f32 %v3668, %v3669
    %v3671 = vsub.f32 1.0, %v3670
    %v3672 = vmul.f32 %v3669, %v3671
    %v3673 = vadd.f32 %v3669, %v3672
    %vm3674 = vweird.f32 %v3668
    %vm3675 = vweird.f32 %v3669
    %vm3676 = vmor %vm3674, %vm3675
    %v3677 = vsel %vm3676, %v3669, %v3673
    %v3678 = vand.u32 2147483647, %v3668
    %vm3679 = vcmp.eq.f32.partialorder %v3678, 8.507059e+37
    %v3680 = vand.u32 %v3668, 2147483648
    %v3681 = vor.u32 1.1754944e-38, %v3680
    %v3682 = vsel %vm3679, %v3681, %v3677
    %v3683 = vmul.f32 1.0, %v3682
    %v3684 = vmul.f32 %v3663, %v3641
    %v3685 = vadd.f32 %v3603, %v3684
    %v3686 = vtanh.pop %v3685
    %v3687 = vsub.f32 1.0, %v3683
    %v3688 = vmul.f32 %v3687, %v3686
    %v3689 = vmul.f32 %v3683, %v3600
    %v3690 = vadd.f32 %v3688, %v3689
    %v3691 = vpack.c.bf16 %v3690, %v3690
    %v3692 = vld [vmem:[%s9] sm:$0xf]
    %v3693 = vld [vmem:[%s9 + $0x4] sm:$0xf]
    %v3694 = vld [vmem:[%s9 + $0x8] sm:$0xf]
    %v3695 = vld [vmem:[%s9 + $0xc] sm:$0xf]
    %v3696 = vld [vmem:[%s9 + $0x10] sm:$0xf]
    %v3697 = vld [vmem:[%s9 + $0x14] sm:$0xf]
    %v3698 = vld [vmem:[%s9 + $0x18] sm:$0xf]
    %v3699 = vld [vmem:[%s9 + $0x1c] sm:$0xf]
    %v3700 = vld [vmem:[%s9 + $0x20] sm:$0xf]
    %v3701 = vld [vmem:[%s9 + $0x24] sm:$0xf]
    %v3702 = vld [vmem:[%s9 + $0x28] sm:$0xf]
    %v3703 = vld [vmem:[%s9 + $0x2c] sm:$0xf]
    %v3704 = vld [vmem:[%s9 + $0x30] sm:$0xf]
    %v3705 = vld [vmem:[%s9 + $0x34] sm:$0xf]
    %v3706 = vld [vmem:[%s9 + $0x38] sm:$0xf]
    %v3707 = vld [vmem:[%s9 + $0x3c] sm:$0xf]
    %v3708 = vld [vmem:[%s10] sm:$0x1]
    %v3710 = vperm.slane %v3708, 0
    %v3728 = vunpack.c.l.b16 %v3692
    %v3729 = vunpack.c.l.b16 %v3693
    %v3730 = vunpack.c.l.b16 %v3694
    %v3731 = vunpack.c.l.b16 %v3695
    %v3732 = vunpack.c.l.b16 %v3696
    %v3733 = vunpack.c.l.b16 %v3697
    %v3734 = vunpack.c.l.b16 %v3698
    %v3735 = vunpack.c.l.b16 %v3699
    %v3736 = vunpack.c.l.b16 %v3700
    %v3737 = vunpack.c.l.b16 %v3701
    %v3738 = vunpack.c.l.b16 %v3702
    %v3739 = vunpack.c.l.b16 %v3703
    %v3740 = vunpack.c.l.b16 %v3704
    %v3741 = vunpack.c.l.b16 %v3705
    %v3742 = vunpack.c.l.b16 %v3706
    %v3743 = vunpack.c.l.b16 %v3707
    %v3744 = vpack.c.b16 %v3729, %v3728
    %v3745 = vpack.c.b16 %v3731, %v3730
    %v3746 = vpack.c.b16 %v3733, %v3732
    %v3747 = vpack.c.b16 %v3735, %v3734
    %v3748 = vpack.c.b16 %v3737, %v3736
    %v3749 = vpack.c.b16 %v3739, %v3738
    %v3750 = vpack.c.b16 %v3741, %v3740
    %v3751 = vpack.c.b16 %v3743, %v3742
    %3760 = vmatpush.bf16.msra.mxu0 %v3751
    %3761 = vmatpush.bf16.msra.mxu0 %v3750
    %3762 = vmatpush.bf16.msra.mxu0 %v3749
    %3763 = vmatpush.bf16.msra.mxu0 %v3748
    %3764 = vmatpush.bf16.msra.mxu0 %v3747
    %3765 = vmatpush.bf16.msra.mxu0 %v3746
    %3766 = vmatpush.bf16.msra.mxu0 %v3745
    %3767 = vmatpush.bf16.msra.mxu0 %v3744
    %3768 = vmatmul.bf16.gmra.mxu0 %v3691
    %v3769 = vpop.f32.mrf.mxu0
    %v3770 = vadd.f32 %v3710, %v3769
    %v3771 = vpop.f32.mrf.mxu0
    %3772 = vdwg.mxu0
    %3773 = vst [vmem:[%s11] sm:$0xff] %v3770
    // Predicated region
    $region78: #{gru_model_forward.1} parent=1 // pred_check
      _
    $region79: #{gru_model_forward.1} parent=1 // pred_check_branch
      %3775 = sbr.rel (0) target = $region81
    $region80: #{gru_model_forward.1} parent=1 // pred_region
      _
    $region81: #{gru_model_forward.1} parent=1 // pred_fallthru
      _
    // Predicated region
    $region82: #{gru_model_forward.1} parent=1 // pred_check
      _
    $region83: #{gru_model_forward.1} parent=1 // pred_check_branch
      %3777 = sbr.rel (0) target = $region85
    $region84: #{gru_model_forward.1} parent=1 // pred_region
      _
    $region85: #{gru_model_forward.1} parent=1 // pred_fallthru
      _
    %3778 = vsyncpa [#allocation5], 1
    %3779 = vsyncpa [#allocation7], 1
    %3780 = vsyncpa [#allocation10], 1
    %3781 = vsyncpa [#allocation13], 1
    %3782 = vsyncpa [#allocation16], 1

</llo_original>
